<compile_context>
chip_gen: v7x
topology: tpu7x:2x2x1
jax: 0.10.0
libtpu: 0.0.40
codegen_flags: <defaults>
</compile_context>

<pallas_src>
import functools

import jax
import jax.numpy as jnp
import numpy as np
from jax import lax
from jax.experimental import pallas as pl
from jax.experimental.pallas import tpu as pltpu

LANES = 128  # lane width for HBM-stored outputs (logits / feats)


# --------------------------------------------------------------------------
# Fused Pallas kernel (whole forward pass, whole batch, single invocation)
# --------------------------------------------------------------------------
def _fused_forward_kernel(x_ref, w1_ref, s1_ref, w2_ref, s2_ref,
                          w3_ref, s3_ref, wl_ref, bl_ref,
                          logits_ref, feats_ref, *, N, stride):
    """
    x_ref      : (N*B1, Cpad)    sample-stacked, zero-padded, sequence-major input
    w1_ref     : (K1, Cpad, 32)  conv1 weight stack (BN1 scale folded)
    s1_ref     : (1, 32)         folded BN1 shift
    w2_ref     : (K2, 32, 64)    conv2 weight stack (BN2 folded)
    s2_ref     : (1, 64)
    w3_ref     : (K3, 64, 128)   conv3 weight stack (BN3 folded), out lane-padded
    s3_ref     : (1, 128)
    wl_ref     : (L3, 16, 128)   linear weight permuted to (l, c, class), class-padded
    bl_ref     : (1, 128)        linear bias, class-padded
    logits_ref : (N, 128)        lane-padded logits
    feats_ref  : (N, B4, 128)    sublane/lane-padded features (B4 = roundup(L3, 8))
    """
    # ---- static geometry (derived from ref shapes + static N / stride) ----
    B1 = x_ref.shape[0] // N          # per-sample padded block length, stage 1
    K1 = w1_ref.shape[0]
    K2 = w2_ref.shape[0]
    K3 = w3_ref.shape[0]
    CP = w3_ref.shape[2]              # lane-padded conv3 out width (128)
    L3 = wl_ref.shape[0]
    C3 = wl_ref.shape[1]
    B4 = feats_ref.shape[1]           # sublane-padded per-sample feature block

    pad2, pad3 = K2 // 2, K3 // 2
    L1 = (B1 - K1) // stride + 1      # conv1 outputs per sample (stride applied)
    B2 = (L1 // 2 + 1) + 2 * pad2     # per-sample block length, stage 2
    L2 = B2 - K2 + 1
    B3 = (L2 // 2 + 1) + 2 * pad3
    Lo3 = B3 - K3 + 1

    f32 = jnp.float32

    def conv_bn_relu(xs, w_ref3, shift):
        """K shifted matmuls on the sample-stacked activation; BN shift + ReLU."""
        K = w_ref3.shape[0]
        R = xs.shape[0] - K + 1
        acc = jnp.dot(xs[0:R], w_ref3[0], preferred_element_type=f32)
        for k in range(1, K):
            acc = acc + jnp.dot(xs[k:k + R], w_ref3[k], preferred_element_type=f32)
        return jnp.maximum(acc + shift, 0.0)

    def pool(y, *, b_in, s, l_out, b_out, pad_next):
        """MaxPool1d(2,2,pad=1) + conv-stride subsample + next-conv zero padding
        for ALL samples at once: one fused 0/1-selection matmul (the two pool
        taps stacked on sublane-aligned halves) + an elementwise max.
        Only valid because y >= 0 post-ReLU (torch pads MaxPool with -inf)."""
        r_in = y.shape[0]
        lp = l_out // 2 + 1
        r_out = N * b_out
        m8 = ((r_out + 7) // 8) * 8               # sublane-align each half
        row2 = lax.broadcasted_iota(jnp.int32, (2 * m8, r_in), 0)
        col = lax.broadcasted_iota(jnp.int32, (2 * m8, r_in), 1)
        half_b = row2 >= m8
        row = jnp.where(half_b, row2 - m8, row2)
        cond = None
        for n in range(N):                        # N static & tiny: trace-time
            tp = row - (n * b_out + pad_next)     # pooled index within sample n
            j = jnp.where(half_b, 2 * tp, 2 * tp - 1)
            v = ((tp >= 0) & (tp < lp) & (j >= 0) & (j < l_out)
                 & (col == n * b_in + s * j))
            cond = v if cond is None else (cond | v)
        sel = cond.astype(f32)
        z = jnp.dot(sel, y, preferred_element_type=f32)
        return jnp.maximum(z[0:r_out], z[m8:m8 + r_out])

    # ---- conv block 1 (conv stride folded into the pool selection) ----
    y1 = conv_bn_relu(x_ref[...], w1_ref, s1_ref[...])
    p1 = pool(y1, b_in=B1, s=stride, l_out=L1, b_out=B2, pad_next=pad2)
    # TODO(synk): nn.Dropout is inference-mode identity (no RNG mask applied).

    # ---- conv block 2 ----
    y2 = conv_bn_relu(p1, w2_ref, s2_ref[...])
    p2 = pool(y2, b_in=B2, s=1, l_out=L2, b_out=B3, pad_next=pad3)

    # ---- conv block 3 ----
    y3 = conv_bn_relu(p2, w3_ref, s3_ref[...])
    p3 = pool(y3, b_in=B3, s=1, l_out=Lo3, b_out=B4, pad_next=0)   # (N*B4, 128)

    p3r = p3.reshape(N, B4, CP)       # tile-boundary split of the sublane axis
    feats_ref[...] = p3r              # full-tile, lane-dense store

    # ---- final Linear, batched over samples: L3 matmuls of (N,16)x(16,128) ----
    acc = jnp.dot(p3r[:, 0, 0:C3], wl_ref[0], preferred_element_type=f32)
    for l in range(1, L3):
        acc = acc + jnp.dot(p3r[:, l, 0:C3], wl_ref[l], preferred_element_type=f32)
    logits_ref[...] = acc + bl_ref[...]


# --------------------------------------------------------------------------
# One-time weight preparation (hoisted out of the per-call path)
# --------------------------------------------------------------------------
def pack_params(params, *, eps=1e-5):
    """Fold eval-mode BatchNorm into the conv weights and pack everything into
    the kernel's matmul-ready layouts.  Runs ONCE; not part of the jitted
    steady-state forward."""
    w1 = params["w1"]; g1, b1, m1, v1 = params["bn1"]
    w2 = params["w2"]; g2, b2, m2, v2 = params["bn2"]
    w3 = params["w3"]; g3, b3, m3, v3 = params["bn3"]
    wl = params["w_lin"]; blin = params["b_lin"]

    C1, C_in, K1 = w1.shape
    C2, _, K2 = w2.shape
    C3, _, K3 = w3.shape
    NC = wl.shape[0]
    L3 = wl.shape[1] // C3
    cin_pad = ((C_in + 7) // 8) * 8   # one sublane tile for the first contraction

    def fold(w, gamma, beta, mean, var):
        s = gamma / jnp.sqrt(var + eps)
        return w * s[:, None, None], beta - mean * s

    w1f, sh1 = fold(w1, g1, b1, m1, v1)
    w2f, sh2 = fold(w2, g2, b2, m2, v2)
    w3f, sh3 = fold(w3, g3, b3, m3, v3)

    # (K, C_in, C_out) shifted-matmul stacks; contraction dims left un-padded
    w1p = jnp.transpose(w1f, (2, 1, 0))                       # (K1, C_in, 32)
    w1p = jnp.pad(w1p, ((0, 0), (0, cin_pad - C_in), (0, 0)))
    w2p = jnp.transpose(w2f, (2, 1, 0))                       # (K2, 32, 64)
    w3p = jnp.transpose(w3f, (2, 1, 0))                       # (K3, 64, C3)
    w3p = jnp.pad(w3p, ((0, 0), (0, 0), (0, LANES - C3)))     # out -> 128 lanes

    s1p = sh1.reshape(1, C1)
    s2p = sh2.reshape(1, C2)
    s3p = jnp.pad(sh3, (0, LANES - C3)).reshape(1, LANES)

    # linear: wl[j, c*L3 + l] -> wl_p[l, c, j]  (torch reshape(N,-1) order)
    wl_p = jnp.transpose(wl.reshape(NC, C3, L3), (2, 1, 0))
    wl_p = jnp.pad(wl_p, ((0, 0), (0, 0), (0, LANES - NC)))
    bl_p = jnp.pad(blin, (0, LANES - NC)).reshape(1, LANES)

    return dict(w1=w1p, s1=s1p, w2=w2p, s2=s2p, w3=w3p, s3=s3p, wl=wl_p, bl=bl_p)


# --------------------------------------------------------------------------
# Steady-state forward (jit this)
# --------------------------------------------------------------------------
def base_model_forward(x_ncl, packed, *, stride, num_classes):
    """x_ncl: (N, C_in, L) (PyTorch NCL). Returns (logits, features_NCL)."""
    N, C_in, L = x_ncl.shape
    K1, cpad, _ = packed["w1"].shape
    K2 = packed["w2"].shape[0]
    K3 = packed["w3"].shape[0]
    L3, C3, _ = packed["wl"].shape

    pad1 = K1 // 2
    B1 = L + 2 * pad1
    # static output-length bookkeeping (matches the torch formulas)
    L1 = (L + 2 * pad1 - K1) // stride + 1
    L2 = (L1 // 2 + 1) + 2 * (K2 // 2) - K2 + 1
    Lo3 = (L2 // 2 + 1) + 2 * (K3 // 2) - K3 + 1
    assert L3 == Lo3 // 2 + 1
    B4 = ((L3 + 7) // 8) * 8

    # sample-stacked, zero-padded, sequence-major input: (N*B1, cpad)
    # (transpose + pad + free reshape: one tiny XLA fusion, no gather)
    x_seq = jnp.transpose(x_ncl, (0, 2, 1))
    x_st = jnp.pad(x_seq, ((0, 0), (pad1, pad1), (0, cpad - C_in)))
    x_st = x_st.reshape(N * B1, cpad)

    kernel = functools.partial(_fused_forward_kernel, N=N, stride=stride)
    vspec = pl.BlockSpec(memory_space=pltpu.MemorySpace.VMEM)
    logits_p, feats_p = pl.pallas_call(
        kernel,
        out_shape=(jax.ShapeDtypeStruct((N, LANES), jnp.float32),
                   jax.ShapeDtypeStruct((N, B4, LANES), jnp.float32)),
        in_specs=[vspec] * 9,
        out_specs=(vspec, vspec),
    )(x_st, packed["w1"], packed["s1"], packed["w2"], packed["s2"],
      packed["w3"], packed["s3"], packed["wl"], packed["bl"])

    logits = logits_p[:, :num_classes]
    feats = jnp.transpose(feats_p[:, :L3, :C3], (0, 2, 1))     # (N, C3, L3)
    return logits, feats


# --------------------------------------------------------------------------
# Pure-JAX reference (for correctness check)
# --------------------------------------------------------------------------
def ref_forward(x_ncl, params, *, stride):
    def block(x, w, gamma, beta, mean, var, s):
        K = w.shape[-1]
        p = K // 2
        y = lax.conv_general_dilated(
            x, w, (s,), [(p, p)], dimension_numbers=("NCH", "OIH", "NCH"))
        scale = gamma / jnp.sqrt(var + 1e-5)
        y = y * scale[None, :, None] + (beta - mean * scale)[None, :, None]
        y = jnp.maximum(y, 0.0)
        y = lax.reduce_window(
            y, -jnp.inf, lax.max, (1, 1, 2), (1, 1, 2), [(0, 0), (0, 0), (1, 1)])
        return y

    x = block(x_ncl, params["w1"], *params["bn1"], stride)
    x = block(x, params["w2"], *params["bn2"], 1)
    x = block(x, params["w3"], *params["bn3"], 1)
    flat = x.reshape(x.shape[0], -1)
    logits = flat @ params["w_lin"].T + params["b_lin"]
    return logits, x


# --------------------------------------------------------------------------
# Main
# --------------------------------------------------------------------------
if __name__ == "__main__":
    # configs: input_channels=4, kernel_size=8, stride=1, dropout=0.35,
    #          final_out_channels=16, seq_len=32, num_classes=5
    N, C_in, L = 2, 4, 32
    K1, stride = 8, 1
    C1, C2, C_final = 32, 64, 16
    num_classes = 5

    def seq_after(L_in, K, s):
        p = K // 2
        Lc = (L_in + 2 * p - K) // s + 1
        return Lc // 2 + 1

    features_len = seq_after(seq_after(seq_after(L, K1, stride), 8, 1), 8, 1)

    key = jax.random.PRNGKey(0)
    ks = jax.random.split(key, 18)

    def nrm(k, shape, scale=0.1):
        return scale * jax.random.normal(k, shape, jnp.float32)

    def bn_params(kg, kb, km, kv, c):
        gamma = 1.0 + 0.1 * jax.random.normal(kg, (c,), jnp.float32)
        beta = 0.1 * jax.random.normal(kb, (c,), jnp.float32)
        mean = 0.1 * jax.random.normal(km, (c,), jnp.float32)
        var = 0.5 + jax.random.uniform(kv, (c,), jnp.float32)
        return (gamma, beta, mean, var)

    params = {
        "w1": nrm(ks[0], (C1, C_in, K1)),
        "bn1": bn_params(ks[1], ks[2], ks[3], ks[4], C1),
        "w2": nrm(ks[5], (C2, C1, 8)),
        "bn2": bn_params(ks[6], ks[7], ks[8], ks[9], C2),
        "w3": nrm(ks[10], (C_final, C2, 8)),
        "bn3": bn_params(ks[11], ks[12], ks[13], ks[14], C_final),
        "w_lin": nrm(ks[15], (num_classes, features_len * C_final)),
        "b_lin": nrm(ks[16], (num_classes,)),
    }

    x_in = jax.random.normal(ks[17], (N, C_in, L), jnp.float32)

    # One-time weight prep (outside the per-call jitted path).
    packed = pack_params(params)

    fwd = jax.jit(functools.partial(base_model_forward, stride=stride,
                                    num_classes=num_classes))
    logits, feats = fwd(x_in, packed)
    jax.block_until_ready((logits, feats))

    ref_logits, ref_feats = ref_forward(x_in, params, stride=stride)
    np.testing.assert_allclose(np.asarray(feats), np.asarray(ref_feats),
                               rtol=1e-4, atol=1e-4)
    np.testing.assert_allclose(np.asarray(logits), np.asarray(ref_logits),
                               rtol=1e-4, atol=1e-4)
    assert logits.shape == (N, num_classes)
    assert feats.shape == (N, C_final, features_len)

    print("KERNEL_OK")
</pallas_src>

<mosaic_0001>
module attributes {stable_mosaic.version = 11 : i64} {
  func.func @_fused_forward_kernel(%arg0: memref<80x8xf32, #tpu.memory_space<vmem>>, %arg1: memref<8x8x32xf32, #tpu.memory_space<vmem>>, %arg2: memref<1x32xf32, #tpu.memory_space<vmem>>, %arg3: memref<8x32x64xf32, #tpu.memory_space<vmem>>, %arg4: memref<1x64xf32, #tpu.memory_space<vmem>>, %arg5: memref<8x64x128xf32, #tpu.memory_space<vmem>>, %arg6: memref<1x128xf32, #tpu.memory_space<vmem>>, %arg7: memref<6x16x128xf32, #tpu.memory_space<vmem>>, %arg8: memref<1x128xf32, #tpu.memory_space<vmem>>, %arg9: memref<2x128xf32, #tpu.memory_space<vmem>>, %arg10: memref<2x8x128xf32, #tpu.memory_space<vmem>>) attributes {dimension_semantics = [], scalar_prefetch = 0 : i64, scratch_operands = 0 : i64, tpu.core_type = #tpu.core_type<tc>} {
    %c0 = arith.constant 0 : index
    %c0_0 = arith.constant 0 : index
    %0 = vector.load %arg0[%c0, %c0_0] : memref<80x8xf32, #tpu.memory_space<vmem>>, vector<80x8xf32>
    %c0_1 = arith.constant 0 : index
    %c0_2 = arith.constant 0 : index
    %1 = vector.load %arg2[%c0_1, %c0_2] : memref<1x32xf32, #tpu.memory_space<vmem>>, vector<1x32xf32>
    %2 = vector.extract_strided_slice %0 {offsets = [0, 0], sizes = [73, 8], strides = [1, 1]} : vector<80x8xf32> to vector<73x8xf32>
    %c0_3 = arith.constant 0 : index
    %c0_4 = arith.constant 0 : index
    %c0_5 = arith.constant 0 : index
    %3 = vector.load %arg1[%c0_3, %c0_4, %c0_5] : memref<8x8x32xf32, #tpu.memory_space<vmem>>, vector<1x8x32xf32>
    %4 = vector.shape_cast %3 : vector<1x8x32xf32> to vector<8x32xf32>
    %cst = arith.constant dense<0.000000e+00> : vector<73x32xf32>
    %5 = tpu.matmul %2, %4, %cst {dimension_numbers = #tpu.dot_dimension_numbers<[1], [0], [0], [1], [0, 0, 1, 1], [], []>} : vector<73x8xf32>, vector<8x32xf32>, vector<73x32xf32> -> vector<73x32xf32>
    %6 = vector.extract_strided_slice %0 {offsets = [1, 0], sizes = [73, 8], strides = [1, 1]} : vector<80x8xf32> to vector<73x8xf32>
    %c1 = arith.constant 1 : index
    %c0_6 = arith.constant 0 : index
    %c0_7 = arith.constant 0 : index
    %7 = vector.load %arg1[%c1, %c0_6, %c0_7] : memref<8x8x32xf32, #tpu.memory_space<vmem>>, vector<1x8x32xf32>
    %8 = vector.shape_cast %7 : vector<1x8x32xf32> to vector<8x32xf32>
    %cst_8 = arith.constant dense<0.000000e+00> : vector<73x32xf32>
    %9 = tpu.matmul %6, %8, %cst_8 {dimension_numbers = #tpu.dot_dimension_numbers<[1], [0], [0], [1], [0, 0, 1, 1], [], []>} : vector<73x8xf32>, vector<8x32xf32>, vector<73x32xf32> -> vector<73x32xf32>
    %10 = arith.addf %5, %9 : vector<73x32xf32>
    %11 = vector.extract_strided_slice %0 {offsets = [2, 0], sizes = [73, 8], strides = [1, 1]} : vector<80x8xf32> to vector<73x8xf32>
    %c2 = arith.constant 2 : index
    %c0_9 = arith.constant 0 : index
    %c0_10 = arith.constant 0 : index
    %12 = vector.load %arg1[%c2, %c0_9, %c0_10] : memref<8x8x32xf32, #tpu.memory_space<vmem>>, vector<1x8x32xf32>
    %13 = vector.shape_cast %12 : vector<1x8x32xf32> to vector<8x32xf32>
    %cst_11 = arith.constant dense<0.000000e+00> : vector<73x32xf32>
    %14 = tpu.matmul %11, %13, %cst_11 {dimension_numbers = #tpu.dot_dimension_numbers<[1], [0], [0], [1], [0, 0, 1, 1], [], []>} : vector<73x8xf32>, vector<8x32xf32>, vector<73x32xf32> -> vector<73x32xf32>
    %15 = arith.addf %10, %14 : vector<73x32xf32>
    %16 = vector.extract_strided_slice %0 {offsets = [3, 0], sizes = [73, 8], strides = [1, 1]} : vector<80x8xf32> to vector<73x8xf32>
    %c3 = arith.constant 3 : index
    %c0_12 = arith.constant 0 : index
    %c0_13 = arith.constant 0 : index
    %17 = vector.load %arg1[%c3, %c0_12, %c0_13] : memref<8x8x32xf32, #tpu.memory_space<vmem>>, vector<1x8x32xf32>
    %18 = vector.shape_cast %17 : vector<1x8x32xf32> to vector<8x32xf32>
    %cst_14 = arith.constant dense<0.000000e+00> : vector<73x32xf32>
    %19 = tpu.matmul %16, %18, %cst_14 {dimension_numbers = #tpu.dot_dimension_numbers<[1], [0], [0], [1], [0, 0, 1, 1], [], []>} : vector<73x8xf32>, vector<8x32xf32>, vector<73x32xf32> -> vector<73x32xf32>
    %20 = arith.addf %15, %19 : vector<73x32xf32>
    %21 = vector.extract_strided_slice %0 {offsets = [4, 0], sizes = [73, 8], strides = [1, 1]} : vector<80x8xf32> to vector<73x8xf32>
    %c4 = arith.constant 4 : index
    %c0_15 = arith.constant 0 : index
    %c0_16 = arith.constant 0 : index
    %22 = vector.load %arg1[%c4, %c0_15, %c0_16] : memref<8x8x32xf32, #tpu.memory_space<vmem>>, vector<1x8x32xf32>
    %23 = vector.shape_cast %22 : vector<1x8x32xf32> to vector<8x32xf32>
    %cst_17 = arith.constant dense<0.000000e+00> : vector<73x32xf32>
    %24 = tpu.matmul %21, %23, %cst_17 {dimension_numbers = #tpu.dot_dimension_numbers<[1], [0], [0], [1], [0, 0, 1, 1], [], []>} : vector<73x8xf32>, vector<8x32xf32>, vector<73x32xf32> -> vector<73x32xf32>
    %25 = arith.addf %20, %24 : vector<73x32xf32>
    %26 = vector.extract_strided_slice %0 {offsets = [5, 0], sizes = [73, 8], strides = [1, 1]} : vector<80x8xf32> to vector<73x8xf32>
    %c5 = arith.constant 5 : index
    %c0_18 = arith.constant 0 : index
    %c0_19 = arith.constant 0 : index
    %27 = vector.load %arg1[%c5, %c0_18, %c0_19] : memref<8x8x32xf32, #tpu.memory_space<vmem>>, vector<1x8x32xf32>
    %28 = vector.shape_cast %27 : vector<1x8x32xf32> to vector<8x32xf32>
    %cst_20 = arith.constant dense<0.000000e+00> : vector<73x32xf32>
    %29 = tpu.matmul %26, %28, %cst_20 {dimension_numbers = #tpu.dot_dimension_numbers<[1], [0], [0], [1], [0, 0, 1, 1], [], []>} : vector<73x8xf32>, vector<8x32xf32>, vector<73x32xf32> -> vector<73x32xf32>
    %30 = arith.addf %25, %29 : vector<73x32xf32>
    %31 = vector.extract_strided_slice %0 {offsets = [6, 0], sizes = [73, 8], strides = [1, 1]} : vector<80x8xf32> to vector<73x8xf32>
    %c6 = arith.constant 6 : index
    %c0_21 = arith.constant 0 : index
    %c0_22 = arith.constant 0 : index
    %32 = vector.load %arg1[%c6, %c0_21, %c0_22] : memref<8x8x32xf32, #tpu.memory_space<vmem>>, vector<1x8x32xf32>
    %33 = vector.shape_cast %32 : vector<1x8x32xf32> to vector<8x32xf32>
    %cst_23 = arith.constant dense<0.000000e+00> : vector<73x32xf32>
    %34 = tpu.matmul %31, %33, %cst_23 {dimension_numbers = #tpu.dot_dimension_numbers<[1], [0], [0], [1], [0, 0, 1, 1], [], []>} : vector<73x8xf32>, vector<8x32xf32>, vector<73x32xf32> -> vector<73x32xf32>
    %35 = arith.addf %30, %34 : vector<73x32xf32>
    %36 = vector.extract_strided_slice %0 {offsets = [7, 0], sizes = [73, 8], strides = [1, 1]} : vector<80x8xf32> to vector<73x8xf32>
    %c7 = arith.constant 7 : index
    %c0_24 = arith.constant 0 : index
    %c0_25 = arith.constant 0 : index
    %37 = vector.load %arg1[%c7, %c0_24, %c0_25] : memref<8x8x32xf32, #tpu.memory_space<vmem>>, vector<1x8x32xf32>
    %38 = vector.shape_cast %37 : vector<1x8x32xf32> to vector<8x32xf32>
    %cst_26 = arith.constant dense<0.000000e+00> : vector<73x32xf32>
    %39 = tpu.matmul %36, %38, %cst_26 {dimension_numbers = #tpu.dot_dimension_numbers<[1], [0], [0], [1], [0, 0, 1, 1], [], []>} : vector<73x8xf32>, vector<8x32xf32>, vector<73x32xf32> -> vector<73x32xf32>
    %40 = arith.addf %35, %39 : vector<73x32xf32>
    %41 = vector.broadcast %1 : vector<1x32xf32> to vector<73x32xf32>
    %42 = arith.addf %40, %41 : vector<73x32xf32>
    %cst_27 = arith.constant 0.000000e+00 : f32
    %43 = vector.broadcast %cst_27 : f32 to vector<73x32xf32>
    %44 = arith.maximumf %42, %43 : vector<73x32xf32>
    %45 = tpu.iota {dimensions = array<i32: 0>} : vector<112x73xi32>
    %46 = tpu.iota {dimensions = array<i32: 1>} : vector<112x73xi32>
    %c56_i32 = arith.constant 56 : i32
    %47 = vector.broadcast %c56_i32 : i32 to vector<112x73xi32>
    %48 = arith.cmpi sge, %45, %47 : vector<112x73xi32>
    %c56_i32_28 = arith.constant 56 : i32
    %49 = vector.broadcast %c56_i32_28 : i32 to vector<112x73xi32>
    %50 = arith.subi %45, %49 : vector<112x73xi32>
    %51 = arith.select %48, %50, %45 : vector<112x73xi1>, vector<112x73xi32>
    %c4_i32 = arith.constant 4 : i32
    %52 = vector.broadcast %c4_i32 : i32 to vector<112x73xi32>
    %53 = arith.subi %51, %52 : vector<112x73xi32>
    %c2_i32 = arith.constant 2 : i32
    %54 = vector.broadcast %c2_i32 : i32 to vector<112x73xi32>
    %55 = arith.muli %54, %53 : vector<112x73xi32>
    %c2_i32_29 = arith.constant 2 : i32
    %56 = vector.broadcast %c2_i32_29 : i32 to vector<112x73xi32>
    %57 = arith.muli %56, %53 : vector<112x73xi32>
    %c1_i32 = arith.constant 1 : i32
    %58 = vector.broadcast %c1_i32 : i32 to vector<112x73xi32>
    %59 = arith.subi %57, %58 : vector<112x73xi32>
    %60 = arith.select %48, %55, %59 : vector<112x73xi1>, vector<112x73xi32>
    %c0_i32 = arith.constant 0 : i32
    %61 = vector.broadcast %c0_i32 : i32 to vector<112x73xi32>
    %62 = arith.cmpi sge, %53, %61 : vector<112x73xi32>
    %c17_i32 = arith.constant 17 : i32
    %63 = vector.broadcast %c17_i32 : i32 to vector<112x73xi32>
    %64 = arith.cmpi slt, %53, %63 : vector<112x73xi32>
    %65 = arith.andi %62, %64 : vector<112x73xi1>
    %c0_i32_30 = arith.constant 0 : i32
    %66 = vector.broadcast %c0_i32_30 : i32 to vector<112x73xi32>
    %67 = arith.cmpi sge, %60, %66 : vector<112x73xi32>
    %68 = arith.andi %65, %67 : vector<112x73xi1>
    %c33_i32 = arith.constant 33 : i32
    %69 = vector.broadcast %c33_i32 : i32 to vector<112x73xi32>
    %70 = arith.cmpi slt, %60, %69 : vector<112x73xi32>
    %71 = arith.andi %68, %70 : vector<112x73xi1>
    %c1_i32_31 = arith.constant 1 : i32
    %72 = vector.broadcast %c1_i32_31 : i32 to vector<112x73xi32>
    %73 = arith.muli %72, %60 : vector<112x73xi32>
    %c0_i32_32 = arith.constant 0 : i32
    %74 = vector.broadcast %c0_i32_32 : i32 to vector<112x73xi32>
    %75 = arith.addi %74, %73 : vector<112x73xi32>
    %76 = arith.cmpi eq, %46, %75 : vector<112x73xi32>
    %77 = arith.andi %71, %76 : vector<112x73xi1>
    %c29_i32 = arith.constant 29 : i32
    %78 = vector.broadcast %c29_i32 : i32 to vector<112x73xi32>
    %79 = arith.subi %51, %78 : vector<112x73xi32>
    %c2_i32_33 = arith.constant 2 : i32
    %80 = vector.broadcast %c2_i32_33 : i32 to vector<112x73xi32>
    %81 = arith.muli %80, %79 : vector<112x73xi32>
    %c2_i32_34 = arith.constant 2 : i32
    %82 = vector.broadcast %c2_i32_34 : i32 to vector<112x73xi32>
    %83 = arith.muli %82, %79 : vector<112x73xi32>
    %c1_i32_35 = arith.constant 1 : i32
    %84 = vector.broadcast %c1_i32_35 : i32 to vector<112x73xi32>
    %85 = arith.subi %83, %84 : vector<112x73xi32>
    %86 = arith.select %48, %81, %85 : vector<112x73xi1>, vector<112x73xi32>
    %c0_i32_36 = arith.constant 0 : i32
    %87 = vector.broadcast %c0_i32_36 : i32 to vector<112x73xi32>
    %88 = arith.cmpi sge, %79, %87 : vector<112x73xi32>
    %c17_i32_37 = arith.constant 17 : i32
    %89 = vector.broadcast %c17_i32_37 : i32 to vector<112x73xi32>
    %90 = arith.cmpi slt, %79, %89 : vector<112x73xi32>
    %91 = arith.andi %88, %90 : vector<112x73xi1>
    %c0_i32_38 = arith.constant 0 : i32
    %92 = vector.broadcast %c0_i32_38 : i32 to vector<112x73xi32>
    %93 = arith.cmpi sge, %86, %92 : vector<112x73xi32>
    %94 = arith.andi %91, %93 : vector<112x73xi1>
    %c33_i32_39 = arith.constant 33 : i32
    %95 = vector.broadcast %c33_i32_39 : i32 to vector<112x73xi32>
    %96 = arith.cmpi slt, %86, %95 : vector<112x73xi32>
    %97 = arith.andi %94, %96 : vector<112x73xi1>
    %c1_i32_40 = arith.constant 1 : i32
    %98 = vector.broadcast %c1_i32_40 : i32 to vector<112x73xi32>
    %99 = arith.muli %98, %86 : vector<112x73xi32>
    %c40_i32 = arith.constant 40 : i32
    %100 = vector.broadcast %c40_i32 : i32 to vector<112x73xi32>
    %101 = arith.addi %100, %99 : vector<112x73xi32>
    %102 = arith.cmpi eq, %46, %101 : vector<112x73xi32>
    %103 = arith.andi %97, %102 : vector<112x73xi1>
    %104 = arith.ori %77, %103 : vector<112x73xi1>
    %105 = arith.extui %104 : vector<112x73xi1> to vector<112x73xi32>
    %106 = arith.sitofp %105 : vector<112x73xi32> to vector<112x73xf32>
    %cst_41 = arith.constant dense<0.000000e+00> : vector<112x32xf32>
    %107 = tpu.matmul %106, %44, %cst_41 {dimension_numbers = #tpu.dot_dimension_numbers<[1], [0], [0], [1], [0, 0, 1, 1], [], []>} : vector<112x73xf32>, vector<73x32xf32>, vector<112x32xf32> -> vector<112x32xf32>
    %108 = vector.extract_strided_slice %107 {offsets = [0, 0], sizes = [50, 32], strides = [1, 1]} : vector<112x32xf32> to vector<50x32xf32>
    %109 = vector.extract_strided_slice %107 {offsets = [56, 0], sizes = [50, 32], strides = [1, 1]} : vector<112x32xf32> to vector<50x32xf32>
    %110 = arith.maximumf %108, %109 : vector<50x32xf32>
    %c0_42 = arith.constant 0 : index
    %c0_43 = arith.constant 0 : index
    %111 = vector.load %arg4[%c0_42, %c0_43] : memref<1x64xf32, #tpu.memory_space<vmem>>, vector<1x64xf32>
    %112 = vector.extract_strided_slice %110 {offsets = [0, 0], sizes = [43, 32], strides = [1, 1]} : vector<50x32xf32> to vector<43x32xf32>
    %c0_44 = arith.constant 0 : index
    %c0_45 = arith.constant 0 : index
    %c0_46 = arith.constant 0 : index
    %113 = vector.load %arg3[%c0_44, %c0_45, %c0_46] : memref<8x32x64xf32, #tpu.memory_space<vmem>>, vector<1x32x64xf32>
    %114 = vector.shape_cast %113 : vector<1x32x64xf32> to vector<32x64xf32>
    %cst_47 = arith.constant dense<0.000000e+00> : vector<43x64xf32>
    %115 = tpu.matmul %112, %114, %cst_47 {dimension_numbers = #tpu.dot_dimension_numbers<[1], [0], [0], [1], [0, 0, 1, 1], [], []>} : vector<43x32xf32>, vector<32x64xf32>, vector<43x64xf32> -> vector<43x64xf32>
    %116 = vector.extract_strided_slice %110 {offsets = [1, 0], sizes = [43, 32], strides = [1, 1]} : vector<50x32xf32> to vector<43x32xf32>
    %c1_48 = arith.constant 1 : index
    %c0_49 = arith.constant 0 : index
    %c0_50 = arith.constant 0 : index
    %117 = vector.load %arg3[%c1_48, %c0_49, %c0_50] : memref<8x32x64xf32, #tpu.memory_space<vmem>>, vector<1x32x64xf32>
    %118 = vector.shape_cast %117 : vector<1x32x64xf32> to vector<32x64xf32>
    %cst_51 = arith.constant dense<0.000000e+00> : vector<43x64xf32>
    %119 = tpu.matmul %116, %118, %cst_51 {dimension_numbers = #tpu.dot_dimension_numbers<[1], [0], [0], [1], [0, 0, 1, 1], [], []>} : vector<43x32xf32>, vector<32x64xf32>, vector<43x64xf32> -> vector<43x64xf32>
    %120 = arith.addf %115, %119 : vector<43x64xf32>
    %121 = vector.extract_strided_slice %110 {offsets = [2, 0], sizes = [43, 32], strides = [1, 1]} : vector<50x32xf32> to vector<43x32xf32>
    %c2_52 = arith.constant 2 : index
    %c0_53 = arith.constant 0 : index
    %c0_54 = arith.constant 0 : index
    %122 = vector.load %arg3[%c2_52, %c0_53, %c0_54] : memref<8x32x64xf32, #tpu.memory_space<vmem>>, vector<1x32x64xf32>
    %123 = vector.shape_cast %122 : vector<1x32x64xf32> to vector<32x64xf32>
    %cst_55 = arith.constant dense<0.000000e+00> : vector<43x64xf32>
    %124 = tpu.matmul %121, %123, %cst_55 {dimension_numbers = #tpu.dot_dimension_numbers<[1], [0], [0], [1], [0, 0, 1, 1], [], []>} : vector<43x32xf32>, vector<32x64xf32>, vector<43x64xf32> -> vector<43x64xf32>
    %125 = arith.addf %120, %124 : vector<43x64xf32>
    %126 = vector.extract_strided_slice %110 {offsets = [3, 0], sizes = [43, 32], strides = [1, 1]} : vector<50x32xf32> to vector<43x32xf32>
    %c3_56 = arith.constant 3 : index
    %c0_57 = arith.constant 0 : index
    %c0_58 = arith.constant 0 : index
    %127 = vector.load %arg3[%c3_56, %c0_57, %c0_58] : memref<8x32x64xf32, #tpu.memory_space<vmem>>, vector<1x32x64xf32>
    %128 = vector.shape_cast %127 : vector<1x32x64xf32> to vector<32x64xf32>
    %cst_59 = arith.constant dense<0.000000e+00> : vector<43x64xf32>
    %129 = tpu.matmul %126, %128, %cst_59 {dimension_numbers = #tpu.dot_dimension_numbers<[1], [0], [0], [1], [0, 0, 1, 1], [], []>} : vector<43x32xf32>, vector<32x64xf32>, vector<43x64xf32> -> vector<43x64xf32>
    %130 = arith.addf %125, %129 : vector<43x64xf32>
    %131 = vector.extract_strided_slice %110 {offsets = [4, 0], sizes = [43, 32], strides = [1, 1]} : vector<50x32xf32> to vector<43x32xf32>
    %c4_60 = arith.constant 4 : index
    %c0_61 = arith.constant 0 : index
    %c0_62 = arith.constant 0 : index
    %132 = vector.load %arg3[%c4_60, %c0_61, %c0_62] : memref<8x32x64xf32, #tpu.memory_space<vmem>>, vector<1x32x64xf32>
    %133 = vector.shape_cast %132 : vector<1x32x64xf32> to vector<32x64xf32>
    %cst_63 = arith.constant dense<0.000000e+00> : vector<43x64xf32>
    %134 = tpu.matmul %131, %133, %cst_63 {dimension_numbers = #tpu.dot_dimension_numbers<[1], [0], [0], [1], [0, 0, 1, 1], [], []>} : vector<43x32xf32>, vector<32x64xf32>, vector<43x64xf32> -> vector<43x64xf32>
    %135 = arith.addf %130, %134 : vector<43x64xf32>
    %136 = vector.extract_strided_slice %110 {offsets = [5, 0], sizes = [43, 32], strides = [1, 1]} : vector<50x32xf32> to vector<43x32xf32>
    %c5_64 = arith.constant 5 : index
    %c0_65 = arith.constant 0 : index
    %c0_66 = arith.constant 0 : index
    %137 = vector.load %arg3[%c5_64, %c0_65, %c0_66] : memref<8x32x64xf32, #tpu.memory_space<vmem>>, vector<1x32x64xf32>
    %138 = vector.shape_cast %137 : vector<1x32x64xf32> to vector<32x64xf32>
    %cst_67 = arith.constant dense<0.000000e+00> : vector<43x64xf32>
    %139 = tpu.matmul %136, %138, %cst_67 {dimension_numbers = #tpu.dot_dimension_numbers<[1], [0], [0], [1], [0, 0, 1, 1], [], []>} : vector<43x32xf32>, vector<32x64xf32>, vector<43x64xf32> -> vector<43x64xf32>
    %140 = arith.addf %135, %139 : vector<43x64xf32>
    %141 = vector.extract_strided_slice %110 {offsets = [6, 0], sizes = [43, 32], strides = [1, 1]} : vector<50x32xf32> to vector<43x32xf32>
    %c6_68 = arith.constant 6 : index
    %c0_69 = arith.constant 0 : index
    %c0_70 = arith.constant 0 : index
    %142 = vector.load %arg3[%c6_68, %c0_69, %c0_70] : memref<8x32x64xf32, #tpu.memory_space<vmem>>, vector<1x32x64xf32>
    %143 = vector.shape_cast %142 : vector<1x32x64xf32> to vector<32x64xf32>
    %cst_71 = arith.constant dense<0.000000e+00> : vector<43x64xf32>
    %144 = tpu.matmul %141, %143, %cst_71 {dimension_numbers = #tpu.dot_dimension_numbers<[1], [0], [0], [1], [0, 0, 1, 1], [], []>} : vector<43x32xf32>, vector<32x64xf32>, vector<43x64xf32> -> vector<43x64xf32>
    %145 = arith.addf %140, %144 : vector<43x64xf32>
    %146 = vector.extract_strided_slice %110 {offsets = [7, 0], sizes = [43, 32], strides = [1, 1]} : vector<50x32xf32> to vector<43x32xf32>
    %c7_72 = arith.constant 7 : index
    %c0_73 = arith.constant 0 : index
    %c0_74 = arith.constant 0 : index
    %147 = vector.load %arg3[%c7_72, %c0_73, %c0_74] : memref<8x32x64xf32, #tpu.memory_space<vmem>>, vector<1x32x64xf32>
    %148 = vector.shape_cast %147 : vector<1x32x64xf32> to vector<32x64xf32>
    %cst_75 = arith.constant dense<0.000000e+00> : vector<43x64xf32>
    %149 = tpu.matmul %146, %148, %cst_75 {dimension_numbers = #tpu.dot_dimension_numbers<[1], [0], [0], [1], [0, 0, 1, 1], [], []>} : vector<43x32xf32>, vector<32x64xf32>, vector<43x64xf32> -> vector<43x64xf32>
    %150 = arith.addf %145, %149 : vector<43x64xf32>
    %151 = vector.broadcast %111 : vector<1x64xf32> to vector<43x64xf32>
    %152 = arith.addf %150, %151 : vector<43x64xf32>
    %cst_76 = arith.constant 0.000000e+00 : f32
    %153 = vector.broadcast %cst_76 : f32 to vector<43x64xf32>
    %154 = arith.maximumf %152, %153 : vector<43x64xf32>
    %155 = tpu.iota {dimensions = array<i32: 0>} : vector<80x43xi32>
    %156 = tpu.iota {dimensions = array<i32: 1>} : vector<80x43xi32>
    %c40_i32_77 = arith.constant 40 : i32
    %157 = vector.broadcast %c40_i32_77 : i32 to vector<80x43xi32>
    %158 = arith.cmpi sge, %155, %157 : vector<80x43xi32>
    %c40_i32_78 = arith.constant 40 : i32
    %159 = vector.broadcast %c40_i32_78 : i32 to vector<80x43xi32>
    %160 = arith.subi %155, %159 : vector<80x43xi32>
    %161 = arith.select %158, %160, %155 : vector<80x43xi1>, vector<80x43xi32>
    %c4_i32_79 = arith.constant 4 : i32
    %162 = vector.broadcast %c4_i32_79 : i32 to vector<80x43xi32>
    %163 = arith.subi %161, %162 : vector<80x43xi32>
    %c2_i32_80 = arith.constant 2 : i32
    %164 = vector.broadcast %c2_i32_80 : i32 to vector<80x43xi32>
    %165 = arith.muli %164, %163 : vector<80x43xi32>
    %c2_i32_81 = arith.constant 2 : i32
    %166 = vector.broadcast %c2_i32_81 : i32 to vector<80x43xi32>
    %167 = arith.muli %166, %163 : vector<80x43xi32>
    %c1_i32_82 = arith.constant 1 : i32
    %168 = vector.broadcast %c1_i32_82 : i32 to vector<80x43xi32>
    %169 = arith.subi %167, %168 : vector<80x43xi32>
    %170 = arith.select %158, %165, %169 : vector<80x43xi1>, vector<80x43xi32>
    %c0_i32_83 = arith.constant 0 : i32
    %171 = vector.broadcast %c0_i32_83 : i32 to vector<80x43xi32>
    %172 = arith.cmpi sge, %163, %171 : vector<80x43xi32>
    %c10_i32 = arith.constant 10 : i32
    %173 = vector.broadcast %c10_i32 : i32 to vector<80x43xi32>
    %174 = arith.cmpi slt, %163, %173 : vector<80x43xi32>
    %175 = arith.andi %172, %174 : vector<80x43xi1>
    %c0_i32_84 = arith.constant 0 : i32
    %176 = vector.broadcast %c0_i32_84 : i32 to vector<80x43xi32>
    %177 = arith.cmpi sge, %170, %176 : vector<80x43xi32>
    %178 = arith.andi %175, %177 : vector<80x43xi1>
    %c18_i32 = arith.constant 18 : i32
    %179 = vector.broadcast %c18_i32 : i32 to vector<80x43xi32>
    %180 = arith.cmpi slt, %170, %179 : vector<80x43xi32>
    %181 = arith.andi %178, %180 : vector<80x43xi1>
    %c1_i32_85 = arith.constant 1 : i32
    %182 = vector.broadcast %c1_i32_85 : i32 to vector<80x43xi32>
    %183 = arith.muli %182, %170 : vector<80x43xi32>
    %c0_i32_86 = arith.constant 0 : i32
    %184 = vector.broadcast %c0_i32_86 : i32 to vector<80x43xi32>
    %185 = arith.addi %184, %183 : vector<80x43xi32>
    %186 = arith.cmpi eq, %156, %185 : vector<80x43xi32>
    %187 = arith.andi %181, %186 : vector<80x43xi1>
    %c22_i32 = arith.constant 22 : i32
    %188 = vector.broadcast %c22_i32 : i32 to vector<80x43xi32>
    %189 = arith.subi %161, %188 : vector<80x43xi32>
    %c2_i32_87 = arith.constant 2 : i32
    %190 = vector.broadcast %c2_i32_87 : i32 to vector<80x43xi32>
    %191 = arith.muli %190, %189 : vector<80x43xi32>
    %c2_i32_88 = arith.constant 2 : i32
    %192 = vector.broadcast %c2_i32_88 : i32 to vector<80x43xi32>
    %193 = arith.muli %192, %189 : vector<80x43xi32>
    %c1_i32_89 = arith.constant 1 : i32
    %194 = vector.broadcast %c1_i32_89 : i32 to vector<80x43xi32>
    %195 = arith.subi %193, %194 : vector<80x43xi32>
    %196 = arith.select %158, %191, %195 : vector<80x43xi1>, vector<80x43xi32>
    %c0_i32_90 = arith.constant 0 : i32
    %197 = vector.broadcast %c0_i32_90 : i32 to vector<80x43xi32>
    %198 = arith.cmpi sge, %189, %197 : vector<80x43xi32>
    %c10_i32_91 = arith.constant 10 : i32
    %199 = vector.broadcast %c10_i32_91 : i32 to vector<80x43xi32>
    %200 = arith.cmpi slt, %189, %199 : vector<80x43xi32>
    %201 = arith.andi %198, %200 : vector<80x43xi1>
    %c0_i32_92 = arith.constant 0 : i32
    %202 = vector.broadcast %c0_i32_92 : i32 to vector<80x43xi32>
    %203 = arith.cmpi sge, %196, %202 : vector<80x43xi32>
    %204 = arith.andi %201, %203 : vector<80x43xi1>
    %c18_i32_93 = arith.constant 18 : i32
    %205 = vector.broadcast %c18_i32_93 : i32 to vector<80x43xi32>
    %206 = arith.cmpi slt, %196, %205 : vector<80x43xi32>
    %207 = arith.andi %204, %206 : vector<80x43xi1>
    %c1_i32_94 = arith.constant 1 : i32
    %208 = vector.broadcast %c1_i32_94 : i32 to vector<80x43xi32>
    %209 = arith.muli %208, %196 : vector<80x43xi32>
    %c25_i32 = arith.constant 25 : i32
    %210 = vector.broadcast %c25_i32 : i32 to vector<80x43xi32>
    %211 = arith.addi %210, %209 : vector<80x43xi32>
    %212 = arith.cmpi eq, %156, %211 : vector<80x43xi32>
    %213 = arith.andi %207, %212 : vector<80x43xi1>
    %214 = arith.ori %187, %213 : vector<80x43xi1>
    %215 = arith.extui %214 : vector<80x43xi1> to vector<80x43xi32>
    %216 = arith.sitofp %215 : vector<80x43xi32> to vector<80x43xf32>
    %cst_95 = arith.constant dense<0.000000e+00> : vector<80x64xf32>
    %217 = tpu.matmul %216, %154, %cst_95 {dimension_numbers = #tpu.dot_dimension_numbers<[1], [0], [0], [1], [0, 0, 1, 1], [], []>} : vector<80x43xf32>, vector<43x64xf32>, vector<80x64xf32> -> vector<80x64xf32>
    %218 = vector.extract_strided_slice %217 {offsets = [0, 0], sizes = [36, 64], strides = [1, 1]} : vector<80x64xf32> to vector<36x64xf32>
    %219 = vector.extract_strided_slice %217 {offsets = [40, 0], sizes = [36, 64], strides = [1, 1]} : vector<80x64xf32> to vector<36x64xf32>
    %220 = arith.maximumf %218, %219 : vector<36x64xf32>
    %c0_96 = arith.constant 0 : index
    %c0_97 = arith.constant 0 : index
    %221 = vector.load %arg6[%c0_96, %c0_97] : memref<1x128xf32, #tpu.memory_space<vmem>>, vector<1x128xf32>
    %222 = vector.extract_strided_slice %220 {offsets = [0, 0], sizes = [29, 64], strides = [1, 1]} : vector<36x64xf32> to vector<29x64xf32>
    %c0_98 = arith.constant 0 : index
    %c0_99 = arith.constant 0 : index
    %c0_100 = arith.constant 0 : index
    %223 = vector.load %arg5[%c0_98, %c0_99, %c0_100] : memref<8x64x128xf32, #tpu.memory_space<vmem>>, vector<1x64x128xf32>
    %224 = vector.shape_cast %223 : vector<1x64x128xf32> to vector<64x128xf32>
    %cst_101 = arith.constant dense<0.000000e+00> : vector<29x128xf32>
    %225 = tpu.matmul %222, %224, %cst_101 {dimension_numbers = #tpu.dot_dimension_numbers<[1], [0], [0], [1], [0, 0, 1, 1], [], []>} : vector<29x64xf32>, vector<64x128xf32>, vector<29x128xf32> -> vector<29x128xf32>
    %226 = vector.extract_strided_slice %220 {offsets = [1, 0], sizes = [29, 64], strides = [1, 1]} : vector<36x64xf32> to vector<29x64xf32>
    %c1_102 = arith.constant 1 : index
    %c0_103 = arith.constant 0 : index
    %c0_104 = arith.constant 0 : index
    %227 = vector.load %arg5[%c1_102, %c0_103, %c0_104] : memref<8x64x128xf32, #tpu.memory_space<vmem>>, vector<1x64x128xf32>
    %228 = vector.shape_cast %227 : vector<1x64x128xf32> to vector<64x128xf32>
    %cst_105 = arith.constant dense<0.000000e+00> : vector<29x128xf32>
    %229 = tpu.matmul %226, %228, %cst_105 {dimension_numbers = #tpu.dot_dimension_numbers<[1], [0], [0], [1], [0, 0, 1, 1], [], []>} : vector<29x64xf32>, vector<64x128xf32>, vector<29x128xf32> -> vector<29x128xf32>
    %230 = arith.addf %225, %229 : vector<29x128xf32>
    %231 = vector.extract_strided_slice %220 {offsets = [2, 0], sizes = [29, 64], strides = [1, 1]} : vector<36x64xf32> to vector<29x64xf32>
    %c2_106 = arith.constant 2 : index
    %c0_107 = arith.constant 0 : index
    %c0_108 = arith.constant 0 : index
    %232 = vector.load %arg5[%c2_106, %c0_107, %c0_108] : memref<8x64x128xf32, #tpu.memory_space<vmem>>, vector<1x64x128xf32>
    %233 = vector.shape_cast %232 : vector<1x64x128xf32> to vector<64x128xf32>
    %cst_109 = arith.constant dense<0.000000e+00> : vector<29x128xf32>
    %234 = tpu.matmul %231, %233, %cst_109 {dimension_numbers = #tpu.dot_dimension_numbers<[1], [0], [0], [1], [0, 0, 1, 1], [], []>} : vector<29x64xf32>, vector<64x128xf32>, vector<29x128xf32> -> vector<29x128xf32>
    %235 = arith.addf %230, %234 : vector<29x128xf32>
    %236 = vector.extract_strided_slice %220 {offsets = [3, 0], sizes = [29, 64], strides = [1, 1]} : vector<36x64xf32> to vector<29x64xf32>
    %c3_110 = arith.constant 3 : index
    %c0_111 = arith.constant 0 : index
    %c0_112 = arith.constant 0 : index
    %237 = vector.load %arg5[%c3_110, %c0_111, %c0_112] : memref<8x64x128xf32, #tpu.memory_space<vmem>>, vector<1x64x128xf32>
    %238 = vector.shape_cast %237 : vector<1x64x128xf32> to vector<64x128xf32>
    %cst_113 = arith.constant dense<0.000000e+00> : vector<29x128xf32>
    %239 = tpu.matmul %236, %238, %cst_113 {dimension_numbers = #tpu.dot_dimension_numbers<[1], [0], [0], [1], [0, 0, 1, 1], [], []>} : vector<29x64xf32>, vector<64x128xf32>, vector<29x128xf32> -> vector<29x128xf32>
    %240 = arith.addf %235, %239 : vector<29x128xf32>
    %241 = vector.extract_strided_slice %220 {offsets = [4, 0], sizes = [29, 64], strides = [1, 1]} : vector<36x64xf32> to vector<29x64xf32>
    %c4_114 = arith.constant 4 : index
    %c0_115 = arith.constant 0 : index
    %c0_116 = arith.constant 0 : index
    %242 = vector.load %arg5[%c4_114, %c0_115, %c0_116] : memref<8x64x128xf32, #tpu.memory_space<vmem>>, vector<1x64x128xf32>
    %243 = vector.shape_cast %242 : vector<1x64x128xf32> to vector<64x128xf32>
    %cst_117 = arith.constant dense<0.000000e+00> : vector<29x128xf32>
    %244 = tpu.matmul %241, %243, %cst_117 {dimension_numbers = #tpu.dot_dimension_numbers<[1], [0], [0], [1], [0, 0, 1, 1], [], []>} : vector<29x64xf32>, vector<64x128xf32>, vector<29x128xf32> -> vector<29x128xf32>
    %245 = arith.addf %240, %244 : vector<29x128xf32>
    %246 = vector.extract_strided_slice %220 {offsets = [5, 0], sizes = [29, 64], strides = [1, 1]} : vector<36x64xf32> to vector<29x64xf32>
    %c5_118 = arith.constant 5 : index
    %c0_119 = arith.constant 0 : index
    %c0_120 = arith.constant 0 : index
    %247 = vector.load %arg5[%c5_118, %c0_119, %c0_120] : memref<8x64x128xf32, #tpu.memory_space<vmem>>, vector<1x64x128xf32>
    %248 = vector.shape_cast %247 : vector<1x64x128xf32> to vector<64x128xf32>
    %cst_121 = arith.constant dense<0.000000e+00> : vector<29x128xf32>
    %249 = tpu.matmul %246, %248, %cst_121 {dimension_numbers = #tpu.dot_dimension_numbers<[1], [0], [0], [1], [0, 0, 1, 1], [], []>} : vector<29x64xf32>, vector<64x128xf32>, vector<29x128xf32> -> vector<29x128xf32>
    %250 = arith.addf %245, %249 : vector<29x128xf32>
    %251 = vector.extract_strided_slice %220 {offsets = [6, 0], sizes = [29, 64], strides = [1, 1]} : vector<36x64xf32> to vector<29x64xf32>
    %c6_122 = arith.constant 6 : index
    %c0_123 = arith.constant 0 : index
    %c0_124 = arith.constant 0 : index
    %252 = vector.load %arg5[%c6_122, %c0_123, %c0_124] : memref<8x64x128xf32, #tpu.memory_space<vmem>>, vector<1x64x128xf32>
    %253 = vector.shape_cast %252 : vector<1x64x128xf32> to vector<64x128xf32>
    %cst_125 = arith.constant dense<0.000000e+00> : vector<29x128xf32>
    %254 = tpu.matmul %251, %253, %cst_125 {dimension_numbers = #tpu.dot_dimension_numbers<[1], [0], [0], [1], [0, 0, 1, 1], [], []>} : vector<29x64xf32>, vector<64x128xf32>, vector<29x128xf32> -> vector<29x128xf32>
    %255 = arith.addf %250, %254 : vector<29x128xf32>
    %256 = vector.extract_strided_slice %220 {offsets = [7, 0], sizes = [29, 64], strides = [1, 1]} : vector<36x64xf32> to vector<29x64xf32>
    %c7_126 = arith.constant 7 : index
    %c0_127 = arith.constant 0 : index
    %c0_128 = arith.constant 0 : index
    %257 = vector.load %arg5[%c7_126, %c0_127, %c0_128] : memref<8x64x128xf32, #tpu.memory_space<vmem>>, vector<1x64x128xf32>
    %258 = vector.shape_cast %257 : vector<1x64x128xf32> to vector<64x128xf32>
    %cst_129 = arith.constant dense<0.000000e+00> : vector<29x128xf32>
    %259 = tpu.matmul %256, %258, %cst_129 {dimension_numbers = #tpu.dot_dimension_numbers<[1], [0], [0], [1], [0, 0, 1, 1], [], []>} : vector<29x64xf32>, vector<64x128xf32>, vector<29x128xf32> -> vector<29x128xf32>
    %260 = arith.addf %255, %259 : vector<29x128xf32>
    %261 = vector.broadcast %221 : vector<1x128xf32> to vector<29x128xf32>
    %262 = arith.addf %260, %261 : vector<29x128xf32>
    %cst_130 = arith.constant 0.000000e+00 : f32
    %263 = vector.broadcast %cst_130 : f32 to vector<29x128xf32>
    %264 = arith.maximumf %262, %263 : vector<29x128xf32>
    %265 = tpu.iota {dimensions = array<i32: 0>} : vector<32x29xi32>
    %266 = tpu.iota {dimensions = array<i32: 1>} : vector<32x29xi32>
    %c16_i32 = arith.constant 16 : i32
    %267 = vector.broadcast %c16_i32 : i32 to vector<32x29xi32>
    %268 = arith.cmpi sge, %265, %267 : vector<32x29xi32>
    %c16_i32_131 = arith.constant 16 : i32
    %269 = vector.broadcast %c16_i32_131 : i32 to vector<32x29xi32>
    %270 = arith.subi %265, %269 : vector<32x29xi32>
    %271 = arith.select %268, %270, %265 : vector<32x29xi1>, vector<32x29xi32>
    %c0_i32_132 = arith.constant 0 : i32
    %272 = vector.broadcast %c0_i32_132 : i32 to vector<32x29xi32>
    %273 = arith.subi %271, %272 : vector<32x29xi32>
    %c2_i32_133 = arith.constant 2 : i32
    %274 = vector.broadcast %c2_i32_133 : i32 to vector<32x29xi32>
    %275 = arith.muli %274, %273 : vector<32x29xi32>
    %c2_i32_134 = arith.constant 2 : i32
    %276 = vector.broadcast %c2_i32_134 : i32 to vector<32x29xi32>
    %277 = arith.muli %276, %273 : vector<32x29xi32>
    %c1_i32_135 = arith.constant 1 : i32
    %278 = vector.broadcast %c1_i32_135 : i32 to vector<32x29xi32>
    %279 = arith.subi %277, %278 : vector<32x29xi32>
    %280 = arith.select %268, %275, %279 : vector<32x29xi1>, vector<32x29xi32>
    %c0_i32_136 = arith.constant 0 : i32
    %281 = vector.broadcast %c0_i32_136 : i32 to vector<32x29xi32>
    %282 = arith.cmpi sge, %273, %281 : vector<32x29xi32>
    %c6_i32 = arith.constant 6 : i32
    %283 = vector.broadcast %c6_i32 : i32 to vector<32x29xi32>
    %284 = arith.cmpi slt, %273, %283 : vector<32x29xi32>
    %285 = arith.andi %282, %284 : vector<32x29xi1>
    %c0_i32_137 = arith.constant 0 : i32
    %286 = vector.broadcast %c0_i32_137 : i32 to vector<32x29xi32>
    %287 = arith.cmpi sge, %280, %286 : vector<32x29xi32>
    %288 = arith.andi %285, %287 : vector<32x29xi1>
    %c11_i32 = arith.constant 11 : i32
    %289 = vector.broadcast %c11_i32 : i32 to vector<32x29xi32>
    %290 = arith.cmpi slt, %280, %289 : vector<32x29xi32>
    %291 = arith.andi %288, %290 : vector<32x29xi1>
    %c1_i32_138 = arith.constant 1 : i32
    %292 = vector.broadcast %c1_i32_138 : i32 to vector<32x29xi32>
    %293 = arith.muli %292, %280 : vector<32x29xi32>
    %c0_i32_139 = arith.constant 0 : i32
    %294 = vector.broadcast %c0_i32_139 : i32 to vector<32x29xi32>
    %295 = arith.addi %294, %293 : vector<32x29xi32>
    %296 = arith.cmpi eq, %266, %295 : vector<32x29xi32>
    %297 = arith.andi %291, %296 : vector<32x29xi1>
    %c8_i32 = arith.constant 8 : i32
    %298 = vector.broadcast %c8_i32 : i32 to vector<32x29xi32>
    %299 = arith.subi %271, %298 : vector<32x29xi32>
    %c2_i32_140 = arith.constant 2 : i32
    %300 = vector.broadcast %c2_i32_140 : i32 to vector<32x29xi32>
    %301 = arith.muli %300, %299 : vector<32x29xi32>
    %c2_i32_141 = arith.constant 2 : i32
    %302 = vector.broadcast %c2_i32_141 : i32 to vector<32x29xi32>
    %303 = arith.muli %302, %299 : vector<32x29xi32>
    %c1_i32_142 = arith.constant 1 : i32
    %304 = vector.broadcast %c1_i32_142 : i32 to vector<32x29xi32>
    %305 = arith.subi %303, %304 : vector<32x29xi32>
    %306 = arith.select %268, %301, %305 : vector<32x29xi1>, vector<32x29xi32>
    %c0_i32_143 = arith.constant 0 : i32
    %307 = vector.broadcast %c0_i32_143 : i32 to vector<32x29xi32>
    %308 = arith.cmpi sge, %299, %307 : vector<32x29xi32>
    %c6_i32_144 = arith.constant 6 : i32
    %309 = vector.broadcast %c6_i32_144 : i32 to vector<32x29xi32>
    %310 = arith.cmpi slt, %299, %309 : vector<32x29xi32>
    %311 = arith.andi %308, %310 : vector<32x29xi1>
    %c0_i32_145 = arith.constant 0 : i32
    %312 = vector.broadcast %c0_i32_145 : i32 to vector<32x29xi32>
    %313 = arith.cmpi sge, %306, %312 : vector<32x29xi32>
    %314 = arith.andi %311, %313 : vector<32x29xi1>
    %c11_i32_146 = arith.constant 11 : i32
    %315 = vector.broadcast %c11_i32_146 : i32 to vector<32x29xi32>
    %316 = arith.cmpi slt, %306, %315 : vector<32x29xi32>
    %317 = arith.andi %314, %316 : vector<32x29xi1>
    %c1_i32_147 = arith.constant 1 : i32
    %318 = vector.broadcast %c1_i32_147 : i32 to vector<32x29xi32>
    %319 = arith.muli %318, %306 : vector<32x29xi32>
    %c18_i32_148 = arith.constant 18 : i32
    %320 = vector.broadcast %c18_i32_148 : i32 to vector<32x29xi32>
    %321 = arith.addi %320, %319 : vector<32x29xi32>
    %322 = arith.cmpi eq, %266, %321 : vector<32x29xi32>
    %323 = arith.andi %317, %322 : vector<32x29xi1>
    %324 = arith.ori %297, %323 : vector<32x29xi1>
    %325 = arith.extui %324 : vector<32x29xi1> to vector<32x29xi32>
    %326 = arith.sitofp %325 : vector<32x29xi32> to vector<32x29xf32>
    %cst_149 = arith.constant dense<0.000000e+00> : vector<32x128xf32>
    %327 = tpu.matmul %326, %264, %cst_149 {dimension_numbers = #tpu.dot_dimension_numbers<[1], [0], [0], [1], [0, 0, 1, 1], [], []>} : vector<32x29xf32>, vector<29x128xf32>, vector<32x128xf32> -> vector<32x128xf32>
    %328 = vector.extract_strided_slice %327 {offsets = [0, 0], sizes = [16, 128], strides = [1, 1]} : vector<32x128xf32> to vector<16x128xf32>
    %329 = vector.extract_strided_slice %327 {offsets = [16, 0], sizes = [16, 128], strides = [1, 1]} : vector<32x128xf32> to vector<16x128xf32>
    %330 = arith.maximumf %328, %329 : vector<16x128xf32>
    %331 = vector.shape_cast %330 : vector<16x128xf32> to vector<2x8x128xf32>
    %c0_150 = arith.constant 0 : index
    %c0_151 = arith.constant 0 : index
    %c0_152 = arith.constant 0 : index
    %332 = vector.load %arg10[%c0_150, %c0_151, %c0_152] : memref<2x8x128xf32, #tpu.memory_space<vmem>>, vector<2x8x128xf32>
    tpu.vector_store %arg10[%c0_150, %c0_151, %c0_152], %331 {strides = array<i32>} : memref<2x8x128xf32, #tpu.memory_space<vmem>>, vector<2x8x128xf32>,
    %333 = vector.extract_strided_slice %331 {offsets = [0, 0, 0], sizes = [2, 1, 16], strides = [1, 1, 1]} : vector<2x8x128xf32> to vector<2x1x16xf32>
    %334 = vector.shape_cast %333 : vector<2x1x16xf32> to vector<2x16xf32>
    %c0_153 = arith.constant 0 : index
    %c0_154 = arith.constant 0 : index
    %c0_155 = arith.constant 0 : index
    %335 = vector.load %arg7[%c0_153, %c0_154, %c0_155] : memref<6x16x128xf32, #tpu.memory_space<vmem>>, vector<1x16x128xf32>
    %336 = vector.shape_cast %335 : vector<1x16x128xf32> to vector<16x128xf32>
    %cst_156 = arith.constant dense<0.000000e+00> : vector<2x128xf32>
    %337 = tpu.matmul %334, %336, %cst_156 {dimension_numbers = #tpu.dot_dimension_numbers<[1], [0], [0], [1], [0, 0, 1, 1], [], []>} : vector<2x16xf32>, vector<16x128xf32>, vector<2x128xf32> -> vector<2x128xf32>
    %338 = vector.extract_strided_slice %331 {offsets = [0, 1, 0], sizes = [2, 1, 16], strides = [1, 1, 1]} : vector<2x8x128xf32> to vector<2x1x16xf32>
    %339 = vector.shape_cast %338 : vector<2x1x16xf32> to vector<2x16xf32>
    %c1_157 = arith.constant 1 : index
    %c0_158 = arith.constant 0 : index
    %c0_159 = arith.constant 0 : index
    %340 = vector.load %arg7[%c1_157, %c0_158, %c0_159] : memref<6x16x128xf32, #tpu.memory_space<vmem>>, vector<1x16x128xf32>
    %341 = vector.shape_cast %340 : vector<1x16x128xf32> to vector<16x128xf32>
    %cst_160 = arith.constant dense<0.000000e+00> : vector<2x128xf32>
    %342 = tpu.matmul %339, %341, %cst_160 {dimension_numbers = #tpu.dot_dimension_numbers<[1], [0], [0], [1], [0, 0, 1, 1], [], []>} : vector<2x16xf32>, vector<16x128xf32>, vector<2x128xf32> -> vector<2x128xf32>
    %343 = arith.addf %337, %342 : vector<2x128xf32>
    %344 = vector.extract_strided_slice %331 {offsets = [0, 2, 0], sizes = [2, 1, 16], strides = [1, 1, 1]} : vector<2x8x128xf32> to vector<2x1x16xf32>
    %345 = vector.shape_cast %344 : vector<2x1x16xf32> to vector<2x16xf32>
    %c2_161 = arith.constant 2 : index
    %c0_162 = arith.constant 0 : index
    %c0_163 = arith.constant 0 : index
    %346 = vector.load %arg7[%c2_161, %c0_162, %c0_163] : memref<6x16x128xf32, #tpu.memory_space<vmem>>, vector<1x16x128xf32>
    %347 = vector.shape_cast %346 : vector<1x16x128xf32> to vector<16x128xf32>
    %cst_164 = arith.constant dense<0.000000e+00> : vector<2x128xf32>
    %348 = tpu.matmul %345, %347, %cst_164 {dimension_numbers = #tpu.dot_dimension_numbers<[1], [0], [0], [1], [0, 0, 1, 1], [], []>} : vector<2x16xf32>, vector<16x128xf32>, vector<2x128xf32> -> vector<2x128xf32>
    %349 = arith.addf %343, %348 : vector<2x128xf32>
    %350 = vector.extract_strided_slice %331 {offsets = [0, 3, 0], sizes = [2, 1, 16], strides = [1, 1, 1]} : vector<2x8x128xf32> to vector<2x1x16xf32>
    %351 = vector.shape_cast %350 : vector<2x1x16xf32> to vector<2x16xf32>
    %c3_165 = arith.constant 3 : index
    %c0_166 = arith.constant 0 : index
    %c0_167 = arith.constant 0 : index
    %352 = vector.load %arg7[%c3_165, %c0_166, %c0_167] : memref<6x16x128xf32, #tpu.memory_space<vmem>>, vector<1x16x128xf32>
    %353 = vector.shape_cast %352 : vector<1x16x128xf32> to vector<16x128xf32>
    %cst_168 = arith.constant dense<0.000000e+00> : vector<2x128xf32>
    %354 = tpu.matmul %351, %353, %cst_168 {dimension_numbers = #tpu.dot_dimension_numbers<[1], [0], [0], [1], [0, 0, 1, 1], [], []>} : vector<2x16xf32>, vector<16x128xf32>, vector<2x128xf32> -> vector<2x128xf32>
    %355 = arith.addf %349, %354 : vector<2x128xf32>
    %356 = vector.extract_strided_slice %331 {offsets = [0, 4, 0], sizes = [2, 1, 16], strides = [1, 1, 1]} : vector<2x8x128xf32> to vector<2x1x16xf32>
    %357 = vector.shape_cast %356 : vector<2x1x16xf32> to vector<2x16xf32>
    %c4_169 = arith.constant 4 : index
    %c0_170 = arith.constant 0 : index
    %c0_171 = arith.constant 0 : index
    %358 = vector.load %arg7[%c4_169, %c0_170, %c0_171] : memref<6x16x128xf32, #tpu.memory_space<vmem>>, vector<1x16x128xf32>
    %359 = vector.shape_cast %358 : vector<1x16x128xf32> to vector<16x128xf32>
    %cst_172 = arith.constant dense<0.000000e+00> : vector<2x128xf32>
    %360 = tpu.matmul %357, %359, %cst_172 {dimension_numbers = #tpu.dot_dimension_numbers<[1], [0], [0], [1], [0, 0, 1, 1], [], []>} : vector<2x16xf32>, vector<16x128xf32>, vector<2x128xf32> -> vector<2x128xf32>
    %361 = arith.addf %355, %360 : vector<2x128xf32>
    %362 = vector.extract_strided_slice %331 {offsets = [0, 5, 0], sizes = [2, 1, 16], strides = [1, 1, 1]} : vector<2x8x128xf32> to vector<2x1x16xf32>
    %363 = vector.shape_cast %362 : vector<2x1x16xf32> to vector<2x16xf32>
    %c5_173 = arith.constant 5 : index
    %c0_174 = arith.constant 0 : index
    %c0_175 = arith.constant 0 : index
    %364 = vector.load %arg7[%c5_173, %c0_174, %c0_175] : memref<6x16x128xf32, #tpu.memory_space<vmem>>, vector<1x16x128xf32>
    %365 = vector.shape_cast %364 : vector<1x16x128xf32> to vector<16x128xf32>
    %cst_176 = arith.constant dense<0.000000e+00> : vector<2x128xf32>
    %366 = tpu.matmul %363, %365, %cst_176 {dimension_numbers = #tpu.dot_dimension_numbers<[1], [0], [0], [1], [0, 0, 1, 1], [], []>} : vector<2x16xf32>, vector<16x128xf32>, vector<2x128xf32> -> vector<2x128xf32>
    %367 = arith.addf %361, %366 : vector<2x128xf32>
    %c0_177 = arith.constant 0 : index
    %c0_178 = arith.constant 0 : index
    %368 = vector.load %arg8[%c0_177, %c0_178] : memref<1x128xf32, #tpu.memory_space<vmem>>, vector<1x128xf32>
    %369 = vector.broadcast %368 : vector<1x128xf32> to vector<2x128xf32>
    %370 = arith.addf %367, %369 : vector<2x128xf32>
    %c0_179 = arith.constant 0 : index
    %c0_180 = arith.constant 0 : index
    %371 = vector.load %arg9[%c0_179, %c0_180] : memref<2x128xf32, #tpu.memory_space<vmem>>, vector<2x128xf32>
    tpu.vector_store %arg9[%c0_179, %c0_180], %370 {strides = array<i32>} : memref<2x128xf32, #tpu.memory_space<vmem>>, vector<2x128xf32>,
    return
  }
}

</mosaic_0001>

<llo_original>
// kernel: base_model_forward.1
$region0: #{base_model_forward.1}
  #allocation0 [shape = 'u32[]', space=smem, size = 0x4, offset = 0x4, fixed_abs, tag = 'smem constant byte address 0x4 - core index']
  #allocation1 [shape = 'u32[144,128]{1,0:T(1,128)}', space=vmem, size = 0x12000, scoped, tag = 'internal scratch']
  %s0 = inlined_call_operand.vmem [shape: f32[80,8], index: 0, kind: input, shape index: {}]
  %s1 = inlined_call_operand.vmem [shape: f32[8,8,32], index: 1, kind: input, shape index: {}]
  %s2 = inlined_call_operand.vmem [shape: f32[1,32], index: 2, kind: input, shape index: {}]
  %s3 = inlined_call_operand.hbm [shape: f32[8,32,64], index: 3, kind: input, shape index: {}]
  %s4 = inlined_call_operand.vmem [shape: f32[1,64], index: 4, kind: input, shape index: {}]
  %s5 = inlined_call_operand.hbm [shape: f32[8,64,128], index: 5, kind: input, shape index: {}]
  %s6 = inlined_call_operand.vmem [shape: f32[1,128], index: 6, kind: input, shape index: {}]
  %s7 = inlined_call_operand.vmem [shape: f32[6,16,128], index: 7, kind: input, shape index: {}]
  %s8 = inlined_call_operand.vmem [shape: f32[1,128], index: 8, kind: input, shape index: {}]
  %s9 = inlined_call_operand.hbm [shape: f32[2,128], index: 9, kind: output, shape index: {0}]
  %s10 = inlined_call_operand.vmem [shape: f32[2,8,128], index: 10, kind: output, shape index: {1}]
  %11 = xla_tuple %s9, %s10
  %s12 = sld [smem:[#allocation0]]
  $region62: #{base_model_forward.1} parent=0
    _
  %s14 = ssub.s32 1, %s12
  %s15 = scalar_select 0, %s14, %s12
  $region1: #{base_model_forward.1} parent=0
    #allocation2 [shape = 'u8[131072]{0}', space=vmem, size = 0x20000, scoped, tag = 'input window, operand 3, single buffered']
    #allocation3 [shape = 's32[1]{0}', space=sflag, size = 0x4, scoped, tag = 'scoped memory for base_model_forward.1']
    #allocation4 [shape = 's32[1]{0}', space=sflag, size = 0x4, scoped, tag = 'scoped memory for base_model_forward.1']
    #allocation5 [shape = 'u8[262144]{0}', space=vmem, size = 0x40000, scoped, tag = 'input window, operand 5, single buffered']
    #allocation6 [shape = 's32[1]{0}', space=sflag, size = 0x4, scoped, tag = 'scoped memory for base_model_forward.1']
    #allocation7 [shape = 'u8[1024]{0}', space=vmem, size = 0x400, scoped, tag = 'output window, operand 0, single buffered']
    %16 = vsyncpa [#allocation3], 0
    %17 = vsyncpa [#allocation6], 0
    %18 = vsyncpa [#allocation4], 0
    // Predicated region
    $region2: #{base_model_forward.1} parent=1 // pred_check
      _
    $region3: #{base_model_forward.1} parent=1 // pred_check_branch
      %20 = sbr.rel (0) target = $region5
    $region4: #{base_model_forward.1} parent=1 // pred_region
      _
    $region5: #{base_model_forward.1} parent=1 // pred_fallthru
      _
    // Predicated region
    $region6: #{base_model_forward.1} parent=1 // pred_check
      _
    $region7: #{base_model_forward.1} parent=1 // pred_check_branch
      %22 = sbr.rel (0) target = $region9
    $region8: #{base_model_forward.1} parent=1 // pred_region
      _
    $region9: #{base_model_forward.1} parent=1 // pred_fallthru
      _
    // Predicated region
    $region10: #{base_model_forward.1} parent=1 // pred_check
      _
    $region11: #{base_model_forward.1} parent=1 // pred_check_branch
      %24 = sbr.rel (0) target = $region13
    $region12: #{base_model_forward.1} parent=1 // pred_region
      _
    $region13: #{base_model_forward.1} parent=1 // pred_fallthru
      _
    // Predicated region
    $region14: #{base_model_forward.1} parent=1 // pred_check
      _
    $region15: #{base_model_forward.1} parent=1 // pred_check_branch
      %26 = sbr.rel (0) target = $region17
    $region16: #{base_model_forward.1} parent=1 // pred_region
      %s28 = ssub.s32 4096, 4096
      %29 = vsyncadd [#allocation3], %s28
      %s30 = sshll.u32 [#allocation2], 4
      %s31 = int_to_ptr.vmem [resolvable:$true] %s30
      %36 = dma.hbm_to_vmem [thread:$0]  %s3, 4096, %s31, [#allocation3], 128, 128, 8
    $region17: #{base_model_forward.1} parent=1 // pred_fallthru
      _
    // Predicated region
    $region18: #{base_model_forward.1} parent=1 // pred_check
      _
    $region19: #{base_model_forward.1} parent=1 // pred_check_branch
      %38 = sbr.rel (0) target = $region21
    $region20: #{base_model_forward.1} parent=1 // pred_region
      _
    $region21: #{base_model_forward.1} parent=1 // pred_fallthru
      _
    // Predicated region
    $region22: #{base_model_forward.1} parent=1 // pred_check
      _
    $region23: #{base_model_forward.1} parent=1 // pred_check_branch
      %40 = sbr.rel (0) target = $region25
    $region24: #{base_model_forward.1} parent=1 // pred_region
      %s42 = ssub.s32 8192, 8192
      %43 = vsyncadd [#allocation6], %s42
      %s44 = sshll.u32 [#allocation5], 4
      %s45 = int_to_ptr.vmem [resolvable:$true] %s44
      %50 = dma.hbm_to_vmem [thread:$0]  %s5, 8192, %s45, [#allocation6], 128, 128, 8
    $region25: #{base_model_forward.1} parent=1 // pred_fallthru
      _
    // Predicated region
    $region26: #{base_model_forward.1} parent=1 // pred_check
      _
    $region27: #{base_model_forward.1} parent=1 // pred_check_branch
      %52 = sbr.rel (0) target = $region29
    $region28: #{base_model_forward.1} parent=1 // pred_region
      _
    $region29: #{base_model_forward.1} parent=1 // pred_fallthru
      _
    // Predicated region
    $region30: #{base_model_forward.1} parent=1 // pred_check
      _
    $region31: #{base_model_forward.1} parent=1 // pred_check_branch
      %54 = sbr.rel (0) target = $region33
    $region32: #{base_model_forward.1} parent=1 // pred_region
      _
    $region33: #{base_model_forward.1} parent=1 // pred_fallthru
      _
    // Predicated region
    $region34: #{base_model_forward.1} parent=1 // pred_check
      _
    $region35: #{base_model_forward.1} parent=1 // pred_check_branch
      %56 = sbr.rel (0) target = $region37
    $region36: #{base_model_forward.1} parent=1 // pred_region
      _
    $region37: #{base_model_forward.1} parent=1 // pred_fallthru
      _
    // Predicated region
    $region38: #{base_model_forward.1} parent=1 // pred_check
      _
    $region39: #{base_model_forward.1} parent=1 // pred_check_branch
      %58 = sbr.rel (0) target = $region41
    $region40: #{base_model_forward.1} parent=1 // pred_region
      %59 = dma.done [#allocation3], 4096
    $region41: #{base_model_forward.1} parent=1 // pred_fallthru
      _
    // Predicated region
    $region42: #{base_model_forward.1} parent=1 // pred_check
      _
    $region43: #{base_model_forward.1} parent=1 // pred_check_branch
      %61 = sbr.rel (0) target = $region45
    $region44: #{base_model_forward.1} parent=1 // pred_region
      %62 = dma.done [#allocation6], 8192
    $region45: #{base_model_forward.1} parent=1 // pred_fallthru
      _
    %v63 = vld [vmem:[%s0] sm:$0xff]
    %v64 = vld [vmem:[%s0 + $0x8] sm:$0xff]
    %v65 = vld [vmem:[%s0 + $0x10] sm:$0xff]
    %v66 = vld [vmem:[%s0 + $0x18] sm:$0xff]
    %v67 = vld [vmem:[%s0 + $0x20] sm:$0xff]
    %v68 = vld [vmem:[%s0 + $0x28] sm:$0xff]
    %v69 = vld [vmem:[%s0 + $0x30] sm:$0xff]
    %v70 = vld [vmem:[%s0 + $0x38] sm:$0xff]
    %v71 = vld [vmem:[%s0 + $0x40] sm:$0xff]
    %v72 = vld [vmem:[%s0 + $0x48] sm:$0xff]
    %v73 = vld [vmem:[%s2] sm:$0x1]
    %v74 = vld [vmem:[%s1] sm:$0xff]
    %s75 = scalar_lea.vmem %s1, 8
    %v76 = vld [vmem:[%s75] sm:$0xff]
    %vm87 = vcmask 1046528
    %v88 = vrot.slane %v63, 1
    %v89 = vrot.slane %v64, 1
    %v90 = vsel %vm87, %v88, %v89
    %v91 = vrot.slane %v65, 1
    %v92 = vsel %vm87, %v89, %v91
    %v93 = vrot.slane %v66, 1
    %v94 = vsel %vm87, %v91, %v93
    %v95 = vrot.slane %v67, 1
    %v96 = vsel %vm87, %v93, %v95
    %v97 = vrot.slane %v68, 1
    %v98 = vsel %vm87, %v95, %v97
    %v99 = vrot.slane %v69, 1
    %v100 = vsel %vm87, %v97, %v99
    %v101 = vrot.slane %v70, 1
    %v102 = vsel %vm87, %v99, %v101
    %v103 = vrot.slane %v71, 1
    %v104 = vsel %vm87, %v101, %v103
    %v105 = vrot.slane %v72, 1
    %v106 = vsel %vm87, %v103, %v105
    %vm107 = vcmask 64512
    %v108 = vsel %vm107, %v90, 0
    %v110 = vsel %vm107, %v92, 0
    %v112 = vsel %vm107, %v94, 0
    %v114 = vsel %vm107, %v96, 0
    %v116 = vsel %vm107, %v98, 0
    %v118 = vsel %vm107, %v100, 0
    %v120 = vsel %vm107, %v102, 0
    %v122 = vsel %vm107, %v104, 0
    %v124 = vsel %vm107, %v106, 0
    %v126 = vsel %vm107, %v105, 0
    %128 = vmatprep.subr.mxu0 0.0
    %129 = vmatpush1.msra.mxu0 %v76
    %130 = vmatprep.subr.mxu0 0.0
    %131 = vmatpush1.msra.mxu0 0.0
    %132 = vmatprep.subr.mxu0 0.0
    %133 = vmatpush1.msra.mxu0 0.0
    %134 = vmatprep.subr.mxu0 0.0
    %135 = vmatpush1.msra.mxu0 0.0
    %136 = vmatprep.subr.mxu0 0.0
    %137 = vmatpush1.msra.mxu0 0.0
    %138 = vmatprep.subr.mxu0 0.0
    %139 = vmatpush1.msra.mxu0 0.0
    %140 = vmatprep.subr.mxu0 0.0
    %141 = vmatpush1.msra.mxu0 0.0
    %142 = vmatprep.subr.mxu0 0.0
    %143 = vmatpush1.msra.mxu0 0.0
    %144 = vmatprep.subr.mxu0 0.0
    %145 = vmatpush1.msra.mxu0 0.0
    %146 = vmatprep.subr.mxu0 0.0
    %147 = vmatpush1.msra.mxu0 0.0
    %148 = vmatprep.subr.mxu0 0.0
    %149 = vmatpush1.msra.mxu0 0.0
    %150 = vmatprep.subr.mxu0 0.0
    %151 = vmatpush1.msra.mxu0 0.0
    %152 = vmatprep.subr.mxu0 0.0
    %153 = vmatpush1.msra.mxu0 0.0
    %154 = vmatprep.subr.mxu0 0.0
    %155 = vmatpush1.msra.mxu0 0.0
    %156 = vmatprep.subr.mxu0 0.0
    %157 = vmatpush1.msra.mxu0 0.0
    %158 = vmatprep.subr.mxu0 0.0
    %159 = vmatpush1.msra.mxu0 0.0
    %160 = vmatprep.subr.mxu0 0.0
    %161 = vmatpush1.msra.mxu0 0.0
    %162 = vmatprep.subr.mxu0 0.0
    %163 = vmatpush1.msra.mxu0 0.0
    %164 = vmatprep.subr.mxu0 0.0
    %165 = vmatpush1.msra.mxu0 0.0
    %166 = vmatprep.subr.mxu0 0.0
    %167 = vmatpush1.msra.mxu0 0.0
    %168 = vmatprep.subr.mxu0 0.0
    %169 = vmatpush1.msra.mxu0 0.0
    %170 = vmatprep.subr.mxu0 0.0
    %171 = vmatpush1.msra.mxu0 0.0
    %172 = vmatprep.subr.mxu0 0.0
    %173 = vmatpush1.msra.mxu0 0.0
    %174 = vmatprep.subr.mxu0 0.0
    %175 = vmatpush1.msra.mxu0 0.0
    %176 = vmatprep.subr.mxu0 0.0
    %177 = vmatpush1.msra.mxu0 0.0
    %178 = vmatprep.subr.mxu0 0.0
    %179 = vmatpush1.msra.mxu0 0.0
    %180 = vmatprep.subr.mxu0 0.0
    %181 = vmatpush1.msra.mxu0 0.0
    %182 = vmatprep.subr.mxu0 0.0
    %183 = vmatpush1.msra.mxu0 0.0
    %184 = vmatprep.subr.mxu0 0.0
    %185 = vmatpush1.msra.mxu0 0.0
    %186 = vmatprep.subr.mxu0 0.0
    %187 = vmatpush1.msra.mxu0 0.0
    %188 = vmatprep.subr.mxu0 0.0
    %189 = vmatpush1.msra.mxu0 0.0
    %190 = vmatprep.subr.mxu0 0.0
    %191 = vmatpush1.msra.mxu0 0.0
    %192 = vmatprep.mubr.f32.mxu0 0.0
    %193 = vmatmul.mubr.f32.gmra.mrb[0].mxu0 %v108
    %v194 = vpop.f32.mrb[0].mxu0
    %v195 = vadd.f32 0.0, %v194
    %v196 = vpop.f32.mrb[0].mxu0
    %197 = vmatprep.mubr.f32.mxu0 0.0
    %198 = vmatmul.mubr.f32.gmra.mrb[0].mxu0 %v110
    %v199 = vpop.f32.mrb[0].mxu0
    %v200 = vadd.f32 0.0, %v199
    %v201 = vpop.f32.mrb[0].mxu0
    %202 = vmatprep.mubr.f32.mxu0 0.0
    %203 = vmatmul.mubr.f32.gmra.mrb[0].mxu0 %v112
    %v204 = vpop.f32.mrb[0].mxu0
    %v205 = vadd.f32 0.0, %v204
    %v206 = vpop.f32.mrb[0].mxu0
    %207 = vmatprep.mubr.f32.mxu0 0.0
    %208 = vmatmul.mubr.f32.gmra.mrb[0].mxu0 %v114
    %v209 = vpop.f32.mrb[0].mxu0
    %v210 = vadd.f32 0.0, %v209
    %v211 = vpop.f32.mrb[0].mxu0
    %212 = vmatprep.mubr.f32.mxu0 0.0
    %213 = vmatmul.mubr.f32.gmra.mrb[0].mxu0 %v116
    %v214 = vpop.f32.mrb[0].mxu0
    %v215 = vadd.f32 0.0, %v214
    %v216 = vpop.f32.mrb[0].mxu0
    %217 = vmatprep.mubr.f32.mxu0 0.0
    %218 = vmatmul.mubr.f32.gmra.mrb[0].mxu0 %v118
    %v219 = vpop.f32.mrb[0].mxu0
    %v220 = vadd.f32 0.0, %v219
    %v221 = vpop.f32.mrb[0].mxu0
    %222 = vmatprep.mubr.f32.mxu0 0.0
    %223 = vmatmul.mubr.f32.gmra.mrb[0].mxu0 %v120
    %v224 = vpop.f32.mrb[0].mxu0
    %v225 = vadd.f32 0.0, %v224
    %v226 = vpop.f32.mrb[0].mxu0
    %227 = vmatprep.mubr.f32.mxu0 0.0
    %228 = vmatmul.mubr.f32.gmra.mrb[0].mxu0 %v122
    %v229 = vpop.f32.mrb[0].mxu0
    %v230 = vadd.f32 0.0, %v229
    %v231 = vpop.f32.mrb[0].mxu0
    %232 = vmatprep.mubr.f32.mxu0 0.0
    %233 = vmatmul.mubr.f32.gmra.mrb[0].mxu0 %v124
    %v234 = vpop.f32.mrb[0].mxu0
    %v235 = vadd.f32 0.0, %v234
    %v236 = vpop.f32.mrb[0].mxu0
    %237 = vmatprep.mubr.f32.mxu0 0.0
    %238 = vmatmul.mubr.f32.gmra.mrb[0].mxu0 %v126
    %v239 = vpop.f32.mrb[0].mxu0
    %v240 = vadd.f32 0.0, %v239
    %v241 = vpop.f32.mrb[0].mxu0
    %242 = vdwg.mxu0
    %v243 = vsel %vm107, %v63, 0
    %v245 = vsel %vm107, %v64, 0
    %v247 = vsel %vm107, %v65, 0
    %v249 = vsel %vm107, %v66, 0
    %v251 = vsel %vm107, %v67, 0
    %v253 = vsel %vm107, %v68, 0
    %v255 = vsel %vm107, %v69, 0
    %v257 = vsel %vm107, %v70, 0
    %v259 = vsel %vm107, %v71, 0
    %v261 = vsel %vm107, %v72, 0
    %263 = vmatprep.subr.mxu0 0.0
    %264 = vmatpush1.msra.mxu0 %v74
    %265 = vmatprep.subr.mxu0 0.0
    %266 = vmatpush1.msra.mxu0 0.0
    %267 = vmatprep.subr.mxu0 0.0
    %268 = vmatpush1.msra.mxu0 0.0
    %269 = vmatprep.subr.mxu0 0.0
    %270 = vmatpush1.msra.mxu0 0.0
    %271 = vmatprep.subr.mxu0 0.0
    %272 = vmatpush1.msra.mxu0 0.0
    %273 = vmatprep.subr.mxu0 0.0
    %274 = vmatpush1.msra.mxu0 0.0
    %275 = vmatprep.subr.mxu0 0.0
    %276 = vmatpush1.msra.mxu0 0.0
    %277 = vmatprep.subr.mxu0 0.0
    %278 = vmatpush1.msra.mxu0 0.0
    %279 = vmatprep.subr.mxu0 0.0
    %280 = vmatpush1.msra.mxu0 0.0
    %281 = vmatprep.subr.mxu0 0.0
    %282 = vmatpush1.msra.mxu0 0.0
    %283 = vmatprep.subr.mxu0 0.0
    %284 = vmatpush1.msra.mxu0 0.0
    %285 = vmatprep.subr.mxu0 0.0
    %286 = vmatpush1.msra.mxu0 0.0
    %287 = vmatprep.subr.mxu0 0.0
    %288 = vmatpush1.msra.mxu0 0.0
    %289 = vmatprep.subr.mxu0 0.0
    %290 = vmatpush1.msra.mxu0 0.0
    %291 = vmatprep.subr.mxu0 0.0
    %292 = vmatpush1.msra.mxu0 0.0
    %293 = vmatprep.subr.mxu0 0.0
    %294 = vmatpush1.msra.mxu0 0.0
    %295 = vmatprep.subr.mxu0 0.0
    %296 = vmatpush1.msra.mxu0 0.0
    %297 = vmatprep.subr.mxu0 0.0
    %298 = vmatpush1.msra.mxu0 0.0
    %299 = vmatprep.subr.mxu0 0.0
    %300 = vmatpush1.msra.mxu0 0.0
    %301 = vmatprep.subr.mxu0 0.0
    %302 = vmatpush1.msra.mxu0 0.0
    %303 = vmatprep.subr.mxu0 0.0
    %304 = vmatpush1.msra.mxu0 0.0
    %305 = vmatprep.subr.mxu0 0.0
    %306 = vmatpush1.msra.mxu0 0.0
    %307 = vmatprep.subr.mxu0 0.0
    %308 = vmatpush1.msra.mxu0 0.0
    %309 = vmatprep.subr.mxu0 0.0
    %310 = vmatpush1.msra.mxu0 0.0
    %311 = vmatprep.subr.mxu0 0.0
    %312 = vmatpush1.msra.mxu0 0.0
    %313 = vmatprep.subr.mxu0 0.0
    %314 = vmatpush1.msra.mxu0 0.0
    %315 = vmatprep.subr.mxu0 0.0
    %316 = vmatpush1.msra.mxu0 0.0
    %317 = vmatprep.subr.mxu0 0.0
    %318 = vmatpush1.msra.mxu0 0.0
    %319 = vmatprep.subr.mxu0 0.0
    %320 = vmatpush1.msra.mxu0 0.0
    %321 = vmatprep.subr.mxu0 0.0
    %322 = vmatpush1.msra.mxu0 0.0
    %323 = vmatprep.subr.mxu0 0.0
    %324 = vmatpush1.msra.mxu0 0.0
    %325 = vmatprep.subr.mxu0 0.0
    %326 = vmatpush1.msra.mxu0 0.0
    %327 = vmatprep.mubr.f32.mxu0 0.0
    %328 = vmatmul.mubr.f32.gmra.mrb[0].mxu0 %v243
    %v329 = vpop.f32.mrb[0].mxu0
    %v330 = vadd.f32 %v195, %v329
    %v331 = vpop.f32.mrb[0].mxu0
    %332 = vmatprep.mubr.f32.mxu0 0.0
    %333 = vmatmul.mubr.f32.gmra.mrb[0].mxu0 %v245
    %v334 = vpop.f32.mrb[0].mxu0
    %v335 = vadd.f32 %v200, %v334
    %v336 = vpop.f32.mrb[0].mxu0
    %337 = vmatprep.mubr.f32.mxu0 0.0
    %338 = vmatmul.mubr.f32.gmra.mrb[0].mxu0 %v247
    %v339 = vpop.f32.mrb[0].mxu0
    %v340 = vadd.f32 %v205, %v339
    %v341 = vpop.f32.mrb[0].mxu0
    %342 = vmatprep.mubr.f32.mxu0 0.0
    %343 = vmatmul.mubr.f32.gmra.mrb[0].mxu0 %v249
    %v344 = vpop.f32.mrb[0].mxu0
    %v345 = vadd.f32 %v210, %v344
    %v346 = vpop.f32.mrb[0].mxu0
    %347 = vmatprep.mubr.f32.mxu0 0.0
    %348 = vmatmul.mubr.f32.gmra.mrb[0].mxu0 %v251
    %v349 = vpop.f32.mrb[0].mxu0
    %v350 = vadd.f32 %v215, %v349
    %v351 = vpop.f32.mrb[0].mxu0
    %352 = vmatprep.mubr.f32.mxu0 0.0
    %353 = vmatmul.mubr.f32.gmra.mrb[0].mxu0 %v253
    %v354 = vpop.f32.mrb[0].mxu0
    %v355 = vadd.f32 %v220, %v354
    %v356 = vpop.f32.mrb[0].mxu0
    %357 = vmatprep.mubr.f32.mxu0 0.0
    %358 = vmatmul.mubr.f32.gmra.mrb[0].mxu0 %v255
    %v359 = vpop.f32.mrb[0].mxu0
    %v360 = vadd.f32 %v225, %v359
    %v361 = vpop.f32.mrb[0].mxu0
    %362 = vmatprep.mubr.f32.mxu0 0.0
    %363 = vmatmul.mubr.f32.gmra.mrb[0].mxu0 %v257
    %v364 = vpop.f32.mrb[0].mxu0
    %v365 = vadd.f32 %v230, %v364
    %v366 = vpop.f32.mrb[0].mxu0
    %367 = vmatprep.mubr.f32.mxu0 0.0
    %368 = vmatmul.mubr.f32.gmra.mrb[0].mxu0 %v259
    %v369 = vpop.f32.mrb[0].mxu0
    %v370 = vadd.f32 %v235, %v369
    %v371 = vpop.f32.mrb[0].mxu0
    %372 = vmatprep.mubr.f32.mxu0 0.0
    %373 = vmatmul.mubr.f32.gmra.mrb[0].mxu0 %v261
    %v374 = vpop.f32.mrb[0].mxu0
    %v375 = vadd.f32 %v240, %v374
    %v376 = vpop.f32.mrb[0].mxu0
    %377 = vdwg.mxu0
    %s378 = scalar_lea.vmem %s1, 16
    %v379 = vld [vmem:[%s378] sm:$0xff]
    %vm380 = vcmask 1045504
    %v381 = vrot.slane %v63, 2
    %v382 = vrot.slane %v64, 2
    %v383 = vsel %vm380, %v381, %v382
    %v384 = vrot.slane %v65, 2
    %v385 = vsel %vm380, %v382, %v384
    %v386 = vrot.slane %v66, 2
    %v387 = vsel %vm380, %v384, %v386
    %v388 = vrot.slane %v67, 2
    %v389 = vsel %vm380, %v386, %v388
    %v390 = vrot.slane %v68, 2
    %v391 = vsel %vm380, %v388, %v390
    %v392 = vrot.slane %v69, 2
    %v393 = vsel %vm380, %v390, %v392
    %v394 = vrot.slane %v70, 2
    %v395 = vsel %vm380, %v392, %v394
    %v396 = vrot.slane %v71, 2
    %v397 = vsel %vm380, %v394, %v396
    %v398 = vrot.slane %v72, 2
    %v399 = vsel %vm380, %v396, %v398
    %v400 = vsel %vm107, %v383, 0
    %v402 = vsel %vm107, %v385, 0
    %v404 = vsel %vm107, %v387, 0
    %v406 = vsel %vm107, %v389, 0
    %v408 = vsel %vm107, %v391, 0
    %v410 = vsel %vm107, %v393, 0
    %v412 = vsel %vm107, %v395, 0
    %v414 = vsel %vm107, %v397, 0
    %v416 = vsel %vm107, %v399, 0
    %v418 = vsel %vm107, %v398, 0
    %420 = vmatprep.subr.mxu0 0.0
    %421 = vmatpush1.msra.mxu0 %v379
    %422 = vmatprep.subr.mxu0 0.0
    %423 = vmatpush1.msra.mxu0 0.0
    %424 = vmatprep.subr.mxu0 0.0
    %425 = vmatpush1.msra.mxu0 0.0
    %426 = vmatprep.subr.mxu0 0.0
    %427 = vmatpush1.msra.mxu0 0.0
    %428 = vmatprep.subr.mxu0 0.0
    %429 = vmatpush1.msra.mxu0 0.0
    %430 = vmatprep.subr.mxu0 0.0
    %431 = vmatpush1.msra.mxu0 0.0
    %432 = vmatprep.subr.mxu0 0.0
    %433 = vmatpush1.msra.mxu0 0.0
    %434 = vmatprep.subr.mxu0 0.0
    %435 = vmatpush1.msra.mxu0 0.0
    %436 = vmatprep.subr.mxu0 0.0
    %437 = vmatpush1.msra.mxu0 0.0
    %438 = vmatprep.subr.mxu0 0.0
    %439 = vmatpush1.msra.mxu0 0.0
    %440 = vmatprep.subr.mxu0 0.0
    %441 = vmatpush1.msra.mxu0 0.0
    %442 = vmatprep.subr.mxu0 0.0
    %443 = vmatpush1.msra.mxu0 0.0
    %444 = vmatprep.subr.mxu0 0.0
    %445 = vmatpush1.msra.mxu0 0.0
    %446 = vmatprep.subr.mxu0 0.0
    %447 = vmatpush1.msra.mxu0 0.0
    %448 = vmatprep.subr.mxu0 0.0
    %449 = vmatpush1.msra.mxu0 0.0
    %450 = vmatprep.subr.mxu0 0.0
    %451 = vmatpush1.msra.mxu0 0.0
    %452 = vmatprep.subr.mxu0 0.0
    %453 = vmatpush1.msra.mxu0 0.0
    %454 = vmatprep.subr.mxu0 0.0
    %455 = vmatpush1.msra.mxu0 0.0
    %456 = vmatprep.subr.mxu0 0.0
    %457 = vmatpush1.msra.mxu0 0.0
    %458 = vmatprep.subr.mxu0 0.0
    %459 = vmatpush1.msra.mxu0 0.0
    %460 = vmatprep.subr.mxu0 0.0
    %461 = vmatpush1.msra.mxu0 0.0
    %462 = vmatprep.subr.mxu0 0.0
    %463 = vmatpush1.msra.mxu0 0.0
    %464 = vmatprep.subr.mxu0 0.0
    %465 = vmatpush1.msra.mxu0 0.0
    %466 = vmatprep.subr.mxu0 0.0
    %467 = vmatpush1.msra.mxu0 0.0
    %468 = vmatprep.subr.mxu0 0.0
    %469 = vmatpush1.msra.mxu0 0.0
    %470 = vmatprep.subr.mxu0 0.0
    %471 = vmatpush1.msra.mxu0 0.0
    %472 = vmatprep.subr.mxu0 0.0
    %473 = vmatpush1.msra.mxu0 0.0
    %474 = vmatprep.subr.mxu0 0.0
    %475 = vmatpush1.msra.mxu0 0.0
    %476 = vmatprep.subr.mxu0 0.0
    %477 = vmatpush1.msra.mxu0 0.0
    %478 = vmatprep.subr.mxu0 0.0
    %479 = vmatpush1.msra.mxu0 0.0
    %480 = vmatprep.subr.mxu0 0.0
    %481 = vmatpush1.msra.mxu0 0.0
    %482 = vmatprep.subr.mxu0 0.0
    %483 = vmatpush1.msra.mxu0 0.0
    %484 = vmatprep.mubr.f32.mxu0 0.0
    %485 = vmatmul.mubr.f32.gmra.mrb[0].mxu0 %v400
    %v486 = vpop.f32.mrb[0].mxu0
    %v487 = vadd.f32 0.0, %v486
    %v488 = vpop.f32.mrb[0].mxu0
    %489 = vmatprep.mubr.f32.mxu0 0.0
    %490 = vmatmul.mubr.f32.gmra.mrb[0].mxu0 %v402
    %v491 = vpop.f32.mrb[0].mxu0
    %v492 = vadd.f32 0.0, %v491
    %v493 = vpop.f32.mrb[0].mxu0
    %494 = vmatprep.mubr.f32.mxu0 0.0
    %495 = vmatmul.mubr.f32.gmra.mrb[0].mxu0 %v404
    %v496 = vpop.f32.mrb[0].mxu0
    %v497 = vadd.f32 0.0, %v496
    %v498 = vpop.f32.mrb[0].mxu0
    %499 = vmatprep.mubr.f32.mxu0 0.0
    %500 = vmatmul.mubr.f32.gmra.mrb[0].mxu0 %v406
    %v501 = vpop.f32.mrb[0].mxu0
    %v502 = vadd.f32 0.0, %v501
    %v503 = vpop.f32.mrb[0].mxu0
    %504 = vmatprep.mubr.f32.mxu0 0.0
    %505 = vmatmul.mubr.f32.gmra.mrb[0].mxu0 %v408
    %v506 = vpop.f32.mrb[0].mxu0
    %v507 = vadd.f32 0.0, %v506
    %v508 = vpop.f32.mrb[0].mxu0
    %509 = vmatprep.mubr.f32.mxu0 0.0
    %510 = vmatmul.mubr.f32.gmra.mrb[0].mxu0 %v410
    %v511 = vpop.f32.mrb[0].mxu0
    %v512 = vadd.f32 0.0, %v511
    %v513 = vpop.f32.mrb[0].mxu0
    %514 = vmatprep.mubr.f32.mxu0 0.0
    %515 = vmatmul.mubr.f32.gmra.mrb[0].mxu0 %v412
    %v516 = vpop.f32.mrb[0].mxu0
    %v517 = vadd.f32 0.0, %v516
    %v518 = vpop.f32.mrb[0].mxu0
    %519 = vmatprep.mubr.f32.mxu0 0.0
    %520 = vmatmul.mubr.f32.gmra.mrb[0].mxu0 %v414
    %v521 = vpop.f32.mrb[0].mxu0
    %v522 = vadd.f32 0.0, %v521
    %v523 = vpop.f32.mrb[0].mxu0
    %524 = vmatprep.mubr.f32.mxu0 0.0
    %525 = vmatmul.mubr.f32.gmra.mrb[0].mxu0 %v416
    %v526 = vpop.f32.mrb[0].mxu0
    %v527 = vadd.f32 0.0, %v526
    %v528 = vpop.f32.mrb[0].mxu0
    %529 = vmatprep.mubr.f32.mxu0 0.0
    %530 = vmatmul.mubr.f32.gmra.mrb[0].mxu0 %v418
    %v531 = vpop.f32.mrb[0].mxu0
    %v532 = vadd.f32 0.0, %v531
    %v533 = vpop.f32.mrb[0].mxu0
    %534 = vdwg.mxu0
    %v535 = vadd.f32 %v330, %v487
    %v536 = vadd.f32 %v335, %v492
    %v537 = vadd.f32 %v340, %v497
    %v538 = vadd.f32 %v345, %v502
    %v539 = vadd.f32 %v350, %v507
    %v540 = vadd.f32 %v355, %v512
    %v541 = vadd.f32 %v360, %v517
    %v542 = vadd.f32 %v365, %v522
    %v543 = vadd.f32 %v370, %v527
    %v544 = vadd.f32 %v375, %v532
    %s545 = scalar_lea.vmem %s1, 24
    %v546 = vld [vmem:[%s545] sm:$0xff]
    %vm547 = vcmask 1044480
    %v548 = vrot.slane %v63, 3
    %v549 = vrot.slane %v64, 3
    %v550 = vsel %vm547, %v548, %v549
    %v551 = vrot.slane %v65, 3
    %v552 = vsel %vm547, %v549, %v551
    %v553 = vrot.slane %v66, 3
    %v554 = vsel %vm547, %v551, %v553
    %v555 = vrot.slane %v67, 3
    %v556 = vsel %vm547, %v553, %v555
    %v557 = vrot.slane %v68, 3
    %v558 = vsel %vm547, %v555, %v557
    %v559 = vrot.slane %v69, 3
    %v560 = vsel %vm547, %v557, %v559
    %v561 = vrot.slane %v70, 3
    %v562 = vsel %vm547, %v559, %v561
    %v563 = vrot.slane %v71, 3
    %v564 = vsel %vm547, %v561, %v563
    %v565 = vrot.slane %v72, 3
    %v566 = vsel %vm547, %v563, %v565
    %v567 = vsel %vm107, %v550, 0
    %v569 = vsel %vm107, %v552, 0
    %v571 = vsel %vm107, %v554, 0
    %v573 = vsel %vm107, %v556, 0
    %v575 = vsel %vm107, %v558, 0
    %v577 = vsel %vm107, %v560, 0
    %v579 = vsel %vm107, %v562, 0
    %v581 = vsel %vm107, %v564, 0
    %v583 = vsel %vm107, %v566, 0
    %v585 = vsel %vm107, %v565, 0
    %587 = vmatprep.subr.mxu0 0.0
    %588 = vmatpush1.msra.mxu0 %v546
    %589 = vmatprep.subr.mxu0 0.0
    %590 = vmatpush1.msra.mxu0 0.0
    %591 = vmatprep.subr.mxu0 0.0
    %592 = vmatpush1.msra.mxu0 0.0
    %593 = vmatprep.subr.mxu0 0.0
    %594 = vmatpush1.msra.mxu0 0.0
    %595 = vmatprep.subr.mxu0 0.0
    %596 = vmatpush1.msra.mxu0 0.0
    %597 = vmatprep.subr.mxu0 0.0
    %598 = vmatpush1.msra.mxu0 0.0
    %599 = vmatprep.subr.mxu0 0.0
    %600 = vmatpush1.msra.mxu0 0.0
    %601 = vmatprep.subr.mxu0 0.0
    %602 = vmatpush1.msra.mxu0 0.0
    %603 = vmatprep.subr.mxu0 0.0
    %604 = vmatpush1.msra.mxu0 0.0
    %605 = vmatprep.subr.mxu0 0.0
    %606 = vmatpush1.msra.mxu0 0.0
    %607 = vmatprep.subr.mxu0 0.0
    %608 = vmatpush1.msra.mxu0 0.0
    %609 = vmatprep.subr.mxu0 0.0
    %610 = vmatpush1.msra.mxu0 0.0
    %611 = vmatprep.subr.mxu0 0.0
    %612 = vmatpush1.msra.mxu0 0.0
    %613 = vmatprep.subr.mxu0 0.0
    %614 = vmatpush1.msra.mxu0 0.0
    %615 = vmatprep.subr.mxu0 0.0
    %616 = vmatpush1.msra.mxu0 0.0
    %617 = vmatprep.subr.mxu0 0.0
    %618 = vmatpush1.msra.mxu0 0.0
    %619 = vmatprep.subr.mxu0 0.0
    %620 = vmatpush1.msra.mxu0 0.0
    %621 = vmatprep.subr.mxu0 0.0
    %622 = vmatpush1.msra.mxu0 0.0
    %623 = vmatprep.subr.mxu0 0.0
    %624 = vmatpush1.msra.mxu0 0.0
    %625 = vmatprep.subr.mxu0 0.0
    %626 = vmatpush1.msra.mxu0 0.0
    %627 = vmatprep.subr.mxu0 0.0
    %628 = vmatpush1.msra.mxu0 0.0
    %629 = vmatprep.subr.mxu0 0.0
    %630 = vmatpush1.msra.mxu0 0.0
    %631 = vmatprep.subr.mxu0 0.0
    %632 = vmatpush1.msra.mxu0 0.0
    %633 = vmatprep.subr.mxu0 0.0
    %634 = vmatpush1.msra.mxu0 0.0
    %635 = vmatprep.subr.mxu0 0.0
    %636 = vmatpush1.msra.mxu0 0.0
    %637 = vmatprep.subr.mxu0 0.0
    %638 = vmatpush1.msra.mxu0 0.0
    %639 = vmatprep.subr.mxu0 0.0
    %640 = vmatpush1.msra.mxu0 0.0
    %641 = vmatprep.subr.mxu0 0.0
    %642 = vmatpush1.msra.mxu0 0.0
    %643 = vmatprep.subr.mxu0 0.0
    %644 = vmatpush1.msra.mxu0 0.0
    %645 = vmatprep.subr.mxu0 0.0
    %646 = vmatpush1.msra.mxu0 0.0
    %647 = vmatprep.subr.mxu0 0.0
    %648 = vmatpush1.msra.mxu0 0.0
    %649 = vmatprep.subr.mxu0 0.0
    %650 = vmatpush1.msra.mxu0 0.0
    %651 = vmatprep.mubr.f32.mxu0 0.0
    %652 = vmatmul.mubr.f32.gmra.mrb[0].mxu0 %v567
    %v653 = vpop.f32.mrb[0].mxu0
    %v654 = vadd.f32 0.0, %v653
    %v655 = vpop.f32.mrb[0].mxu0
    %656 = vmatprep.mubr.f32.mxu0 0.0
    %657 = vmatmul.mubr.f32.gmra.mrb[0].mxu0 %v569
    %v658 = vpop.f32.mrb[0].mxu0
    %v659 = vadd.f32 0.0, %v658
    %v660 = vpop.f32.mrb[0].mxu0
    %661 = vmatprep.mubr.f32.mxu0 0.0
    %662 = vmatmul.mubr.f32.gmra.mrb[0].mxu0 %v571
    %v663 = vpop.f32.mrb[0].mxu0
    %v664 = vadd.f32 0.0, %v663
    %v665 = vpop.f32.mrb[0].mxu0
    %666 = vmatprep.mubr.f32.mxu0 0.0
    %667 = vmatmul.mubr.f32.gmra.mrb[0].mxu0 %v573
    %v668 = vpop.f32.mrb[0].mxu0
    %v669 = vadd.f32 0.0, %v668
    %v670 = vpop.f32.mrb[0].mxu0
    %671 = vmatprep.mubr.f32.mxu0 0.0
    %672 = vmatmul.mubr.f32.gmra.mrb[0].mxu0 %v575
    %v673 = vpop.f32.mrb[0].mxu0
    %v674 = vadd.f32 0.0, %v673
    %v675 = vpop.f32.mrb[0].mxu0
    %676 = vmatprep.mubr.f32.mxu0 0.0
    %677 = vmatmul.mubr.f32.gmra.mrb[0].mxu0 %v577
    %v678 = vpop.f32.mrb[0].mxu0
    %v679 = vadd.f32 0.0, %v678
    %v680 = vpop.f32.mrb[0].mxu0
    %681 = vmatprep.mubr.f32.mxu0 0.0
    %682 = vmatmul.mubr.f32.gmra.mrb[0].mxu0 %v579
    %v683 = vpop.f32.mrb[0].mxu0
    %v684 = vadd.f32 0.0, %v683
    %v685 = vpop.f32.mrb[0].mxu0
    %686 = vmatprep.mubr.f32.mxu0 0.0
    %687 = vmatmul.mubr.f32.gmra.mrb[0].mxu0 %v581
    %v688 = vpop.f32.mrb[0].mxu0
    %v689 = vadd.f32 0.0, %v688
    %v690 = vpop.f32.mrb[0].mxu0
    %691 = vmatprep.mubr.f32.mxu0 0.0
    %692 = vmatmul.mubr.f32.gmra.mrb[0].mxu0 %v583
    %v693 = vpop.f32.mrb[0].mxu0
    %v694 = vadd.f32 0.0, %v693
    %v695 = vpop.f32.mrb[0].mxu0
    %696 = vmatprep.mubr.f32.mxu0 0.0
    %697 = vmatmul.mubr.f32.gmra.mrb[0].mxu0 %v585
    %v698 = vpop.f32.mrb[0].mxu0
    %v699 = vadd.f32 0.0, %v698
    %v700 = vpop.f32.mrb[0].mxu0
    %701 = vdwg.mxu0
    %v702 = vadd.f32 %v535, %v654
    %v703 = vadd.f32 %v536, %v659
    %v704 = vadd.f32 %v537, %v664
    %v705 = vadd.f32 %v538, %v669
    %v706 = vadd.f32 %v539, %v674
    %v707 = vadd.f32 %v540, %v679
    %v708 = vadd.f32 %v541, %v684
    %v709 = vadd.f32 %v542, %v689
    %v710 = vadd.f32 %v543, %v694
    %v711 = vadd.f32 %v544, %v699
    %s712 = scalar_lea.vmem %s1, 32
    %v713 = vld [vmem:[%s712] sm:$0xff]
    %vm714 = vcmask 1043456
    %v715 = vrot.slane %v63, 4
    %v716 = vrot.slane %v64, 4
    %v717 = vsel %vm714, %v715, %v716
    %v718 = vrot.slane %v65, 4
    %v719 = vsel %vm714, %v716, %v718
    %v720 = vrot.slane %v66, 4
    %v721 = vsel %vm714, %v718, %v720
    %v722 = vrot.slane %v67, 4
    %v723 = vsel %vm714, %v720, %v722
    %v724 = vrot.slane %v68, 4
    %v725 = vsel %vm714, %v722, %v724
    %v726 = vrot.slane %v69, 4
    %v727 = vsel %vm714, %v724, %v726
    %v728 = vrot.slane %v70, 4
    %v729 = vsel %vm714, %v726, %v728
    %v730 = vrot.slane %v71, 4
    %v731 = vsel %vm714, %v728, %v730
    %v732 = vrot.slane %v72, 4
    %v733 = vsel %vm714, %v730, %v732
    %v734 = vsel %vm107, %v717, 0
    %v736 = vsel %vm107, %v719, 0
    %v738 = vsel %vm107, %v721, 0
    %v740 = vsel %vm107, %v723, 0
    %v742 = vsel %vm107, %v725, 0
    %v744 = vsel %vm107, %v727, 0
    %v746 = vsel %vm107, %v729, 0
    %v748 = vsel %vm107, %v731, 0
    %v750 = vsel %vm107, %v733, 0
    %v752 = vsel %vm107, %v732, 0
    %754 = vmatprep.subr.mxu0 0.0
    %755 = vmatpush1.msra.mxu0 %v713
    %756 = vmatprep.subr.mxu0 0.0
    %757 = vmatpush1.msra.mxu0 0.0
    %758 = vmatprep.subr.mxu0 0.0
    %759 = vmatpush1.msra.mxu0 0.0
    %760 = vmatprep.subr.mxu0 0.0
    %761 = vmatpush1.msra.mxu0 0.0
    %762 = vmatprep.subr.mxu0 0.0
    %763 = vmatpush1.msra.mxu0 0.0
    %764 = vmatprep.subr.mxu0 0.0
    %765 = vmatpush1.msra.mxu0 0.0
    %766 = vmatprep.subr.mxu0 0.0
    %767 = vmatpush1.msra.mxu0 0.0
    %768 = vmatprep.subr.mxu0 0.0
    %769 = vmatpush1.msra.mxu0 0.0
    %770 = vmatprep.subr.mxu0 0.0
    %771 = vmatpush1.msra.mxu0 0.0
    %772 = vmatprep.subr.mxu0 0.0
    %773 = vmatpush1.msra.mxu0 0.0
    %774 = vmatprep.subr.mxu0 0.0
    %775 = vmatpush1.msra.mxu0 0.0
    %776 = vmatprep.subr.mxu0 0.0
    %777 = vmatpush1.msra.mxu0 0.0
    %778 = vmatprep.subr.mxu0 0.0
    %779 = vmatpush1.msra.mxu0 0.0
    %780 = vmatprep.subr.mxu0 0.0
    %781 = vmatpush1.msra.mxu0 0.0
    %782 = vmatprep.subr.mxu0 0.0
    %783 = vmatpush1.msra.mxu0 0.0
    %784 = vmatprep.subr.mxu0 0.0
    %785 = vmatpush1.msra.mxu0 0.0
    %786 = vmatprep.subr.mxu0 0.0
    %787 = vmatpush1.msra.mxu0 0.0
    %788 = vmatprep.subr.mxu0 0.0
    %789 = vmatpush1.msra.mxu0 0.0
    %790 = vmatprep.subr.mxu0 0.0
    %791 = vmatpush1.msra.mxu0 0.0
    %792 = vmatprep.subr.mxu0 0.0
    %793 = vmatpush1.msra.mxu0 0.0
    %794 = vmatprep.subr.mxu0 0.0
    %795 = vmatpush1.msra.mxu0 0.0
    %796 = vmatprep.subr.mxu0 0.0
    %797 = vmatpush1.msra.mxu0 0.0
    %798 = vmatprep.subr.mxu0 0.0
    %799 = vmatpush1.msra.mxu0 0.0
    %800 = vmatprep.subr.mxu0 0.0
    %801 = vmatpush1.msra.mxu0 0.0
    %802 = vmatprep.subr.mxu0 0.0
    %803 = vmatpush1.msra.mxu0 0.0
    %804 = vmatprep.subr.mxu0 0.0
    %805 = vmatpush1.msra.mxu0 0.0
    %806 = vmatprep.subr.mxu0 0.0
    %807 = vmatpush1.msra.mxu0 0.0
    %808 = vmatprep.subr.mxu0 0.0
    %809 = vmatpush1.msra.mxu0 0.0
    %810 = vmatprep.subr.mxu0 0.0
    %811 = vmatpush1.msra.mxu0 0.0
    %812 = vmatprep.subr.mxu0 0.0
    %813 = vmatpush1.msra.mxu0 0.0
    %814 = vmatprep.subr.mxu0 0.0
    %815 = vmatpush1.msra.mxu0 0.0
    %816 = vmatprep.subr.mxu0 0.0
    %817 = vmatpush1.msra.mxu0 0.0
    %818 = vmatprep.mubr.f32.mxu0 0.0
    %819 = vmatmul.mubr.f32.gmra.mrb[0].mxu0 %v734
    %v820 = vpop.f32.mrb[0].mxu0
    %v821 = vadd.f32 0.0, %v820
    %v822 = vpop.f32.mrb[0].mxu0
    %823 = vmatprep.mubr.f32.mxu0 0.0
    %824 = vmatmul.mubr.f32.gmra.mrb[0].mxu0 %v736
    %v825 = vpop.f32.mrb[0].mxu0
    %v826 = vadd.f32 0.0, %v825
    %v827 = vpop.f32.mrb[0].mxu0
    %828 = vmatprep.mubr.f32.mxu0 0.0
    %829 = vmatmul.mubr.f32.gmra.mrb[0].mxu0 %v738
    %v830 = vpop.f32.mrb[0].mxu0
    %v831 = vadd.f32 0.0, %v830
    %v832 = vpop.f32.mrb[0].mxu0
    %833 = vmatprep.mubr.f32.mxu0 0.0
    %834 = vmatmul.mubr.f32.gmra.mrb[0].mxu0 %v740
    %v835 = vpop.f32.mrb[0].mxu0
    %v836 = vadd.f32 0.0, %v835
    %v837 = vpop.f32.mrb[0].mxu0
    %838 = vmatprep.mubr.f32.mxu0 0.0
    %839 = vmatmul.mubr.f32.gmra.mrb[0].mxu0 %v742
    %v840 = vpop.f32.mrb[0].mxu0
    %v841 = vadd.f32 0.0, %v840
    %v842 = vpop.f32.mrb[0].mxu0
    %843 = vmatprep.mubr.f32.mxu0 0.0
    %844 = vmatmul.mubr.f32.gmra.mrb[0].mxu0 %v744
    %v845 = vpop.f32.mrb[0].mxu0
    %v846 = vadd.f32 0.0, %v845
    %v847 = vpop.f32.mrb[0].mxu0
    %848 = vmatprep.mubr.f32.mxu0 0.0
    %849 = vmatmul.mubr.f32.gmra.mrb[0].mxu0 %v746
    %v850 = vpop.f32.mrb[0].mxu0
    %v851 = vadd.f32 0.0, %v850
    %v852 = vpop.f32.mrb[0].mxu0
    %853 = vmatprep.mubr.f32.mxu0 0.0
    %854 = vmatmul.mubr.f32.gmra.mrb[0].mxu0 %v748
    %v855 = vpop.f32.mrb[0].mxu0
    %v856 = vadd.f32 0.0, %v855
    %v857 = vpop.f32.mrb[0].mxu0
    %858 = vmatprep.mubr.f32.mxu0 0.0
    %859 = vmatmul.mubr.f32.gmra.mrb[0].mxu0 %v750
    %v860 = vpop.f32.mrb[0].mxu0
    %v861 = vadd.f32 0.0, %v860
    %v862 = vpop.f32.mrb[0].mxu0
    %863 = vmatprep.mubr.f32.mxu0 0.0
    %864 = vmatmul.mubr.f32.gmra.mrb[0].mxu0 %v752
    %v865 = vpop.f32.mrb[0].mxu0
    %v866 = vadd.f32 0.0, %v865
    %v867 = vpop.f32.mrb[0].mxu0
    %868 = vdwg.mxu0
    %v869 = vadd.f32 %v702, %v821
    %v870 = vadd.f32 %v703, %v826
    %v871 = vadd.f32 %v704, %v831
    %v872 = vadd.f32 %v705, %v836
    %v873 = vadd.f32 %v706, %v841
    %v874 = vadd.f32 %v707, %v846
    %v875 = vadd.f32 %v708, %v851
    %v876 = vadd.f32 %v709, %v856
    %v877 = vadd.f32 %v710, %v861
    %v878 = vadd.f32 %v711, %v866
    %s879 = scalar_lea.vmem %s1, 40
    %v880 = vld [vmem:[%s879] sm:$0xff]
    %vm881 = vcmask 1042432
    %v882 = vrot.slane %v63, 5
    %v883 = vrot.slane %v64, 5
    %v884 = vsel %vm881, %v882, %v883
    %v885 = vrot.slane %v65, 5
    %v886 = vsel %vm881, %v883, %v885
    %v887 = vrot.slane %v66, 5
    %v888 = vsel %vm881, %v885, %v887
    %v889 = vrot.slane %v67, 5
    %v890 = vsel %vm881, %v887, %v889
    %v891 = vrot.slane %v68, 5
    %v892 = vsel %vm881, %v889, %v891
    %v893 = vrot.slane %v69, 5
    %v894 = vsel %vm881, %v891, %v893
    %v895 = vrot.slane %v70, 5
    %v896 = vsel %vm881, %v893, %v895
    %v897 = vrot.slane %v71, 5
    %v898 = vsel %vm881, %v895, %v897
    %v899 = vrot.slane %v72, 5
    %v900 = vsel %vm881, %v897, %v899
    %v901 = vsel %vm107, %v884, 0
    %v903 = vsel %vm107, %v886, 0
    %v905 = vsel %vm107, %v888, 0
    %v907 = vsel %vm107, %v890, 0
    %v909 = vsel %vm107, %v892, 0
    %v911 = vsel %vm107, %v894, 0
    %v913 = vsel %vm107, %v896, 0
    %v915 = vsel %vm107, %v898, 0
    %v917 = vsel %vm107, %v900, 0
    %v919 = vsel %vm107, %v899, 0
    %921 = vmatprep.subr.mxu0 0.0
    %922 = vmatpush1.msra.mxu0 %v880
    %923 = vmatprep.subr.mxu0 0.0
    %924 = vmatpush1.msra.mxu0 0.0
    %925 = vmatprep.subr.mxu0 0.0
    %926 = vmatpush1.msra.mxu0 0.0
    %927 = vmatprep.subr.mxu0 0.0
    %928 = vmatpush1.msra.mxu0 0.0
    %929 = vmatprep.subr.mxu0 0.0
    %930 = vmatpush1.msra.mxu0 0.0
    %931 = vmatprep.subr.mxu0 0.0
    %932 = vmatpush1.msra.mxu0 0.0
    %933 = vmatprep.subr.mxu0 0.0
    %934 = vmatpush1.msra.mxu0 0.0
    %935 = vmatprep.subr.mxu0 0.0
    %936 = vmatpush1.msra.mxu0 0.0
    %937 = vmatprep.subr.mxu0 0.0
    %938 = vmatpush1.msra.mxu0 0.0
    %939 = vmatprep.subr.mxu0 0.0
    %940 = vmatpush1.msra.mxu0 0.0
    %941 = vmatprep.subr.mxu0 0.0
    %942 = vmatpush1.msra.mxu0 0.0
    %943 = vmatprep.subr.mxu0 0.0
    %944 = vmatpush1.msra.mxu0 0.0
    %945 = vmatprep.subr.mxu0 0.0
    %946 = vmatpush1.msra.mxu0 0.0
    %947 = vmatprep.subr.mxu0 0.0
    %948 = vmatpush1.msra.mxu0 0.0
    %949 = vmatprep.subr.mxu0 0.0
    %950 = vmatpush1.msra.mxu0 0.0
    %951 = vmatprep.subr.mxu0 0.0
    %952 = vmatpush1.msra.mxu0 0.0
    %953 = vmatprep.subr.mxu0 0.0
    %954 = vmatpush1.msra.mxu0 0.0
    %955 = vmatprep.subr.mxu0 0.0
    %956 = vmatpush1.msra.mxu0 0.0
    %957 = vmatprep.subr.mxu0 0.0
    %958 = vmatpush1.msra.mxu0 0.0
    %959 = vmatprep.subr.mxu0 0.0
    %960 = vmatpush1.msra.mxu0 0.0
    %961 = vmatprep.subr.mxu0 0.0
    %962 = vmatpush1.msra.mxu0 0.0
    %963 = vmatprep.subr.mxu0 0.0
    %964 = vmatpush1.msra.mxu0 0.0
    %965 = vmatprep.subr.mxu0 0.0
    %966 = vmatpush1.msra.mxu0 0.0
    %967 = vmatprep.subr.mxu0 0.0
    %968 = vmatpush1.msra.mxu0 0.0
    %969 = vmatprep.subr.mxu0 0.0
    %970 = vmatpush1.msra.mxu0 0.0
    %971 = vmatprep.subr.mxu0 0.0
    %972 = vmatpush1.msra.mxu0 0.0
    %973 = vmatprep.subr.mxu0 0.0
    %974 = vmatpush1.msra.mxu0 0.0
    %975 = vmatprep.subr.mxu0 0.0
    %976 = vmatpush1.msra.mxu0 0.0
    %977 = vmatprep.subr.mxu0 0.0
    %978 = vmatpush1.msra.mxu0 0.0
    %979 = vmatprep.subr.mxu0 0.0
    %980 = vmatpush1.msra.mxu0 0.0
    %981 = vmatprep.subr.mxu0 0.0
    %982 = vmatpush1.msra.mxu0 0.0
    %983 = vmatprep.subr.mxu0 0.0
    %984 = vmatpush1.msra.mxu0 0.0
    %985 = vmatprep.mubr.f32.mxu0 0.0
    %986 = vmatmul.mubr.f32.gmra.mrb[0].mxu0 %v901
    %v987 = vpop.f32.mrb[0].mxu0
    %v988 = vadd.f32 0.0, %v987
    %v989 = vpop.f32.mrb[0].mxu0
    %990 = vmatprep.mubr.f32.mxu0 0.0
    %991 = vmatmul.mubr.f32.gmra.mrb[0].mxu0 %v903
    %v992 = vpop.f32.mrb[0].mxu0
    %v993 = vadd.f32 0.0, %v992
    %v994 = vpop.f32.mrb[0].mxu0
    %995 = vmatprep.mubr.f32.mxu0 0.0
    %996 = vmatmul.mubr.f32.gmra.mrb[0].mxu0 %v905
    %v997 = vpop.f32.mrb[0].mxu0
    %v998 = vadd.f32 0.0, %v997
    %v999 = vpop.f32.mrb[0].mxu0
    %1000 = vmatprep.mubr.f32.mxu0 0.0
    %1001 = vmatmul.mubr.f32.gmra.mrb[0].mxu0 %v907
    %v1002 = vpop.f32.mrb[0].mxu0
    %v1003 = vadd.f32 0.0, %v1002
    %v1004 = vpop.f32.mrb[0].mxu0
    %1005 = vmatprep.mubr.f32.mxu0 0.0
    %1006 = vmatmul.mubr.f32.gmra.mrb[0].mxu0 %v909
    %v1007 = vpop.f32.mrb[0].mxu0
    %v1008 = vadd.f32 0.0, %v1007
    %v1009 = vpop.f32.mrb[0].mxu0
    %1010 = vmatprep.mubr.f32.mxu0 0.0
    %1011 = vmatmul.mubr.f32.gmra.mrb[0].mxu0 %v911
    %v1012 = vpop.f32.mrb[0].mxu0
    %v1013 = vadd.f32 0.0, %v1012
    %v1014 = vpop.f32.mrb[0].mxu0
    %1015 = vmatprep.mubr.f32.mxu0 0.0
    %1016 = vmatmul.mubr.f32.gmra.mrb[0].mxu0 %v913
    %v1017 = vpop.f32.mrb[0].mxu0
    %v1018 = vadd.f32 0.0, %v1017
    %v1019 = vpop.f32.mrb[0].mxu0
    %1020 = vmatprep.mubr.f32.mxu0 0.0
    %1021 = vmatmul.mubr.f32.gmra.mrb[0].mxu0 %v915
    %v1022 = vpop.f32.mrb[0].mxu0
    %v1023 = vadd.f32 0.0, %v1022
    %v1024 = vpop.f32.mrb[0].mxu0
    %1025 = vmatprep.mubr.f32.mxu0 0.0
    %1026 = vmatmul.mubr.f32.gmra.mrb[0].mxu0 %v917
    %v1027 = vpop.f32.mrb[0].mxu0
    %v1028 = vadd.f32 0.0, %v1027
    %v1029 = vpop.f32.mrb[0].mxu0
    %1030 = vmatprep.mubr.f32.mxu0 0.0
    %1031 = vmatmul.mubr.f32.gmra.mrb[0].mxu0 %v919
    %v1032 = vpop.f32.mrb[0].mxu0
    %v1033 = vadd.f32 0.0, %v1032
    %v1034 = vpop.f32.mrb[0].mxu0
    %1035 = vdwg.mxu0
    %v1036 = vadd.f32 %v869, %v988
    %v1037 = vadd.f32 %v870, %v993
    %v1038 = vadd.f32 %v871, %v998
    %v1039 = vadd.f32 %v872, %v1003
    %v1040 = vadd.f32 %v873, %v1008
    %v1041 = vadd.f32 %v874, %v1013
    %v1042 = vadd.f32 %v875, %v1018
    %v1043 = vadd.f32 %v876, %v1023
    %v1044 = vadd.f32 %v877, %v1028
    %v1045 = vadd.f32 %v878, %v1033
    %s1046 = scalar_lea.vmem %s1, 48
    %v1047 = vld [vmem:[%s1046] sm:$0xff]
    %vm1048 = vcmask 1041408
    %v1049 = vrot.slane %v63, 6
    %v1050 = vrot.slane %v64, 6
    %v1051 = vsel %vm1048, %v1049, %v1050
    %v1052 = vrot.slane %v65, 6
    %v1053 = vsel %vm1048, %v1050, %v1052
    %v1054 = vrot.slane %v66, 6
    %v1055 = vsel %vm1048, %v1052, %v1054
    %v1056 = vrot.slane %v67, 6
    %v1057 = vsel %vm1048, %v1054, %v1056
    %v1058 = vrot.slane %v68, 6
    %v1059 = vsel %vm1048, %v1056, %v1058
    %v1060 = vrot.slane %v69, 6
    %v1061 = vsel %vm1048, %v1058, %v1060
    %v1062 = vrot.slane %v70, 6
    %v1063 = vsel %vm1048, %v1060, %v1062
    %v1064 = vrot.slane %v71, 6
    %v1065 = vsel %vm1048, %v1062, %v1064
    %v1066 = vrot.slane %v72, 6
    %v1067 = vsel %vm1048, %v1064, %v1066
    %v1068 = vsel %vm107, %v1051, 0
    %v1070 = vsel %vm107, %v1053, 0
    %v1072 = vsel %vm107, %v1055, 0
    %v1074 = vsel %vm107, %v1057, 0
    %v1076 = vsel %vm107, %v1059, 0
    %v1078 = vsel %vm107, %v1061, 0
    %v1080 = vsel %vm107, %v1063, 0
    %v1082 = vsel %vm107, %v1065, 0
    %v1084 = vsel %vm107, %v1067, 0
    %v1086 = vsel %vm107, %v1066, 0
    %1088 = vmatprep.subr.mxu0 0.0
    %1089 = vmatpush1.msra.mxu0 %v1047
    %1090 = vmatprep.subr.mxu0 0.0
    %1091 = vmatpush1.msra.mxu0 0.0
    %1092 = vmatprep.subr.mxu0 0.0
    %1093 = vmatpush1.msra.mxu0 0.0
    %1094 = vmatprep.subr.mxu0 0.0
    %1095 = vmatpush1.msra.mxu0 0.0
    %1096 = vmatprep.subr.mxu0 0.0
    %1097 = vmatpush1.msra.mxu0 0.0
    %1098 = vmatprep.subr.mxu0 0.0
    %1099 = vmatpush1.msra.mxu0 0.0
    %1100 = vmatprep.subr.mxu0 0.0
    %1101 = vmatpush1.msra.mxu0 0.0
    %1102 = vmatprep.subr.mxu0 0.0
    %1103 = vmatpush1.msra.mxu0 0.0
    %1104 = vmatprep.subr.mxu0 0.0
    %1105 = vmatpush1.msra.mxu0 0.0
    %1106 = vmatprep.subr.mxu0 0.0
    %1107 = vmatpush1.msra.mxu0 0.0
    %1108 = vmatprep.subr.mxu0 0.0
    %1109 = vmatpush1.msra.mxu0 0.0
    %1110 = vmatprep.subr.mxu0 0.0
    %1111 = vmatpush1.msra.mxu0 0.0
    %1112 = vmatprep.subr.mxu0 0.0
    %1113 = vmatpush1.msra.mxu0 0.0
    %1114 = vmatprep.subr.mxu0 0.0
    %1115 = vmatpush1.msra.mxu0 0.0
    %1116 = vmatprep.subr.mxu0 0.0
    %1117 = vmatpush1.msra.mxu0 0.0
    %1118 = vmatprep.subr.mxu0 0.0
    %1119 = vmatpush1.msra.mxu0 0.0
    %1120 = vmatprep.subr.mxu0 0.0
    %1121 = vmatpush1.msra.mxu0 0.0
    %1122 = vmatprep.subr.mxu0 0.0
    %1123 = vmatpush1.msra.mxu0 0.0
    %1124 = vmatprep.subr.mxu0 0.0
    %1125 = vmatpush1.msra.mxu0 0.0
    %1126 = vmatprep.subr.mxu0 0.0
    %1127 = vmatpush1.msra.mxu0 0.0
    %1128 = vmatprep.subr.mxu0 0.0
    %1129 = vmatpush1.msra.mxu0 0.0
    %1130 = vmatprep.subr.mxu0 0.0
    %1131 = vmatpush1.msra.mxu0 0.0
    %1132 = vmatprep.subr.mxu0 0.0
    %1133 = vmatpush1.msra.mxu0 0.0
    %1134 = vmatprep.subr.mxu0 0.0
    %1135 = vmatpush1.msra.mxu0 0.0
    %1136 = vmatprep.subr.mxu0 0.0
    %1137 = vmatpush1.msra.mxu0 0.0
    %1138 = vmatprep.subr.mxu0 0.0
    %1139 = vmatpush1.msra.mxu0 0.0
    %1140 = vmatprep.subr.mxu0 0.0
    %1141 = vmatpush1.msra.mxu0 0.0
    %1142 = vmatprep.subr.mxu0 0.0
    %1143 = vmatpush1.msra.mxu0 0.0
    %1144 = vmatprep.subr.mxu0 0.0
    %1145 = vmatpush1.msra.mxu0 0.0
    %1146 = vmatprep.subr.mxu0 0.0
    %1147 = vmatpush1.msra.mxu0 0.0
    %1148 = vmatprep.subr.mxu0 0.0
    %1149 = vmatpush1.msra.mxu0 0.0
    %1150 = vmatprep.subr.mxu0 0.0
    %1151 = vmatpush1.msra.mxu0 0.0
    %1152 = vmatprep.mubr.f32.mxu0 0.0
    %1153 = vmatmul.mubr.f32.gmra.mrb[0].mxu0 %v1068
    %v1154 = vpop.f32.mrb[0].mxu0
    %v1155 = vadd.f32 0.0, %v1154
    %v1156 = vpop.f32.mrb[0].mxu0
    %1157 = vmatprep.mubr.f32.mxu0 0.0
    %1158 = vmatmul.mubr.f32.gmra.mrb[0].mxu0 %v1070
    %v1159 = vpop.f32.mrb[0].mxu0
    %v1160 = vadd.f32 0.0, %v1159
    %v1161 = vpop.f32.mrb[0].mxu0
    %1162 = vmatprep.mubr.f32.mxu0 0.0
    %1163 = vmatmul.mubr.f32.gmra.mrb[0].mxu0 %v1072
    %v1164 = vpop.f32.mrb[0].mxu0
    %v1165 = vadd.f32 0.0, %v1164
    %v1166 = vpop.f32.mrb[0].mxu0
    %1167 = vmatprep.mubr.f32.mxu0 0.0
    %1168 = vmatmul.mubr.f32.gmra.mrb[0].mxu0 %v1074
    %v1169 = vpop.f32.mrb[0].mxu0
    %v1170 = vadd.f32 0.0, %v1169
    %v1171 = vpop.f32.mrb[0].mxu0
    %1172 = vmatprep.mubr.f32.mxu0 0.0
    %1173 = vmatmul.mubr.f32.gmra.mrb[0].mxu0 %v1076
    %v1174 = vpop.f32.mrb[0].mxu0
    %v1175 = vadd.f32 0.0, %v1174
    %v1176 = vpop.f32.mrb[0].mxu0
    %1177 = vmatprep.mubr.f32.mxu0 0.0
    %1178 = vmatmul.mubr.f32.gmra.mrb[0].mxu0 %v1078
    %v1179 = vpop.f32.mrb[0].mxu0
    %v1180 = vadd.f32 0.0, %v1179
    %v1181 = vpop.f32.mrb[0].mxu0
    %1182 = vmatprep.mubr.f32.mxu0 0.0
    %1183 = vmatmul.mubr.f32.gmra.mrb[0].mxu0 %v1080
    %v1184 = vpop.f32.mrb[0].mxu0
    %v1185 = vadd.f32 0.0, %v1184
    %v1186 = vpop.f32.mrb[0].mxu0
    %1187 = vmatprep.mubr.f32.mxu0 0.0
    %1188 = vmatmul.mubr.f32.gmra.mrb[0].mxu0 %v1082
    %v1189 = vpop.f32.mrb[0].mxu0
    %v1190 = vadd.f32 0.0, %v1189
    %v1191 = vpop.f32.mrb[0].mxu0
    %1192 = vmatprep.mubr.f32.mxu0 0.0
    %1193 = vmatmul.mubr.f32.gmra.mrb[0].mxu0 %v1084
    %v1194 = vpop.f32.mrb[0].mxu0
    %v1195 = vadd.f32 0.0, %v1194
    %v1196 = vpop.f32.mrb[0].mxu0
    %1197 = vmatprep.mubr.f32.mxu0 0.0
    %1198 = vmatmul.mubr.f32.gmra.mrb[0].mxu0 %v1086
    %v1199 = vpop.f32.mrb[0].mxu0
    %v1200 = vadd.f32 0.0, %v1199
    %v1201 = vpop.f32.mrb[0].mxu0
    %1202 = vdwg.mxu0
    %v1203 = vadd.f32 %v1036, %v1155
    %v1204 = vadd.f32 %v1037, %v1160
    %v1205 = vadd.f32 %v1038, %v1165
    %v1206 = vadd.f32 %v1039, %v1170
    %v1207 = vadd.f32 %v1040, %v1175
    %v1208 = vadd.f32 %v1041, %v1180
    %v1209 = vadd.f32 %v1042, %v1185
    %v1210 = vadd.f32 %v1043, %v1190
    %v1211 = vadd.f32 %v1044, %v1195
    %v1212 = vadd.f32 %v1045, %v1200
    %s1213 = scalar_lea.vmem %s1, 56
    %v1214 = vld [vmem:[%s1213] sm:$0xff]
    %vm1215 = vcmask 1040384
    %v1216 = vrot.slane %v63, 7
    %v1217 = vrot.slane %v64, 7
    %v1218 = vsel %vm1215, %v1216, %v1217
    %v1219 = vrot.slane %v65, 7
    %v1220 = vsel %vm1215, %v1217, %v1219
    %v1221 = vrot.slane %v66, 7
    %v1222 = vsel %vm1215, %v1219, %v1221
    %v1223 = vrot.slane %v67, 7
    %v1224 = vsel %vm1215, %v1221, %v1223
    %v1225 = vrot.slane %v68, 7
    %v1226 = vsel %vm1215, %v1223, %v1225
    %v1227 = vrot.slane %v69, 7
    %v1228 = vsel %vm1215, %v1225, %v1227
    %v1229 = vrot.slane %v70, 7
    %v1230 = vsel %vm1215, %v1227, %v1229
    %v1231 = vrot.slane %v71, 7
    %v1232 = vsel %vm1215, %v1229, %v1231
    %v1233 = vrot.slane %v72, 7
    %v1234 = vsel %vm1215, %v1231, %v1233
    %v1235 = vsel %vm107, %v1218, 0
    %v1237 = vsel %vm107, %v1220, 0
    %v1239 = vsel %vm107, %v1222, 0
    %v1241 = vsel %vm107, %v1224, 0
    %v1243 = vsel %vm107, %v1226, 0
    %v1245 = vsel %vm107, %v1228, 0
    %v1247 = vsel %vm107, %v1230, 0
    %v1249 = vsel %vm107, %v1232, 0
    %v1251 = vsel %vm107, %v1234, 0
    %v1253 = vsel %vm107, %v1233, 0
    %1255 = vmatprep.subr.mxu0 0.0
    %1256 = vmatpush1.msra.mxu0 %v1214
    %1257 = vmatprep.subr.mxu0 0.0
    %1258 = vmatpush1.msra.mxu0 0.0
    %1259 = vmatprep.subr.mxu0 0.0
    %1260 = vmatpush1.msra.mxu0 0.0
    %1261 = vmatprep.subr.mxu0 0.0
    %1262 = vmatpush1.msra.mxu0 0.0
    %1263 = vmatprep.subr.mxu0 0.0
    %1264 = vmatpush1.msra.mxu0 0.0
    %1265 = vmatprep.subr.mxu0 0.0
    %1266 = vmatpush1.msra.mxu0 0.0
    %1267 = vmatprep.subr.mxu0 0.0
    %1268 = vmatpush1.msra.mxu0 0.0
    %1269 = vmatprep.subr.mxu0 0.0
    %1270 = vmatpush1.msra.mxu0 0.0
    %1271 = vmatprep.subr.mxu0 0.0
    %1272 = vmatpush1.msra.mxu0 0.0
    %1273 = vmatprep.subr.mxu0 0.0
    %1274 = vmatpush1.msra.mxu0 0.0
    %1275 = vmatprep.subr.mxu0 0.0
    %1276 = vmatpush1.msra.mxu0 0.0
    %1277 = vmatprep.subr.mxu0 0.0
    %1278 = vmatpush1.msra.mxu0 0.0
    %1279 = vmatprep.subr.mxu0 0.0
    %1280 = vmatpush1.msra.mxu0 0.0
    %1281 = vmatprep.subr.mxu0 0.0
    %1282 = vmatpush1.msra.mxu0 0.0
    %1283 = vmatprep.subr.mxu0 0.0
    %1284 = vmatpush1.msra.mxu0 0.0
    %1285 = vmatprep.subr.mxu0 0.0
    %1286 = vmatpush1.msra.mxu0 0.0
    %1287 = vmatprep.subr.mxu0 0.0
    %1288 = vmatpush1.msra.mxu0 0.0
    %1289 = vmatprep.subr.mxu0 0.0
    %1290 = vmatpush1.msra.mxu0 0.0
    %1291 = vmatprep.subr.mxu0 0.0
    %1292 = vmatpush1.msra.mxu0 0.0
    %1293 = vmatprep.subr.mxu0 0.0
    %1294 = vmatpush1.msra.mxu0 0.0
    %1295 = vmatprep.subr.mxu0 0.0
    %1296 = vmatpush1.msra.mxu0 0.0
    %1297 = vmatprep.subr.mxu0 0.0
    %1298 = vmatpush1.msra.mxu0 0.0
    %1299 = vmatprep.subr.mxu0 0.0
    %1300 = vmatpush1.msra.mxu0 0.0
    %1301 = vmatprep.subr.mxu0 0.0
    %1302 = vmatpush1.msra.mxu0 0.0
    %1303 = vmatprep.subr.mxu0 0.0
    %1304 = vmatpush1.msra.mxu0 0.0
    %1305 = vmatprep.subr.mxu0 0.0
    %1306 = vmatpush1.msra.mxu0 0.0
    %1307 = vmatprep.subr.mxu0 0.0
    %1308 = vmatpush1.msra.mxu0 0.0
    %1309 = vmatprep.subr.mxu0 0.0
    %1310 = vmatpush1.msra.mxu0 0.0
    %1311 = vmatprep.subr.mxu0 0.0
    %1312 = vmatpush1.msra.mxu0 0.0
    %1313 = vmatprep.subr.mxu0 0.0
    %1314 = vmatpush1.msra.mxu0 0.0
    %1315 = vmatprep.subr.mxu0 0.0
    %1316 = vmatpush1.msra.mxu0 0.0
    %1317 = vmatprep.subr.mxu0 0.0
    %1318 = vmatpush1.msra.mxu0 0.0
    %1319 = vmatprep.mubr.f32.mxu0 0.0
    %1320 = vmatmul.mubr.f32.gmra.mrb[0].mxu0 %v1235
    %v1321 = vpop.f32.mrb[0].mxu0
    %v1322 = vadd.f32 0.0, %v1321
    %v1323 = vpop.f32.mrb[0].mxu0
    %1324 = vmatprep.mubr.f32.mxu0 0.0
    %1325 = vmatmul.mubr.f32.gmra.mrb[0].mxu0 %v1237
    %v1326 = vpop.f32.mrb[0].mxu0
    %v1327 = vadd.f32 0.0, %v1326
    %v1328 = vpop.f32.mrb[0].mxu0
    %1329 = vmatprep.mubr.f32.mxu0 0.0
    %1330 = vmatmul.mubr.f32.gmra.mrb[0].mxu0 %v1239
    %v1331 = vpop.f32.mrb[0].mxu0
    %v1332 = vadd.f32 0.0, %v1331
    %v1333 = vpop.f32.mrb[0].mxu0
    %1334 = vmatprep.mubr.f32.mxu0 0.0
    %1335 = vmatmul.mubr.f32.gmra.mrb[0].mxu0 %v1241
    %v1336 = vpop.f32.mrb[0].mxu0
    %v1337 = vadd.f32 0.0, %v1336
    %v1338 = vpop.f32.mrb[0].mxu0
    %1339 = vmatprep.mubr.f32.mxu0 0.0
    %1340 = vmatmul.mubr.f32.gmra.mrb[0].mxu0 %v1243
    %v1341 = vpop.f32.mrb[0].mxu0
    %v1342 = vadd.f32 0.0, %v1341
    %v1343 = vpop.f32.mrb[0].mxu0
    %1344 = vmatprep.mubr.f32.mxu0 0.0
    %1345 = vmatmul.mubr.f32.gmra.mrb[0].mxu0 %v1245
    %v1346 = vpop.f32.mrb[0].mxu0
    %v1347 = vadd.f32 0.0, %v1346
    %v1348 = vpop.f32.mrb[0].mxu0
    %1349 = vmatprep.mubr.f32.mxu0 0.0
    %1350 = vmatmul.mubr.f32.gmra.mrb[0].mxu0 %v1247
    %v1351 = vpop.f32.mrb[0].mxu0
    %v1352 = vadd.f32 0.0, %v1351
    %v1353 = vpop.f32.mrb[0].mxu0
    %1354 = vmatprep.mubr.f32.mxu0 0.0
    %1355 = vmatmul.mubr.f32.gmra.mrb[0].mxu0 %v1249
    %v1356 = vpop.f32.mrb[0].mxu0
    %v1357 = vadd.f32 0.0, %v1356
    %v1358 = vpop.f32.mrb[0].mxu0
    %1359 = vmatprep.mubr.f32.mxu0 0.0
    %1360 = vmatmul.mubr.f32.gmra.mrb[0].mxu0 %v1251
    %v1361 = vpop.f32.mrb[0].mxu0
    %v1362 = vadd.f32 0.0, %v1361
    %v1363 = vpop.f32.mrb[0].mxu0
    %1364 = vmatprep.mubr.f32.mxu0 0.0
    %1365 = vmatmul.mubr.f32.gmra.mrb[0].mxu0 %v1253
    %v1366 = vpop.f32.mrb[0].mxu0
    %v1367 = vadd.f32 0.0, %v1366
    %v1368 = vpop.f32.mrb[0].mxu0
    %1369 = vdwg.mxu0
    %v1370 = vadd.f32 %v1203, %v1322
    %v1371 = vadd.f32 %v1204, %v1327
    %v1372 = vadd.f32 %v1205, %v1332
    %v1373 = vadd.f32 %v1206, %v1337
    %v1374 = vadd.f32 %v1207, %v1342
    %v1375 = vadd.f32 %v1208, %v1347
    %v1376 = vadd.f32 %v1209, %v1352
    %v1377 = vadd.f32 %v1210, %v1357
    %v1378 = vadd.f32 %v1211, %v1362
    %v1379 = vadd.f32 %v1212, %v1367
    %v1381 = vlaneseq
    %v1382 = vshrl.u32 %v1381, 7
    %v1383 = vsub.s32 0, %v1382
    %v1384 = vrot.slane %v73, %v1383
    %v1386 = vadd.f32 %v1370, %v1384
    %v1387 = vadd.f32 %v1371, %v1384
    %v1388 = vadd.f32 %v1372, %v1384
    %v1389 = vadd.f32 %v1373, %v1384
    %v1390 = vadd.f32 %v1374, %v1384
    %v1391 = vadd.f32 %v1375, %v1384
    %v1392 = vadd.f32 %v1376, %v1384
    %v1393 = vadd.f32 %v1377, %v1384
    %v1394 = vadd.f32 %v1378, %v1384
    %v1395 = vadd.f32 %v1379, %v1384
    %v1396 = vmax.f32 %v1386, 0.0
    %v1397 = vmax.f32 %v1387, 0.0
    %v1398 = vmax.f32 %v1388, 0.0
    %v1399 = vmax.f32 %v1389, 0.0
    %v1400 = vmax.f32 %v1390, 0.0
    %v1401 = vmax.f32 %v1391, 0.0
    %v1402 = vmax.f32 %v1392, 0.0
    %v1403 = vmax.f32 %v1393, 0.0
    %v1404 = vmax.f32 %v1394, 0.0
    %v1405 = vmax.f32 %v1395, 0.0
    %v1406 = vlaneseq
    %v1407 = vshrl.u32 %v1406, 7
    %v1408 = vadd.s32 %v1407, 8
    %v1409 = vadd.s32 %v1407, 16
    %v1410 = vadd.s32 %v1407, 24
    %v1411 = vadd.s32 %v1407, 32
    %v1412 = vadd.s32 %v1407, 40
    %v1413 = vadd.s32 %v1407, 48
    %v1414 = vadd.s32 %v1407, 56
    %v1415 = vadd.s32 %v1407, 64
    %v1416 = vadd.s32 %v1407, 72
    %v1417 = vadd.s32 %v1407, 80
    %v1418 = vadd.s32 %v1407, 88
    %v1419 = vadd.s32 %v1407, 96
    %v1420 = vadd.s32 %v1407, 104
    %v1421 = vlaneseq
    %v1422 = vand.u32 %v1421, 127
    %vm1423 = vcmp.ge.s32.totalorder %v1407, 56
    %vm1424 = vcmp.ge.s32.totalorder %v1408, 56
    %vm1425 = vcmp.ge.s32.totalorder %v1409, 56
    %vm1426 = vcmp.ge.s32.totalorder %v1410, 56
    %vm1427 = vcmp.ge.s32.totalorder %v1411, 56
    %vm1428 = vcmp.ge.s32.totalorder %v1412, 56
    %vm1429 = vcmp.ge.s32.totalorder %v1413, 56
    %vm1430 = vcmp.ge.s32.totalorder %v1414, 56
    %vm1431 = vcmp.ge.s32.totalorder %v1415, 56
    %vm1432 = vcmp.ge.s32.totalorder %v1416, 56
    %vm1433 = vcmp.ge.s32.totalorder %v1417, 56
    %vm1434 = vcmp.ge.s32.totalorder %v1418, 56
    %vm1435 = vcmp.ge.s32.totalorder %v1419, 56
    %vm1436 = vcmp.ge.s32.totalorder %v1420, 56
    %v1437 = vsub.s32 %v1407, 56
    %v1438 = vsub.s32 %v1408, 56
    %v1439 = vsub.s32 %v1409, 56
    %v1440 = vsub.s32 %v1410, 56
    %v1441 = vsub.s32 %v1411, 56
    %v1442 = vsub.s32 %v1412, 56
    %v1443 = vsub.s32 %v1413, 56
    %v1444 = vsub.s32 %v1415, 56
    %v1445 = vsub.s32 %v1416, 56
    %v1446 = vsub.s32 %v1417, 56
    %v1447 = vsub.s32 %v1418, 56
    %v1448 = vsub.s32 %v1419, 56
    %v1449 = vsub.s32 %v1420, 56
    %v1450 = vsel %vm1423, %v1437, %v1407
    %v1451 = vsel %vm1424, %v1438, %v1408
    %v1452 = vsel %vm1425, %v1439, %v1409
    %v1453 = vsel %vm1426, %v1440, %v1410
    %v1454 = vsel %vm1427, %v1441, %v1411
    %v1455 = vsel %vm1428, %v1442, %v1412
    %v1456 = vsel %vm1429, %v1443, %v1413
    %v1457 = vsel %vm1430, %v1407, %v1414
    %v1458 = vsel %vm1431, %v1444, %v1415
    %v1459 = vsel %vm1432, %v1445, %v1416
    %v1460 = vsel %vm1433, %v1446, %v1417
    %v1461 = vsel %vm1434, %v1447, %v1418
    %v1462 = vsel %vm1435, %v1448, %v1419
    %v1463 = vsel %vm1436, %v1449, %v1420
    %v1464 = vsub.s32 %v1450, 4
    %v1465 = vsub.s32 %v1451, 4
    %v1466 = vsub.s32 %v1452, 4
    %v1467 = vsub.s32 %v1453, 4
    %v1468 = vsub.s32 %v1454, 4
    %v1469 = vsub.s32 %v1455, 4
    %v1470 = vsub.s32 %v1456, 4
    %v1471 = vsub.s32 %v1457, 4
    %v1472 = vsub.s32 %v1458, 4
    %v1473 = vsub.s32 %v1459, 4
    %v1474 = vsub.s32 %v1460, 4
    %v1475 = vsub.s32 %v1461, 4
    %v1476 = vsub.s32 %v1462, 4
    %v1477 = vsub.s32 %v1463, 4
    %v1478 = vmul.u32 %v1464, 2
    %v1479 = vmul.u32 %v1465, 2
    %v1480 = vmul.u32 %v1466, 2
    %v1481 = vmul.u32 %v1467, 2
    %v1482 = vmul.u32 %v1468, 2
    %v1483 = vmul.u32 %v1469, 2
    %v1484 = vmul.u32 %v1470, 2
    %v1485 = vmul.u32 %v1471, 2
    %v1486 = vmul.u32 %v1472, 2
    %v1487 = vmul.u32 %v1473, 2
    %v1488 = vmul.u32 %v1474, 2
    %v1489 = vmul.u32 %v1475, 2
    %v1490 = vmul.u32 %v1476, 2
    %v1491 = vmul.u32 %v1477, 2
    %v1492 = vsub.s32 %v1478, 1
    %v1493 = vsub.s32 %v1479, 1
    %v1494 = vsub.s32 %v1480, 1
    %v1495 = vsub.s32 %v1481, 1
    %v1496 = vsub.s32 %v1482, 1
    %v1497 = vsub.s32 %v1483, 1
    %v1498 = vsub.s32 %v1484, 1
    %v1499 = vsub.s32 %v1485, 1
    %v1500 = vsub.s32 %v1486, 1
    %v1501 = vsub.s32 %v1487, 1
    %v1502 = vsub.s32 %v1488, 1
    %v1503 = vsub.s32 %v1489, 1
    %v1504 = vsub.s32 %v1490, 1
    %v1505 = vsub.s32 %v1491, 1
    %v1506 = vsel %vm1423, %v1478, %v1492
    %v1507 = vsel %vm1424, %v1479, %v1493
    %v1508 = vsel %vm1425, %v1480, %v1494
    %v1509 = vsel %vm1426, %v1481, %v1495
    %v1510 = vsel %vm1427, %v1482, %v1496
    %v1511 = vsel %vm1428, %v1483, %v1497
    %v1512 = vsel %vm1429, %v1484, %v1498
    %v1513 = vsel %vm1430, %v1485, %v1499
    %v1514 = vsel %vm1431, %v1486, %v1500
    %v1515 = vsel %vm1432, %v1487, %v1501
    %v1516 = vsel %vm1433, %v1488, %v1502
    %v1517 = vsel %vm1434, %v1489, %v1503
    %v1518 = vsel %vm1435, %v1490, %v1504
    %v1519 = vsel %vm1436, %v1491, %v1505
    %vm1520 = vcmp.ge.s32.totalorder %v1464, 0
    %vm1521 = vcmp.ge.s32.totalorder %v1465, 0
    %vm1522 = vcmp.ge.s32.totalorder %v1466, 0
    %vm1523 = vcmp.ge.s32.totalorder %v1467, 0
    %vm1524 = vcmp.ge.s32.totalorder %v1468, 0
    %vm1525 = vcmp.ge.s32.totalorder %v1469, 0
    %vm1526 = vcmp.ge.s32.totalorder %v1470, 0
    %vm1527 = vcmp.ge.s32.totalorder %v1471, 0
    %vm1528 = vcmp.ge.s32.totalorder %v1472, 0
    %vm1529 = vcmp.ge.s32.totalorder %v1473, 0
    %vm1530 = vcmp.ge.s32.totalorder %v1474, 0
    %vm1531 = vcmp.ge.s32.totalorder %v1475, 0
    %vm1532 = vcmp.ge.s32.totalorder %v1476, 0
    %vm1533 = vcmp.ge.s32.totalorder %v1477, 0
    %vm1534 = vcmp.lt.s32.totalorder %v1464, 17
    %vm1535 = vcmp.lt.s32.totalorder %v1465, 17
    %vm1536 = vcmp.lt.s32.totalorder %v1466, 17
    %vm1537 = vcmp.lt.s32.totalorder %v1467, 17
    %vm1538 = vcmp.lt.s32.totalorder %v1468, 17
    %vm1539 = vcmp.lt.s32.totalorder %v1469, 17
    %vm1540 = vcmp.lt.s32.totalorder %v1470, 17
    %vm1541 = vcmp.lt.s32.totalorder %v1471, 17
    %vm1542 = vcmp.lt.s32.totalorder %v1472, 17
    %vm1543 = vcmp.lt.s32.totalorder %v1473, 17
    %vm1544 = vcmp.lt.s32.totalorder %v1474, 17
    %vm1545 = vcmp.lt.s32.totalorder %v1475, 17
    %vm1546 = vcmp.lt.s32.totalorder %v1476, 17
    %vm1547 = vcmp.lt.s32.totalorder %v1477, 17
    %vm1548 = vmand %vm1520, %vm1534
    %vm1549 = vmand %vm1521, %vm1535
    %vm1550 = vmand %vm1522, %vm1536
    %vm1551 = vmand %vm1523, %vm1537
    %vm1552 = vmand %vm1524, %vm1538
    %vm1553 = vmand %vm1525, %vm1539
    %vm1554 = vmand %vm1526, %vm1540
    %vm1555 = vmand %vm1527, %vm1541
    %vm1556 = vmand %vm1528, %vm1542
    %vm1557 = vmand %vm1529, %vm1543
    %vm1558 = vmand %vm1530, %vm1544
    %vm1559 = vmand %vm1531, %vm1545
    %vm1560 = vmand %vm1532, %vm1546
    %vm1561 = vmand %vm1533, %vm1547
    %vm1562 = vcmp.ge.s32.totalorder %v1506, 0
    %vm1563 = vcmp.ge.s32.totalorder %v1507, 0
    %vm1564 = vcmp.ge.s32.totalorder %v1508, 0
    %vm1565 = vcmp.ge.s32.totalorder %v1509, 0
    %vm1566 = vcmp.ge.s32.totalorder %v1510, 0
    %vm1567 = vcmp.ge.s32.totalorder %v1511, 0
    %vm1568 = vcmp.ge.s32.totalorder %v1512, 0
    %vm1569 = vcmp.ge.s32.totalorder %v1513, 0
    %vm1570 = vcmp.ge.s32.totalorder %v1514, 0
    %vm1571 = vcmp.ge.s32.totalorder %v1515, 0
    %vm1572 = vcmp.ge.s32.totalorder %v1516, 0
    %vm1573 = vcmp.ge.s32.totalorder %v1517, 0
    %vm1574 = vcmp.ge.s32.totalorder %v1518, 0
    %vm1575 = vcmp.ge.s32.totalorder %v1519, 0
    %vm1576 = vmand %vm1548, %vm1562
    %vm1577 = vmand %vm1549, %vm1563
    %vm1578 = vmand %vm1550, %vm1564
    %vm1579 = vmand %vm1551, %vm1565
    %vm1580 = vmand %vm1552, %vm1566
    %vm1581 = vmand %vm1553, %vm1567
    %vm1582 = vmand %vm1554, %vm1568
    %vm1583 = vmand %vm1555, %vm1569
    %vm1584 = vmand %vm1556, %vm1570
    %vm1585 = vmand %vm1557, %vm1571
    %vm1586 = vmand %vm1558, %vm1572
    %vm1587 = vmand %vm1559, %vm1573
    %vm1588 = vmand %vm1560, %vm1574
    %vm1589 = vmand %vm1561, %vm1575
    %vm1590 = vcmp.lt.s32.totalorder %v1506, 33
    %vm1591 = vcmp.lt.s32.totalorder %v1507, 33
    %vm1592 = vcmp.lt.s32.totalorder %v1508, 33
    %vm1593 = vcmp.lt.s32.totalorder %v1509, 33
    %vm1594 = vcmp.lt.s32.totalorder %v1510, 33
    %vm1595 = vcmp.lt.s32.totalorder %v1511, 33
    %vm1596 = vcmp.lt.s32.totalorder %v1512, 33
    %vm1597 = vcmp.lt.s32.totalorder %v1513, 33
    %vm1598 = vcmp.lt.s32.totalorder %v1514, 33
    %vm1599 = vcmp.lt.s32.totalorder %v1515, 33
    %vm1600 = vcmp.lt.s32.totalorder %v1516, 33
    %vm1601 = vcmp.lt.s32.totalorder %v1517, 33
    %vm1602 = vcmp.lt.s32.totalorder %v1518, 33
    %vm1603 = vcmp.lt.s32.totalorder %v1519, 33
    %vm1604 = vmand %vm1576, %vm1590
    %vm1605 = vmand %vm1577, %vm1591
    %vm1606 = vmand %vm1578, %vm1592
    %vm1607 = vmand %vm1579, %vm1593
    %vm1608 = vmand %vm1580, %vm1594
    %vm1609 = vmand %vm1581, %vm1595
    %vm1610 = vmand %vm1582, %vm1596
    %vm1611 = vmand %vm1583, %vm1597
    %vm1612 = vmand %vm1584, %vm1598
    %vm1613 = vmand %vm1585, %vm1599
    %vm1614 = vmand %vm1586, %vm1600
    %vm1615 = vmand %vm1587, %vm1601
    %vm1616 = vmand %vm1588, %vm1602
    %vm1617 = vmand %vm1589, %vm1603
    %vm1618 = vcmp.eq.s32.totalorder %v1422, %v1506
    %vm1619 = vcmp.eq.s32.totalorder %v1422, %v1507
    %vm1620 = vcmp.eq.s32.totalorder %v1422, %v1508
    %vm1621 = vcmp.eq.s32.totalorder %v1422, %v1509
    %vm1622 = vcmp.eq.s32.totalorder %v1422, %v1510
    %vm1623 = vcmp.eq.s32.totalorder %v1422, %v1511
    %vm1624 = vcmp.eq.s32.totalorder %v1422, %v1512
    %vm1625 = vcmp.eq.s32.totalorder %v1422, %v1513
    %vm1626 = vcmp.eq.s32.totalorder %v1422, %v1514
    %vm1627 = vcmp.eq.s32.totalorder %v1422, %v1515
    %vm1628 = vcmp.eq.s32.totalorder %v1422, %v1516
    %vm1629 = vcmp.eq.s32.totalorder %v1422, %v1517
    %vm1630 = vcmp.eq.s32.totalorder %v1422, %v1518
    %vm1631 = vcmp.eq.s32.totalorder %v1422, %v1519
    %vm1632 = vmand %vm1604, %vm1618
    %vm1633 = vmand %vm1605, %vm1619
    %vm1634 = vmand %vm1606, %vm1620
    %vm1635 = vmand %vm1607, %vm1621
    %vm1636 = vmand %vm1608, %vm1622
    %vm1637 = vmand %vm1609, %vm1623
    %vm1638 = vmand %vm1610, %vm1624
    %vm1639 = vmand %vm1611, %vm1625
    %vm1640 = vmand %vm1612, %vm1626
    %vm1641 = vmand %vm1613, %vm1627
    %vm1642 = vmand %vm1614, %vm1628
    %vm1643 = vmand %vm1615, %vm1629
    %vm1644 = vmand %vm1616, %vm1630
    %vm1645 = vmand %vm1617, %vm1631
    %v1646 = vsub.s32 %v1450, 29
    %v1647 = vsub.s32 %v1451, 29
    %v1648 = vsub.s32 %v1452, 29
    %v1649 = vsub.s32 %v1453, 29
    %v1650 = vsub.s32 %v1454, 29
    %v1651 = vsub.s32 %v1455, 29
    %v1652 = vsub.s32 %v1456, 29
    %v1653 = vsub.s32 %v1457, 29
    %v1654 = vsub.s32 %v1458, 29
    %v1655 = vsub.s32 %v1459, 29
    %v1656 = vsub.s32 %v1460, 29
    %v1657 = vsub.s32 %v1461, 29
    %v1658 = vsub.s32 %v1462, 29
    %v1659 = vsub.s32 %v1463, 29
    %v1660 = vmul.u32 %v1646, 2
    %v1661 = vmul.u32 %v1647, 2
    %v1662 = vmul.u32 %v1648, 2
    %v1663 = vmul.u32 %v1649, 2
    %v1664 = vmul.u32 %v1650, 2
    %v1665 = vmul.u32 %v1651, 2
    %v1666 = vmul.u32 %v1652, 2
    %v1667 = vmul.u32 %v1653, 2
    %v1668 = vmul.u32 %v1654, 2
    %v1669 = vmul.u32 %v1655, 2
    %v1670 = vmul.u32 %v1656, 2
    %v1671 = vmul.u32 %v1657, 2
    %v1672 = vmul.u32 %v1658, 2
    %v1673 = vmul.u32 %v1659, 2
    %v1674 = vsub.s32 %v1660, 1
    %v1675 = vsub.s32 %v1661, 1
    %v1676 = vsub.s32 %v1662, 1
    %v1677 = vsub.s32 %v1663, 1
    %v1678 = vsub.s32 %v1664, 1
    %v1679 = vsub.s32 %v1665, 1
    %v1680 = vsub.s32 %v1666, 1
    %v1681 = vsub.s32 %v1667, 1
    %v1682 = vsub.s32 %v1668, 1
    %v1683 = vsub.s32 %v1669, 1
    %v1684 = vsub.s32 %v1670, 1
    %v1685 = vsub.s32 %v1671, 1
    %v1686 = vsub.s32 %v1672, 1
    %v1687 = vsub.s32 %v1673, 1
    %v1688 = vsel %vm1423, %v1660, %v1674
    %v1689 = vsel %vm1424, %v1661, %v1675
    %v1690 = vsel %vm1425, %v1662, %v1676
    %v1691 = vsel %vm1426, %v1663, %v1677
    %v1692 = vsel %vm1427, %v1664, %v1678
    %v1693 = vsel %vm1428, %v1665, %v1679
    %v1694 = vsel %vm1429, %v1666, %v1680
    %v1695 = vsel %vm1430, %v1667, %v1681
    %v1696 = vsel %vm1431, %v1668, %v1682
    %v1697 = vsel %vm1432, %v1669, %v1683
    %v1698 = vsel %vm1433, %v1670, %v1684
    %v1699 = vsel %vm1434, %v1671, %v1685
    %v1700 = vsel %vm1435, %v1672, %v1686
    %v1701 = vsel %vm1436, %v1673, %v1687
    %vm1702 = vcmp.ge.s32.totalorder %v1646, 0
    %vm1703 = vcmp.ge.s32.totalorder %v1647, 0
    %vm1704 = vcmp.ge.s32.totalorder %v1648, 0
    %vm1705 = vcmp.ge.s32.totalorder %v1649, 0
    %vm1706 = vcmp.ge.s32.totalorder %v1650, 0
    %vm1707 = vcmp.ge.s32.totalorder %v1651, 0
    %vm1708 = vcmp.ge.s32.totalorder %v1652, 0
    %vm1709 = vcmp.ge.s32.totalorder %v1653, 0
    %vm1710 = vcmp.ge.s32.totalorder %v1654, 0
    %vm1711 = vcmp.ge.s32.totalorder %v1655, 0
    %vm1712 = vcmp.ge.s32.totalorder %v1656, 0
    %vm1713 = vcmp.ge.s32.totalorder %v1657, 0
    %vm1714 = vcmp.ge.s32.totalorder %v1658, 0
    %vm1715 = vcmp.ge.s32.totalorder %v1659, 0
    %vm1716 = vcmp.lt.s32.totalorder %v1646, 17
    %vm1717 = vcmp.lt.s32.totalorder %v1647, 17
    %vm1718 = vcmp.lt.s32.totalorder %v1648, 17
    %vm1719 = vcmp.lt.s32.totalorder %v1649, 17
    %vm1720 = vcmp.lt.s32.totalorder %v1650, 17
    %vm1721 = vcmp.lt.s32.totalorder %v1651, 17
    %vm1722 = vcmp.lt.s32.totalorder %v1652, 17
    %vm1723 = vcmp.lt.s32.totalorder %v1653, 17
    %vm1724 = vcmp.lt.s32.totalorder %v1654, 17
    %vm1725 = vcmp.lt.s32.totalorder %v1655, 17
    %vm1726 = vcmp.lt.s32.totalorder %v1656, 17
    %vm1727 = vcmp.lt.s32.totalorder %v1657, 17
    %vm1728 = vcmp.lt.s32.totalorder %v1658, 17
    %vm1729 = vcmp.lt.s32.totalorder %v1659, 17
    %vm1730 = vmand %vm1702, %vm1716
    %vm1731 = vmand %vm1703, %vm1717
    %vm1732 = vmand %vm1704, %vm1718
    %vm1733 = vmand %vm1705, %vm1719
    %vm1734 = vmand %vm1706, %vm1720
    %vm1735 = vmand %vm1707, %vm1721
    %vm1736 = vmand %vm1708, %vm1722
    %vm1737 = vmand %vm1709, %vm1723
    %vm1738 = vmand %vm1710, %vm1724
    %vm1739 = vmand %vm1711, %vm1725
    %vm1740 = vmand %vm1712, %vm1726
    %vm1741 = vmand %vm1713, %vm1727
    %vm1742 = vmand %vm1714, %vm1728
    %vm1743 = vmand %vm1715, %vm1729
    %vm1744 = vcmp.ge.s32.totalorder %v1688, 0
    %vm1745 = vcmp.ge.s32.totalorder %v1689, 0
    %vm1746 = vcmp.ge.s32.totalorder %v1690, 0
    %vm1747 = vcmp.ge.s32.totalorder %v1691, 0
    %vm1748 = vcmp.ge.s32.totalorder %v1692, 0
    %vm1749 = vcmp.ge.s32.totalorder %v1693, 0
    %vm1750 = vcmp.ge.s32.totalorder %v1694, 0
    %vm1751 = vcmp.ge.s32.totalorder %v1695, 0
    %vm1752 = vcmp.ge.s32.totalorder %v1696, 0
    %vm1753 = vcmp.ge.s32.totalorder %v1697, 0
    %vm1754 = vcmp.ge.s32.totalorder %v1698, 0
    %vm1755 = vcmp.ge.s32.totalorder %v1699, 0
    %vm1756 = vcmp.ge.s32.totalorder %v1700, 0
    %vm1757 = vcmp.ge.s32.totalorder %v1701, 0
    %vm1758 = vmand %vm1730, %vm1744
    %vm1759 = vmand %vm1731, %vm1745
    %vm1760 = vmand %vm1732, %vm1746
    %vm1761 = vmand %vm1733, %vm1747
    %vm1762 = vmand %vm1734, %vm1748
    %vm1763 = vmand %vm1735, %vm1749
    %vm1764 = vmand %vm1736, %vm1750
    %vm1765 = vmand %vm1737, %vm1751
    %vm1766 = vmand %vm1738, %vm1752
    %vm1767 = vmand %vm1739, %vm1753
    %vm1768 = vmand %vm1740, %vm1754
    %vm1769 = vmand %vm1741, %vm1755
    %vm1770 = vmand %vm1742, %vm1756
    %vm1771 = vmand %vm1743, %vm1757
    %vm1772 = vcmp.lt.s32.totalorder %v1688, 33
    %vm1773 = vcmp.lt.s32.totalorder %v1689, 33
    %vm1774 = vcmp.lt.s32.totalorder %v1690, 33
    %vm1775 = vcmp.lt.s32.totalorder %v1691, 33
    %vm1776 = vcmp.lt.s32.totalorder %v1692, 33
    %vm1777 = vcmp.lt.s32.totalorder %v1693, 33
    %vm1778 = vcmp.lt.s32.totalorder %v1694, 33
    %vm1779 = vcmp.lt.s32.totalorder %v1695, 33
    %vm1780 = vcmp.lt.s32.totalorder %v1696, 33
    %vm1781 = vcmp.lt.s32.totalorder %v1697, 33
    %vm1782 = vcmp.lt.s32.totalorder %v1698, 33
    %vm1783 = vcmp.lt.s32.totalorder %v1699, 33
    %vm1784 = vcmp.lt.s32.totalorder %v1700, 33
    %vm1785 = vcmp.lt.s32.totalorder %v1701, 33
    %vm1786 = vmand %vm1758, %vm1772
    %vm1787 = vmand %vm1759, %vm1773
    %vm1788 = vmand %vm1760, %vm1774
    %vm1789 = vmand %vm1761, %vm1775
    %vm1790 = vmand %vm1762, %vm1776
    %vm1791 = vmand %vm1763, %vm1777
    %vm1792 = vmand %vm1764, %vm1778
    %vm1793 = vmand %vm1765, %vm1779
    %vm1794 = vmand %vm1766, %vm1780
    %vm1795 = vmand %vm1767, %vm1781
    %vm1796 = vmand %vm1768, %vm1782
    %vm1797 = vmand %vm1769, %vm1783
    %vm1798 = vmand %vm1770, %vm1784
    %vm1799 = vmand %vm1771, %vm1785
    %v1800 = vadd.s32 %v1688, 40
    %v1801 = vadd.s32 %v1689, 40
    %v1802 = vadd.s32 %v1690, 40
    %v1803 = vadd.s32 %v1691, 40
    %v1804 = vadd.s32 %v1692, 40
    %v1805 = vadd.s32 %v1693, 40
    %v1806 = vadd.s32 %v1694, 40
    %v1807 = vadd.s32 %v1695, 40
    %v1808 = vadd.s32 %v1696, 40
    %v1809 = vadd.s32 %v1697, 40
    %v1810 = vadd.s32 %v1698, 40
    %v1811 = vadd.s32 %v1699, 40
    %v1812 = vadd.s32 %v1700, 40
    %v1813 = vadd.s32 %v1701, 40
    %vm1814 = vcmp.eq.s32.totalorder %v1422, %v1800
    %vm1815 = vcmp.eq.s32.totalorder %v1422, %v1801
    %vm1816 = vcmp.eq.s32.totalorder %v1422, %v1802
    %vm1817 = vcmp.eq.s32.totalorder %v1422, %v1803
    %vm1818 = vcmp.eq.s32.totalorder %v1422, %v1804
    %vm1819 = vcmp.eq.s32.totalorder %v1422, %v1805
    %vm1820 = vcmp.eq.s32.totalorder %v1422, %v1806
    %vm1821 = vcmp.eq.s32.totalorder %v1422, %v1807
    %vm1822 = vcmp.eq.s32.totalorder %v1422, %v1808
    %vm1823 = vcmp.eq.s32.totalorder %v1422, %v1809
    %vm1824 = vcmp.eq.s32.totalorder %v1422, %v1810
    %vm1825 = vcmp.eq.s32.totalorder %v1422, %v1811
    %vm1826 = vcmp.eq.s32.totalorder %v1422, %v1812
    %vm1827 = vcmp.eq.s32.totalorder %v1422, %v1813
    %vm1828 = vmand %vm1786, %vm1814
    %vm1829 = vmand %vm1787, %vm1815
    %vm1830 = vmand %vm1788, %vm1816
    %vm1831 = vmand %vm1789, %vm1817
    %vm1832 = vmand %vm1790, %vm1818
    %vm1833 = vmand %vm1791, %vm1819
    %vm1834 = vmand %vm1792, %vm1820
    %vm1835 = vmand %vm1793, %vm1821
    %vm1836 = vmand %vm1794, %vm1822
    %vm1837 = vmand %vm1795, %vm1823
    %vm1838 = vmand %vm1796, %vm1824
    %vm1839 = vmand %vm1797, %vm1825
    %vm1840 = vmand %vm1798, %vm1826
    %vm1841 = vmand %vm1799, %vm1827
    %vm1842 = vmor %vm1632, %vm1828
    %vm1843 = vmor %vm1633, %vm1829
    %vm1844 = vmor %vm1634, %vm1830
    %vm1845 = vmor %vm1635, %vm1831
    %vm1846 = vmor %vm1636, %vm1832
    %vm1847 = vmor %vm1637, %vm1833
    %vm1848 = vmor %vm1638, %vm1834
    %vm1849 = vmor %vm1639, %vm1835
    %vm1850 = vmor %vm1640, %vm1836
    %vm1851 = vmor %vm1641, %vm1837
    %vm1852 = vmor %vm1642, %vm1838
    %vm1853 = vmor %vm1643, %vm1839
    %vm1854 = vmor %vm1644, %vm1840
    %vm1855 = vmor %vm1645, %vm1841
    %v1856 = vsel %vm1842, 1, 0
    %v1857 = vsel %vm1843, 1, 0
    %v1858 = vsel %vm1844, 1, 0
    %v1859 = vsel %vm1845, 1, 0
    %v1860 = vsel %vm1846, 1, 0
    %v1861 = vsel %vm1847, 1, 0
    %v1862 = vsel %vm1848, 1, 0
    %v1863 = vsel %vm1849, 1, 0
    %v1864 = vsel %vm1850, 1, 0
    %v1865 = vsel %vm1851, 1, 0
    %v1866 = vsel %vm1852, 1, 0
    %v1867 = vsel %vm1853, 1, 0
    %v1868 = vsel %vm1854, 1, 0
    %v1869 = vsel %vm1855, 1, 0
    %v1870 = vcvt.s32.f32 %v1856
    %v1871 = vcvt.s32.f32 %v1857
    %v1872 = vcvt.s32.f32 %v1858
    %v1873 = vcvt.s32.f32 %v1859
    %v1874 = vcvt.s32.f32 %v1860
    %v1875 = vcvt.s32.f32 %v1861
    %v1876 = vcvt.s32.f32 %v1862
    %v1877 = vcvt.s32.f32 %v1863
    %v1878 = vcvt.s32.f32 %v1864
    %v1879 = vcvt.s32.f32 %v1865
    %v1880 = vcvt.s32.f32 %v1866
    %v1881 = vcvt.s32.f32 %v1867
    %v1882 = vcvt.s32.f32 %v1868
    %v1883 = vcvt.s32.f32 %v1869
    %vm1884 = vcmask 596992
    %v1886 = vsel %vm1884, %v1870, 0
    %v1889 = vsel %vm1884, %v1871, 0
    %v1892 = vsel %vm1884, %v1872, 0
    %v1895 = vsel %vm1884, %v1873, 0
    %v1898 = vsel %vm1884, %v1874, 0
    %v1901 = vsel %vm1884, %v1875, 0
    %v1904 = vsel %vm1884, %v1876, 0
    %v1907 = vsel %vm1884, %v1877, 0
    %v1910 = vsel %vm1884, %v1878, 0
    %v1913 = vsel %vm1884, %v1879, 0
    %v1916 = vsel %vm1884, %v1880, 0
    %v1919 = vsel %vm1884, %v1881, 0
    %v1922 = vsel %vm1884, %v1882, 0
    %v1925 = vsel %vm1884, %v1883, 0
    %v1928 = vsel %vm1215, %v1405, 0
    %1930 = vmatprep.subr.mxu0 0.0
    %1931 = vmatpush1.msra.mxu0 %v1396
    %1932 = vmatprep.subr.mxu0 0.0
    %1933 = vmatpush1.msra.mxu0 %v1397
    %1934 = vmatprep.subr.mxu0 0.0
    %1935 = vmatpush1.msra.mxu0 %v1398
    %1936 = vmatprep.subr.mxu0 0.0
    %1937 = vmatpush1.msra.mxu0 %v1399
    %1938 = vmatprep.subr.mxu0 0.0
    %1939 = vmatpush1.msra.mxu0 %v1400
    %1940 = vmatprep.subr.mxu0 0.0
    %1941 = vmatpush1.msra.mxu0 %v1401
    %1942 = vmatprep.subr.mxu0 0.0
    %1943 = vmatpush1.msra.mxu0 %v1402
    %1944 = vmatprep.subr.mxu0 0.0
    %1945 = vmatpush1.msra.mxu0 %v1403
    %1946 = vmatprep.subr.mxu0 0.0
    %1947 = vmatpush1.msra.mxu0 %v1404
    %1948 = vmatprep.subr.mxu0 0.0
    %1949 = vmatpush1.msra.mxu0 %v1928
    %1950 = vmatprep.subr.mxu0 0.0
    %1951 = vmatpush1.msra.mxu0 0.0
    %1952 = vmatprep.subr.mxu0 0.0
    %1953 = vmatpush1.msra.mxu0 0.0
    %1954 = vmatprep.subr.mxu0 0.0
    %1955 = vmatpush1.msra.mxu0 0.0
    %1956 = vmatprep.subr.mxu0 0.0
    %1957 = vmatpush1.msra.mxu0 0.0
    %1958 = vmatprep.subr.mxu0 0.0
    %1959 = vmatpush1.msra.mxu0 0.0
    %1960 = vmatprep.subr.mxu0 0.0
    %1961 = vmatpush1.msra.mxu0 0.0
    %1962 = vmatprep.subr.mxu0 0.0
    %1963 = vmatpush1.msra.mxu0 0.0
    %1964 = vmatprep.subr.mxu0 0.0
    %1965 = vmatpush1.msra.mxu0 0.0
    %1966 = vmatprep.subr.mxu0 0.0
    %1967 = vmatpush1.msra.mxu0 0.0
    %1968 = vmatprep.subr.mxu0 0.0
    %1969 = vmatpush1.msra.mxu0 0.0
    %1970 = vmatprep.subr.mxu0 0.0
    %1971 = vmatpush1.msra.mxu0 0.0
    %1972 = vmatprep.subr.mxu0 0.0
    %1973 = vmatpush1.msra.mxu0 0.0
    %1974 = vmatprep.subr.mxu0 0.0
    %1975 = vmatpush1.msra.mxu0 0.0
    %1976 = vmatprep.subr.mxu0 0.0
    %1977 = vmatpush1.msra.mxu0 0.0
    %1978 = vmatprep.subr.mxu0 0.0
    %1979 = vmatpush1.msra.mxu0 0.0
    %1980 = vmatprep.subr.mxu0 0.0
    %1981 = vmatpush1.msra.mxu0 0.0
    %1982 = vmatprep.subr.mxu0 0.0
    %1983 = vmatpush1.msra.mxu0 0.0
    %1984 = vmatprep.subr.mxu0 0.0
    %1985 = vmatpush1.msra.mxu0 0.0
    %1986 = vmatprep.subr.mxu0 0.0
    %1987 = vmatpush1.msra.mxu0 0.0
    %1988 = vmatprep.subr.mxu0 0.0
    %1989 = vmatpush1.msra.mxu0 0.0
    %1990 = vmatprep.subr.mxu0 0.0
    %1991 = vmatpush1.msra.mxu0 0.0
    %1992 = vmatprep.subr.mxu0 0.0
    %1993 = vmatpush1.msra.mxu0 0.0
    %1994 = vmatprep.mubr.f32.mxu0 0.0
    %1995 = vmatmul.mubr.f32.gmra.mrb[0].mxu0 %v1886
    %v1996 = vpop.f32.mrb[0].mxu0
    %v1997 = vadd.f32 0.0, %v1996
    %v1998 = vpop.f32.mrb[0].mxu0
    %1999 = vmatprep.mubr.f32.mxu0 0.0
    %2000 = vmatmul.mubr.f32.gmra.mrb[0].mxu0 %v1889
    %v2001 = vpop.f32.mrb[0].mxu0
    %v2002 = vadd.f32 0.0, %v2001
    %v2003 = vpop.f32.mrb[0].mxu0
    %2004 = vmatprep.mubr.f32.mxu0 0.0
    %2005 = vmatmul.mubr.f32.gmra.mrb[0].mxu0 %v1892
    %v2006 = vpop.f32.mrb[0].mxu0
    %v2007 = vadd.f32 0.0, %v2006
    %v2008 = vpop.f32.mrb[0].mxu0
    %2009 = vmatprep.mubr.f32.mxu0 0.0
    %2010 = vmatmul.mubr.f32.gmra.mrb[0].mxu0 %v1895
    %v2011 = vpop.f32.mrb[0].mxu0
    %v2012 = vadd.f32 0.0, %v2011
    %v2013 = vpop.f32.mrb[0].mxu0
    %2014 = vmatprep.mubr.f32.mxu0 0.0
    %2015 = vmatmul.mubr.f32.gmra.mrb[0].mxu0 %v1898
    %v2016 = vpop.f32.mrb[0].mxu0
    %v2017 = vadd.f32 0.0, %v2016
    %v2018 = vpop.f32.mrb[0].mxu0
    %2019 = vmatprep.mubr.f32.mxu0 0.0
    %2020 = vmatmul.mubr.f32.gmra.mrb[0].mxu0 %v1901
    %v2021 = vpop.f32.mrb[0].mxu0
    %v2022 = vadd.f32 0.0, %v2021
    %v2023 = vpop.f32.mrb[0].mxu0
    %2024 = vmatprep.mubr.f32.mxu0 0.0
    %2025 = vmatmul.mubr.f32.gmra.mrb[0].mxu0 %v1904
    %v2026 = vpop.f32.mrb[0].mxu0
    %v2027 = vadd.f32 0.0, %v2026
    %v2028 = vpop.f32.mrb[0].mxu0
    %2029 = vmatprep.mubr.f32.mxu0 0.0
    %2030 = vmatmul.mubr.f32.gmra.mrb[0].mxu0 %v1907
    %v2031 = vpop.f32.mrb[0].mxu0
    %v2032 = vadd.f32 0.0, %v2031
    %v2033 = vpop.f32.mrb[0].mxu0
    %2034 = vmatprep.mubr.f32.mxu0 0.0
    %2035 = vmatmul.mubr.f32.gmra.mrb[0].mxu0 %v1910
    %v2036 = vpop.f32.mrb[0].mxu0
    %v2037 = vadd.f32 0.0, %v2036
    %v2038 = vpop.f32.mrb[0].mxu0
    %2039 = vmatprep.mubr.f32.mxu0 0.0
    %2040 = vmatmul.mubr.f32.gmra.mrb[0].mxu0 %v1913
    %v2041 = vpop.f32.mrb[0].mxu0
    %v2042 = vadd.f32 0.0, %v2041
    %v2043 = vpop.f32.mrb[0].mxu0
    %2044 = vmatprep.mubr.f32.mxu0 0.0
    %2045 = vmatmul.mubr.f32.gmra.mrb[0].mxu0 %v1916
    %v2046 = vpop.f32.mrb[0].mxu0
    %v2047 = vadd.f32 0.0, %v2046
    %v2048 = vpop.f32.mrb[0].mxu0
    %2049 = vmatprep.mubr.f32.mxu0 0.0
    %2050 = vmatmul.mubr.f32.gmra.mrb[0].mxu0 %v1919
    %v2051 = vpop.f32.mrb[0].mxu0
    %v2052 = vadd.f32 0.0, %v2051
    %v2053 = vpop.f32.mrb[0].mxu0
    %2054 = vmatprep.mubr.f32.mxu0 0.0
    %2055 = vmatmul.mubr.f32.gmra.mrb[0].mxu0 %v1922
    %v2056 = vpop.f32.mrb[0].mxu0
    %v2057 = vadd.f32 0.0, %v2056
    %v2058 = vpop.f32.mrb[0].mxu0
    %2059 = vmatprep.mubr.f32.mxu0 0.0
    %2060 = vmatmul.mubr.f32.gmra.mrb[0].mxu0 %v1925
    %v2061 = vpop.f32.mrb[0].mxu0
    %v2062 = vadd.f32 0.0, %v2061
    %v2063 = vpop.f32.mrb[0].mxu0
    %2064 = vdwg.mxu0
    %v2065 = vmax.f32 %v1997, %v2032
    %v2066 = vmax.f32 %v2002, %v2037
    %v2067 = vmax.f32 %v2007, %v2042
    %v2068 = vmax.f32 %v2012, %v2047
    %v2069 = vmax.f32 %v2017, %v2052
    %v2070 = vmax.f32 %v2022, %v2057
    %v2071 = vmax.f32 %v2027, %v2062
    %v2072 = vld [vmem:[%s4] sm:$0x1]
    %v2073 = vld [vmem:[#allocation2] sm:$0xff]
    %v2074 = vld [vmem:[#allocation2 + $0x8] sm:$0xff]
    %v2075 = vld [vmem:[#allocation2 + $0x10] sm:$0xff]
    %v2076 = vld [vmem:[#allocation2 + $0x18] sm:$0xff]
    %s2077 = scalar_lea.vmem [#allocation2], 32
    %v2078 = vld [vmem:[%s2077] sm:$0xff]
    %v2079 = vld [vmem:[%s2077 + $0x8] sm:$0xff]
    %v2080 = vld [vmem:[%s2077 + $0x10] sm:$0xff]
    %v2081 = vld [vmem:[%s2077 + $0x18] sm:$0xff]
    %v2088 = vrot.slane %v2065, 1
    %v2089 = vrot.slane %v2066, 1
    %v2090 = vsel %vm87, %v2088, %v2089
    %v2091 = vrot.slane %v2067, 1
    %v2092 = vsel %vm87, %v2089, %v2091
    %v2093 = vrot.slane %v2068, 1
    %v2094 = vsel %vm87, %v2091, %v2093
    %v2095 = vrot.slane %v2069, 1
    %v2096 = vsel %vm87, %v2093, %v2095
    %v2097 = vrot.slane %v2070, 1
    %v2098 = vsel %vm87, %v2095, %v2097
    %vm2099 = vcmask 261120
    %v2100 = vsel %vm2099, %v2090, 0
    %v2102 = vsel %vm2099, %v2092, 0
    %v2104 = vsel %vm2099, %v2094, 0
    %v2106 = vsel %vm2099, %v2096, 0
    %v2108 = vsel %vm2099, %v2098, 0
    %v2110 = vsel %vm2099, %v2097, 0
    %2112 = vmatprep.subr.mxu0 0.0
    %2113 = vmatpush1.msra.mxu0 %v2078
    %2114 = vmatprep.subr.mxu0 0.0
    %2115 = vmatpush1.msra.mxu0 %v2079
    %2116 = vmatprep.subr.mxu0 0.0
    %2117 = vmatpush1.msra.mxu0 %v2080
    %2118 = vmatprep.subr.mxu0 0.0
    %2119 = vmatpush1.msra.mxu0 %v2081
    %2120 = vmatprep.subr.mxu0 0.0
    %2121 = vmatpush1.msra.mxu0 0.0
    %2122 = vmatprep.subr.mxu0 0.0
    %2123 = vmatpush1.msra.mxu0 0.0
    %2124 = vmatprep.subr.mxu0 0.0
    %2125 = vmatpush1.msra.mxu0 0.0
    %2126 = vmatprep.subr.mxu0 0.0
    %2127 = vmatpush1.msra.mxu0 0.0
    %2128 = vmatprep.subr.mxu0 0.0
    %2129 = vmatpush1.msra.mxu0 0.0
    %2130 = vmatprep.subr.mxu0 0.0
    %2131 = vmatpush1.msra.mxu0 0.0
    %2132 = vmatprep.subr.mxu0 0.0
    %2133 = vmatpush1.msra.mxu0 0.0
    %2134 = vmatprep.subr.mxu0 0.0
    %2135 = vmatpush1.msra.mxu0 0.0
    %2136 = vmatprep.subr.mxu0 0.0
    %2137 = vmatpush1.msra.mxu0 0.0
    %2138 = vmatprep.subr.mxu0 0.0
    %2139 = vmatpush1.msra.mxu0 0.0
    %2140 = vmatprep.subr.mxu0 0.0
    %2141 = vmatpush1.msra.mxu0 0.0
    %2142 = vmatprep.subr.mxu0 0.0
    %2143 = vmatpush1.msra.mxu0 0.0
    %2144 = vmatprep.subr.mxu0 0.0
    %2145 = vmatpush1.msra.mxu0 0.0
    %2146 = vmatprep.subr.mxu0 0.0
    %2147 = vmatpush1.msra.mxu0 0.0
    %2148 = vmatprep.subr.mxu0 0.0
    %2149 = vmatpush1.msra.mxu0 0.0
    %2150 = vmatprep.subr.mxu0 0.0
    %2151 = vmatpush1.msra.mxu0 0.0
    %2152 = vmatprep.subr.mxu0 0.0
    %2153 = vmatpush1.msra.mxu0 0.0
    %2154 = vmatprep.subr.mxu0 0.0
    %2155 = vmatpush1.msra.mxu0 0.0
    %2156 = vmatprep.subr.mxu0 0.0
    %2157 = vmatpush1.msra.mxu0 0.0
    %2158 = vmatprep.subr.mxu0 0.0
    %2159 = vmatpush1.msra.mxu0 0.0
    %2160 = vmatprep.subr.mxu0 0.0
    %2161 = vmatpush1.msra.mxu0 0.0
    %2162 = vmatprep.subr.mxu0 0.0
    %2163 = vmatpush1.msra.mxu0 0.0
    %2164 = vmatprep.subr.mxu0 0.0
    %2165 = vmatpush1.msra.mxu0 0.0
    %2166 = vmatprep.subr.mxu0 0.0
    %2167 = vmatpush1.msra.mxu0 0.0
    %2168 = vmatprep.subr.mxu0 0.0
    %2169 = vmatpush1.msra.mxu0 0.0
    %2170 = vmatprep.subr.mxu0 0.0
    %2171 = vmatpush1.msra.mxu0 0.0
    %2172 = vmatprep.subr.mxu0 0.0
    %2173 = vmatpush1.msra.mxu0 0.0
    %2174 = vmatprep.subr.mxu0 0.0
    %2175 = vmatpush1.msra.mxu0 0.0
    %2176 = vmatprep.mubr.f32.mxu0 0.0
    %2177 = vmatmul.mubr.f32.gmra.mrb[0].mxu0 %v2100
    %v2178 = vpop.f32.mrb[0].mxu0
    %v2179 = vadd.f32 0.0, %v2178
    %v2180 = vpop.f32.mrb[0].mxu0
    %2181 = vmatprep.mubr.f32.mxu0 0.0
    %2182 = vmatmul.mubr.f32.gmra.mrb[0].mxu0 %v2102
    %v2183 = vpop.f32.mrb[0].mxu0
    %v2184 = vadd.f32 0.0, %v2183
    %v2185 = vpop.f32.mrb[0].mxu0
    %2186 = vmatprep.mubr.f32.mxu0 0.0
    %2187 = vmatmul.mubr.f32.gmra.mrb[0].mxu0 %v2104
    %v2188 = vpop.f32.mrb[0].mxu0
    %v2189 = vadd.f32 0.0, %v2188
    %v2190 = vpop.f32.mrb[0].mxu0
    %2191 = vmatprep.mubr.f32.mxu0 0.0
    %2192 = vmatmul.mubr.f32.gmra.mrb[0].mxu0 %v2106
    %v2193 = vpop.f32.mrb[0].mxu0
    %v2194 = vadd.f32 0.0, %v2193
    %v2195 = vpop.f32.mrb[0].mxu0
    %2196 = vmatprep.mubr.f32.mxu0 0.0
    %2197 = vmatmul.mubr.f32.gmra.mrb[0].mxu0 %v2108
    %v2198 = vpop.f32.mrb[0].mxu0
    %v2199 = vadd.f32 0.0, %v2198
    %v2200 = vpop.f32.mrb[0].mxu0
    %2201 = vmatprep.mubr.f32.mxu0 0.0
    %2202 = vmatmul.mubr.f32.gmra.mrb[0].mxu0 %v2110
    %v2203 = vpop.f32.mrb[0].mxu0
    %v2204 = vadd.f32 0.0, %v2203
    %v2205 = vpop.f32.mrb[0].mxu0
    %2206 = vdwg.mxu0
    %v2207 = vsel %vm2099, %v2065, 0
    %v2209 = vsel %vm2099, %v2066, 0
    %v2211 = vsel %vm2099, %v2067, 0
    %v2213 = vsel %vm2099, %v2068, 0
    %v2215 = vsel %vm2099, %v2069, 0
    %v2217 = vsel %vm2099, %v2070, 0
    %2219 = vmatprep.subr.mxu0 0.0
    %2220 = vmatpush1.msra.mxu0 %v2073
    %2221 = vmatprep.subr.mxu0 0.0
    %2222 = vmatpush1.msra.mxu0 %v2074
    %2223 = vmatprep.subr.mxu0 0.0
    %2224 = vmatpush1.msra.mxu0 %v2075
    %2225 = vmatprep.subr.mxu0 0.0
    %2226 = vmatpush1.msra.mxu0 %v2076
    %2227 = vmatprep.subr.mxu0 0.0
    %2228 = vmatpush1.msra.mxu0 0.0
    %2229 = vmatprep.subr.mxu0 0.0
    %2230 = vmatpush1.msra.mxu0 0.0
    %2231 = vmatprep.subr.mxu0 0.0
    %2232 = vmatpush1.msra.mxu0 0.0
    %2233 = vmatprep.subr.mxu0 0.0
    %2234 = vmatpush1.msra.mxu0 0.0
    %2235 = vmatprep.subr.mxu0 0.0
    %2236 = vmatpush1.msra.mxu0 0.0
    %2237 = vmatprep.subr.mxu0 0.0
    %2238 = vmatpush1.msra.mxu0 0.0
    %2239 = vmatprep.subr.mxu0 0.0
    %2240 = vmatpush1.msra.mxu0 0.0
    %2241 = vmatprep.subr.mxu0 0.0
    %2242 = vmatpush1.msra.mxu0 0.0
    %2243 = vmatprep.subr.mxu0 0.0
    %2244 = vmatpush1.msra.mxu0 0.0
    %2245 = vmatprep.subr.mxu0 0.0
    %2246 = vmatpush1.msra.mxu0 0.0
    %2247 = vmatprep.subr.mxu0 0.0
    %2248 = vmatpush1.msra.mxu0 0.0
    %2249 = vmatprep.subr.mxu0 0.0
    %2250 = vmatpush1.msra.mxu0 0.0
    %2251 = vmatprep.subr.mxu0 0.0
    %2252 = vmatpush1.msra.mxu0 0.0
    %2253 = vmatprep.subr.mxu0 0.0
    %2254 = vmatpush1.msra.mxu0 0.0
    %2255 = vmatprep.subr.mxu0 0.0
    %2256 = vmatpush1.msra.mxu0 0.0
    %2257 = vmatprep.subr.mxu0 0.0
    %2258 = vmatpush1.msra.mxu0 0.0
    %2259 = vmatprep.subr.mxu0 0.0
    %2260 = vmatpush1.msra.mxu0 0.0
    %2261 = vmatprep.subr.mxu0 0.0
    %2262 = vmatpush1.msra.mxu0 0.0
    %2263 = vmatprep.subr.mxu0 0.0
    %2264 = vmatpush1.msra.mxu0 0.0
    %2265 = vmatprep.subr.mxu0 0.0
    %2266 = vmatpush1.msra.mxu0 0.0
    %2267 = vmatprep.subr.mxu0 0.0
    %2268 = vmatpush1.msra.mxu0 0.0
    %2269 = vmatprep.subr.mxu0 0.0
    %2270 = vmatpush1.msra.mxu0 0.0
    %2271 = vmatprep.subr.mxu0 0.0
    %2272 = vmatpush1.msra.mxu0 0.0
    %2273 = vmatprep.subr.mxu0 0.0
    %2274 = vmatpush1.msra.mxu0 0.0
    %2275 = vmatprep.subr.mxu0 0.0
    %2276 = vmatpush1.msra.mxu0 0.0
    %2277 = vmatprep.subr.mxu0 0.0
    %2278 = vmatpush1.msra.mxu0 0.0
    %2279 = vmatprep.subr.mxu0 0.0
    %2280 = vmatpush1.msra.mxu0 0.0
    %2281 = vmatprep.subr.mxu0 0.0
    %2282 = vmatpush1.msra.mxu0 0.0
    %2283 = vmatprep.mubr.f32.mxu0 0.0
    %2284 = vmatmul.mubr.f32.gmra.mrb[0].mxu0 %v2207
    %v2285 = vpop.f32.mrb[0].mxu0
    %v2286 = vadd.f32 %v2179, %v2285
    %v2287 = vpop.f32.mrb[0].mxu0
    %2288 = vmatprep.mubr.f32.mxu0 0.0
    %2289 = vmatmul.mubr.f32.gmra.mrb[0].mxu0 %v2209
    %v2290 = vpop.f32.mrb[0].mxu0
    %v2291 = vadd.f32 %v2184, %v2290
    %v2292 = vpop.f32.mrb[0].mxu0
    %2293 = vmatprep.mubr.f32.mxu0 0.0
    %2294 = vmatmul.mubr.f32.gmra.mrb[0].mxu0 %v2211
    %v2295 = vpop.f32.mrb[0].mxu0
    %v2296 = vadd.f32 %v2189, %v2295
    %v2297 = vpop.f32.mrb[0].mxu0
    %2298 = vmatprep.mubr.f32.mxu0 0.0
    %2299 = vmatmul.mubr.f32.gmra.mrb[0].mxu0 %v2213
    %v2300 = vpop.f32.mrb[0].mxu0
    %v2301 = vadd.f32 %v2194, %v2300
    %v2302 = vpop.f32.mrb[0].mxu0
    %2303 = vmatprep.mubr.f32.mxu0 0.0
    %2304 = vmatmul.mubr.f32.gmra.mrb[0].mxu0 %v2215
    %v2305 = vpop.f32.mrb[0].mxu0
    %v2306 = vadd.f32 %v2199, %v2305
    %v2307 = vpop.f32.mrb[0].mxu0
    %2308 = vmatprep.mubr.f32.mxu0 0.0
    %2309 = vmatmul.mubr.f32.gmra.mrb[0].mxu0 %v2217
    %v2310 = vpop.f32.mrb[0].mxu0
    %v2311 = vadd.f32 %v2204, %v2310
    %v2312 = vpop.f32.mrb[0].mxu0
    %2313 = vdwg.mxu0
    %s2314 = scalar_lea.vmem [#allocation2], 64
    %v2315 = vld [vmem:[%s2314] sm:$0xff]
    %v2316 = vld [vmem:[%s2314 + $0x8] sm:$0xff]
    %v2317 = vld [vmem:[%s2314 + $0x10] sm:$0xff]
    %v2318 = vld [vmem:[%s2314 + $0x18] sm:$0xff]
    %v2319 = vrot.slane %v2065, 2
    %v2320 = vrot.slane %v2066, 2
    %v2321 = vsel %vm380, %v2319, %v2320
    %v2322 = vrot.slane %v2067, 2
    %v2323 = vsel %vm380, %v2320, %v2322
    %v2324 = vrot.slane %v2068, 2
    %v2325 = vsel %vm380, %v2322, %v2324
    %v2326 = vrot.slane %v2069, 2
    %v2327 = vsel %vm380, %v2324, %v2326
    %v2328 = vrot.slane %v2070, 2
    %v2329 = vsel %vm380, %v2326, %v2328
    %v2330 = vsel %vm2099, %v2321, 0
    %v2332 = vsel %vm2099, %v2323, 0
    %v2334 = vsel %vm2099, %v2325, 0
    %v2336 = vsel %vm2099, %v2327, 0
    %v2338 = vsel %vm2099, %v2329, 0
    %v2340 = vsel %vm2099, %v2328, 0
    %2342 = vmatprep.subr.mxu0 0.0
    %2343 = vmatpush1.msra.mxu0 %v2315
    %2344 = vmatprep.subr.mxu0 0.0
    %2345 = vmatpush1.msra.mxu0 %v2316
    %2346 = vmatprep.subr.mxu0 0.0
    %2347 = vmatpush1.msra.mxu0 %v2317
    %2348 = vmatprep.subr.mxu0 0.0
    %2349 = vmatpush1.msra.mxu0 %v2318
    %2350 = vmatprep.subr.mxu0 0.0
    %2351 = vmatpush1.msra.mxu0 0.0
    %2352 = vmatprep.subr.mxu0 0.0
    %2353 = vmatpush1.msra.mxu0 0.0
    %2354 = vmatprep.subr.mxu0 0.0
    %2355 = vmatpush1.msra.mxu0 0.0
    %2356 = vmatprep.subr.mxu0 0.0
    %2357 = vmatpush1.msra.mxu0 0.0
    %2358 = vmatprep.subr.mxu0 0.0
    %2359 = vmatpush1.msra.mxu0 0.0
    %2360 = vmatprep.subr.mxu0 0.0
    %2361 = vmatpush1.msra.mxu0 0.0
    %2362 = vmatprep.subr.mxu0 0.0
    %2363 = vmatpush1.msra.mxu0 0.0
    %2364 = vmatprep.subr.mxu0 0.0
    %2365 = vmatpush1.msra.mxu0 0.0
    %2366 = vmatprep.subr.mxu0 0.0
    %2367 = vmatpush1.msra.mxu0 0.0
    %2368 = vmatprep.subr.mxu0 0.0
    %2369 = vmatpush1.msra.mxu0 0.0
    %2370 = vmatprep.subr.mxu0 0.0
    %2371 = vmatpush1.msra.mxu0 0.0
    %2372 = vmatprep.subr.mxu0 0.0
    %2373 = vmatpush1.msra.mxu0 0.0
    %2374 = vmatprep.subr.mxu0 0.0
    %2375 = vmatpush1.msra.mxu0 0.0
    %2376 = vmatprep.subr.mxu0 0.0
    %2377 = vmatpush1.msra.mxu0 0.0
    %2378 = vmatprep.subr.mxu0 0.0
    %2379 = vmatpush1.msra.mxu0 0.0
    %2380 = vmatprep.subr.mxu0 0.0
    %2381 = vmatpush1.msra.mxu0 0.0
    %2382 = vmatprep.subr.mxu0 0.0
    %2383 = vmatpush1.msra.mxu0 0.0
    %2384 = vmatprep.subr.mxu0 0.0
    %2385 = vmatpush1.msra.mxu0 0.0
    %2386 = vmatprep.subr.mxu0 0.0
    %2387 = vmatpush1.msra.mxu0 0.0
    %2388 = vmatprep.subr.mxu0 0.0
    %2389 = vmatpush1.msra.mxu0 0.0
    %2390 = vmatprep.subr.mxu0 0.0
    %2391 = vmatpush1.msra.mxu0 0.0
    %2392 = vmatprep.subr.mxu0 0.0
    %2393 = vmatpush1.msra.mxu0 0.0
    %2394 = vmatprep.subr.mxu0 0.0
    %2395 = vmatpush1.msra.mxu0 0.0
    %2396 = vmatprep.subr.mxu0 0.0
    %2397 = vmatpush1.msra.mxu0 0.0
    %2398 = vmatprep.subr.mxu0 0.0
    %2399 = vmatpush1.msra.mxu0 0.0
    %2400 = vmatprep.subr.mxu0 0.0
    %2401 = vmatpush1.msra.mxu0 0.0
    %2402 = vmatprep.subr.mxu0 0.0
    %2403 = vmatpush1.msra.mxu0 0.0
    %2404 = vmatprep.subr.mxu0 0.0
    %2405 = vmatpush1.msra.mxu0 0.0
    %2406 = vmatprep.mubr.f32.mxu0 0.0
    %2407 = vmatmul.mubr.f32.gmra.mrb[0].mxu0 %v2330
    %v2408 = vpop.f32.mrb[0].mxu0
    %v2409 = vadd.f32 0.0, %v2408
    %v2410 = vpop.f32.mrb[0].mxu0
    %2411 = vmatprep.mubr.f32.mxu0 0.0
    %2412 = vmatmul.mubr.f32.gmra.mrb[0].mxu0 %v2332
    %v2413 = vpop.f32.mrb[0].mxu0
    %v2414 = vadd.f32 0.0, %v2413
    %v2415 = vpop.f32.mrb[0].mxu0
    %2416 = vmatprep.mubr.f32.mxu0 0.0
    %2417 = vmatmul.mubr.f32.gmra.mrb[0].mxu0 %v2334
    %v2418 = vpop.f32.mrb[0].mxu0
    %v2419 = vadd.f32 0.0, %v2418
    %v2420 = vpop.f32.mrb[0].mxu0
    %2421 = vmatprep.mubr.f32.mxu0 0.0
    %2422 = vmatmul.mubr.f32.gmra.mrb[0].mxu0 %v2336
    %v2423 = vpop.f32.mrb[0].mxu0
    %v2424 = vadd.f32 0.0, %v2423
    %v2425 = vpop.f32.mrb[0].mxu0
    %2426 = vmatprep.mubr.f32.mxu0 0.0
    %2427 = vmatmul.mubr.f32.gmra.mrb[0].mxu0 %v2338
    %v2428 = vpop.f32.mrb[0].mxu0
    %v2429 = vadd.f32 0.0, %v2428
    %v2430 = vpop.f32.mrb[0].mxu0
    %2431 = vmatprep.mubr.f32.mxu0 0.0
    %2432 = vmatmul.mubr.f32.gmra.mrb[0].mxu0 %v2340
    %v2433 = vpop.f32.mrb[0].mxu0
    %v2434 = vadd.f32 0.0, %v2433
    %v2435 = vpop.f32.mrb[0].mxu0
    %2436 = vdwg.mxu0
    %v2437 = vadd.f32 %v2286, %v2409
    %v2438 = vadd.f32 %v2291, %v2414
    %v2439 = vadd.f32 %v2296, %v2419
    %v2440 = vadd.f32 %v2301, %v2424
    %v2441 = vadd.f32 %v2306, %v2429
    %v2442 = vadd.f32 %v2311, %v2434
    %s2443 = scalar_lea.vmem [#allocation2], 96
    %v2444 = vld [vmem:[%s2443] sm:$0xff]
    %v2445 = vld [vmem:[%s2443 + $0x8] sm:$0xff]
    %v2446 = vld [vmem:[%s2443 + $0x10] sm:$0xff]
    %v2447 = vld [vmem:[%s2443 + $0x18] sm:$0xff]
    %v2448 = vrot.slane %v2065, 3
    %v2449 = vrot.slane %v2066, 3
    %v2450 = vsel %vm547, %v2448, %v2449
    %v2451 = vrot.slane %v2067, 3
    %v2452 = vsel %vm547, %v2449, %v2451
    %v2453 = vrot.slane %v2068, 3
    %v2454 = vsel %vm547, %v2451, %v2453
    %v2455 = vrot.slane %v2069, 3
    %v2456 = vsel %vm547, %v2453, %v2455
    %v2457 = vrot.slane %v2070, 3
    %v2458 = vsel %vm547, %v2455, %v2457
    %v2459 = vsel %vm2099, %v2450, 0
    %v2461 = vsel %vm2099, %v2452, 0
    %v2463 = vsel %vm2099, %v2454, 0
    %v2465 = vsel %vm2099, %v2456, 0
    %v2467 = vsel %vm2099, %v2458, 0
    %v2469 = vsel %vm2099, %v2457, 0
    %2471 = vmatprep.subr.mxu0 0.0
    %2472 = vmatpush1.msra.mxu0 %v2444
    %2473 = vmatprep.subr.mxu0 0.0
    %2474 = vmatpush1.msra.mxu0 %v2445
    %2475 = vmatprep.subr.mxu0 0.0
    %2476 = vmatpush1.msra.mxu0 %v2446
    %2477 = vmatprep.subr.mxu0 0.0
    %2478 = vmatpush1.msra.mxu0 %v2447
    %2479 = vmatprep.subr.mxu0 0.0
    %2480 = vmatpush1.msra.mxu0 0.0
    %2481 = vmatprep.subr.mxu0 0.0
    %2482 = vmatpush1.msra.mxu0 0.0
    %2483 = vmatprep.subr.mxu0 0.0
    %2484 = vmatpush1.msra.mxu0 0.0
    %2485 = vmatprep.subr.mxu0 0.0
    %2486 = vmatpush1.msra.mxu0 0.0
    %2487 = vmatprep.subr.mxu0 0.0
    %2488 = vmatpush1.msra.mxu0 0.0
    %2489 = vmatprep.subr.mxu0 0.0
    %2490 = vmatpush1.msra.mxu0 0.0
    %2491 = vmatprep.subr.mxu0 0.0
    %2492 = vmatpush1.msra.mxu0 0.0
    %2493 = vmatprep.subr.mxu0 0.0
    %2494 = vmatpush1.msra.mxu0 0.0
    %2495 = vmatprep.subr.mxu0 0.0
    %2496 = vmatpush1.msra.mxu0 0.0
    %2497 = vmatprep.subr.mxu0 0.0
    %2498 = vmatpush1.msra.mxu0 0.0
    %2499 = vmatprep.subr.mxu0 0.0
    %2500 = vmatpush1.msra.mxu0 0.0
    %2501 = vmatprep.subr.mxu0 0.0
    %2502 = vmatpush1.msra.mxu0 0.0
    %2503 = vmatprep.subr.mxu0 0.0
    %2504 = vmatpush1.msra.mxu0 0.0
    %2505 = vmatprep.subr.mxu0 0.0
    %2506 = vmatpush1.msra.mxu0 0.0
    %2507 = vmatprep.subr.mxu0 0.0
    %2508 = vmatpush1.msra.mxu0 0.0
    %2509 = vmatprep.subr.mxu0 0.0
    %2510 = vmatpush1.msra.mxu0 0.0
    %2511 = vmatprep.subr.mxu0 0.0
    %2512 = vmatpush1.msra.mxu0 0.0
    %2513 = vmatprep.subr.mxu0 0.0
    %2514 = vmatpush1.msra.mxu0 0.0
    %2515 = vmatprep.subr.mxu0 0.0
    %2516 = vmatpush1.msra.mxu0 0.0
    %2517 = vmatprep.subr.mxu0 0.0
    %2518 = vmatpush1.msra.mxu0 0.0
    %2519 = vmatprep.subr.mxu0 0.0
    %2520 = vmatpush1.msra.mxu0 0.0
    %2521 = vmatprep.subr.mxu0 0.0
    %2522 = vmatpush1.msra.mxu0 0.0
    %2523 = vmatprep.subr.mxu0 0.0
    %2524 = vmatpush1.msra.mxu0 0.0
    %2525 = vmatprep.subr.mxu0 0.0
    %2526 = vmatpush1.msra.mxu0 0.0
    %2527 = vmatprep.subr.mxu0 0.0
    %2528 = vmatpush1.msra.mxu0 0.0
    %2529 = vmatprep.subr.mxu0 0.0
    %2530 = vmatpush1.msra.mxu0 0.0
    %2531 = vmatprep.subr.mxu0 0.0
    %2532 = vmatpush1.msra.mxu0 0.0
    %2533 = vmatprep.subr.mxu0 0.0
    %2534 = vmatpush1.msra.mxu0 0.0
    %2535 = vmatprep.mubr.f32.mxu0 0.0
    %2536 = vmatmul.mubr.f32.gmra.mrb[0].mxu0 %v2459
    %v2537 = vpop.f32.mrb[0].mxu0
    %v2538 = vadd.f32 0.0, %v2537
    %v2539 = vpop.f32.mrb[0].mxu0
    %2540 = vmatprep.mubr.f32.mxu0 0.0
    %2541 = vmatmul.mubr.f32.gmra.mrb[0].mxu0 %v2461
    %v2542 = vpop.f32.mrb[0].mxu0
    %v2543 = vadd.f32 0.0, %v2542
    %v2544 = vpop.f32.mrb[0].mxu0
    %2545 = vmatprep.mubr.f32.mxu0 0.0
    %2546 = vmatmul.mubr.f32.gmra.mrb[0].mxu0 %v2463
    %v2547 = vpop.f32.mrb[0].mxu0
    %v2548 = vadd.f32 0.0, %v2547
    %v2549 = vpop.f32.mrb[0].mxu0
    %2550 = vmatprep.mubr.f32.mxu0 0.0
    %2551 = vmatmul.mubr.f32.gmra.mrb[0].mxu0 %v2465
    %v2552 = vpop.f32.mrb[0].mxu0
    %v2553 = vadd.f32 0.0, %v2552
    %v2554 = vpop.f32.mrb[0].mxu0
    %2555 = vmatprep.mubr.f32.mxu0 0.0
    %2556 = vmatmul.mubr.f32.gmra.mrb[0].mxu0 %v2467
    %v2557 = vpop.f32.mrb[0].mxu0
    %v2558 = vadd.f32 0.0, %v2557
    %v2559 = vpop.f32.mrb[0].mxu0
    %2560 = vmatprep.mubr.f32.mxu0 0.0
    %2561 = vmatmul.mubr.f32.gmra.mrb[0].mxu0 %v2469
    %v2562 = vpop.f32.mrb[0].mxu0
    %v2563 = vadd.f32 0.0, %v2562
    %v2564 = vpop.f32.mrb[0].mxu0
    %2565 = vdwg.mxu0
    %v2566 = vadd.f32 %v2437, %v2538
    %v2567 = vadd.f32 %v2438, %v2543
    %v2568 = vadd.f32 %v2439, %v2548
    %v2569 = vadd.f32 %v2440, %v2553
    %v2570 = vadd.f32 %v2441, %v2558
    %v2571 = vadd.f32 %v2442, %v2563
    %s2572 = scalar_lea.vmem [#allocation2], 128
    %v2573 = vld [vmem:[%s2572] sm:$0xff]
    %v2574 = vld [vmem:[%s2572 + $0x8] sm:$0xff]
    %v2575 = vld [vmem:[%s2572 + $0x10] sm:$0xff]
    %v2576 = vld [vmem:[%s2572 + $0x18] sm:$0xff]
    %v2577 = vrot.slane %v2065, 4
    %v2578 = vrot.slane %v2066, 4
    %v2579 = vsel %vm714, %v2577, %v2578
    %v2580 = vrot.slane %v2067, 4
    %v2581 = vsel %vm714, %v2578, %v2580
    %v2582 = vrot.slane %v2068, 4
    %v2583 = vsel %vm714, %v2580, %v2582
    %v2584 = vrot.slane %v2069, 4
    %v2585 = vsel %vm714, %v2582, %v2584
    %v2586 = vrot.slane %v2070, 4
    %v2587 = vsel %vm714, %v2584, %v2586
    %v2588 = vsel %vm2099, %v2579, 0
    %v2590 = vsel %vm2099, %v2581, 0
    %v2592 = vsel %vm2099, %v2583, 0
    %v2594 = vsel %vm2099, %v2585, 0
    %v2596 = vsel %vm2099, %v2587, 0
    %v2598 = vsel %vm2099, %v2586, 0
    %2600 = vmatprep.subr.mxu0 0.0
    %2601 = vmatpush1.msra.mxu0 %v2573
    %2602 = vmatprep.subr.mxu0 0.0
    %2603 = vmatpush1.msra.mxu0 %v2574
    %2604 = vmatprep.subr.mxu0 0.0
    %2605 = vmatpush1.msra.mxu0 %v2575
    %2606 = vmatprep.subr.mxu0 0.0
    %2607 = vmatpush1.msra.mxu0 %v2576
    %2608 = vmatprep.subr.mxu0 0.0
    %2609 = vmatpush1.msra.mxu0 0.0
    %2610 = vmatprep.subr.mxu0 0.0
    %2611 = vmatpush1.msra.mxu0 0.0
    %2612 = vmatprep.subr.mxu0 0.0
    %2613 = vmatpush1.msra.mxu0 0.0
    %2614 = vmatprep.subr.mxu0 0.0
    %2615 = vmatpush1.msra.mxu0 0.0
    %2616 = vmatprep.subr.mxu0 0.0
    %2617 = vmatpush1.msra.mxu0 0.0
    %2618 = vmatprep.subr.mxu0 0.0
    %2619 = vmatpush1.msra.mxu0 0.0
    %2620 = vmatprep.subr.mxu0 0.0
    %2621 = vmatpush1.msra.mxu0 0.0
    %2622 = vmatprep.subr.mxu0 0.0
    %2623 = vmatpush1.msra.mxu0 0.0
    %2624 = vmatprep.subr.mxu0 0.0
    %2625 = vmatpush1.msra.mxu0 0.0
    %2626 = vmatprep.subr.mxu0 0.0
    %2627 = vmatpush1.msra.mxu0 0.0
    %2628 = vmatprep.subr.mxu0 0.0
    %2629 = vmatpush1.msra.mxu0 0.0
    %2630 = vmatprep.subr.mxu0 0.0
    %2631 = vmatpush1.msra.mxu0 0.0
    %2632 = vmatprep.subr.mxu0 0.0
    %2633 = vmatpush1.msra.mxu0 0.0
    %2634 = vmatprep.subr.mxu0 0.0
    %2635 = vmatpush1.msra.mxu0 0.0
    %2636 = vmatprep.subr.mxu0 0.0
    %2637 = vmatpush1.msra.mxu0 0.0
    %2638 = vmatprep.subr.mxu0 0.0
    %2639 = vmatpush1.msra.mxu0 0.0
    %2640 = vmatprep.subr.mxu0 0.0
    %2641 = vmatpush1.msra.mxu0 0.0
    %2642 = vmatprep.subr.mxu0 0.0
    %2643 = vmatpush1.msra.mxu0 0.0
    %2644 = vmatprep.subr.mxu0 0.0
    %2645 = vmatpush1.msra.mxu0 0.0
    %2646 = vmatprep.subr.mxu0 0.0
    %2647 = vmatpush1.msra.mxu0 0.0
    %2648 = vmatprep.subr.mxu0 0.0
    %2649 = vmatpush1.msra.mxu0 0.0
    %2650 = vmatprep.subr.mxu0 0.0
    %2651 = vmatpush1.msra.mxu0 0.0
    %2652 = vmatprep.subr.mxu0 0.0
    %2653 = vmatpush1.msra.mxu0 0.0
    %2654 = vmatprep.subr.mxu0 0.0
    %2655 = vmatpush1.msra.mxu0 0.0
    %2656 = vmatprep.subr.mxu0 0.0
    %2657 = vmatpush1.msra.mxu0 0.0
    %2658 = vmatprep.subr.mxu0 0.0
    %2659 = vmatpush1.msra.mxu0 0.0
    %2660 = vmatprep.subr.mxu0 0.0
    %2661 = vmatpush1.msra.mxu0 0.0
    %2662 = vmatprep.subr.mxu0 0.0
    %2663 = vmatpush1.msra.mxu0 0.0
    %2664 = vmatprep.mubr.f32.mxu0 0.0
    %2665 = vmatmul.mubr.f32.gmra.mrb[0].mxu0 %v2588
    %v2666 = vpop.f32.mrb[0].mxu0
    %v2667 = vadd.f32 0.0, %v2666
    %v2668 = vpop.f32.mrb[0].mxu0
    %2669 = vmatprep.mubr.f32.mxu0 0.0
    %2670 = vmatmul.mubr.f32.gmra.mrb[0].mxu0 %v2590
    %v2671 = vpop.f32.mrb[0].mxu0
    %v2672 = vadd.f32 0.0, %v2671
    %v2673 = vpop.f32.mrb[0].mxu0
    %2674 = vmatprep.mubr.f32.mxu0 0.0
    %2675 = vmatmul.mubr.f32.gmra.mrb[0].mxu0 %v2592
    %v2676 = vpop.f32.mrb[0].mxu0
    %v2677 = vadd.f32 0.0, %v2676
    %v2678 = vpop.f32.mrb[0].mxu0
    %2679 = vmatprep.mubr.f32.mxu0 0.0
    %2680 = vmatmul.mubr.f32.gmra.mrb[0].mxu0 %v2594
    %v2681 = vpop.f32.mrb[0].mxu0
    %v2682 = vadd.f32 0.0, %v2681
    %v2683 = vpop.f32.mrb[0].mxu0
    %2684 = vmatprep.mubr.f32.mxu0 0.0
    %2685 = vmatmul.mubr.f32.gmra.mrb[0].mxu0 %v2596
    %v2686 = vpop.f32.mrb[0].mxu0
    %v2687 = vadd.f32 0.0, %v2686
    %v2688 = vpop.f32.mrb[0].mxu0
    %2689 = vmatprep.mubr.f32.mxu0 0.0
    %2690 = vmatmul.mubr.f32.gmra.mrb[0].mxu0 %v2598
    %v2691 = vpop.f32.mrb[0].mxu0
    %v2692 = vadd.f32 0.0, %v2691
    %v2693 = vpop.f32.mrb[0].mxu0
    %2694 = vdwg.mxu0
    %v2695 = vadd.f32 %v2566, %v2667
    %v2696 = vadd.f32 %v2567, %v2672
    %v2697 = vadd.f32 %v2568, %v2677
    %v2698 = vadd.f32 %v2569, %v2682
    %v2699 = vadd.f32 %v2570, %v2687
    %v2700 = vadd.f32 %v2571, %v2692
    %s2701 = scalar_lea.vmem [#allocation2], 160
    %v2702 = vld [vmem:[%s2701] sm:$0xff]
    %v2703 = vld [vmem:[%s2701 + $0x8] sm:$0xff]
    %v2704 = vld [vmem:[%s2701 + $0x10] sm:$0xff]
    %v2705 = vld [vmem:[%s2701 + $0x18] sm:$0xff]
    %v2706 = vrot.slane %v2065, 5
    %v2707 = vrot.slane %v2066, 5
    %v2708 = vsel %vm881, %v2706, %v2707
    %v2709 = vrot.slane %v2067, 5
    %v2710 = vsel %vm881, %v2707, %v2709
    %v2711 = vrot.slane %v2068, 5
    %v2712 = vsel %vm881, %v2709, %v2711
    %v2713 = vrot.slane %v2069, 5
    %v2714 = vsel %vm881, %v2711, %v2713
    %v2715 = vrot.slane %v2070, 5
    %v2716 = vsel %vm881, %v2713, %v2715
    %v2717 = vsel %vm2099, %v2708, 0
    %v2719 = vsel %vm2099, %v2710, 0
    %v2721 = vsel %vm2099, %v2712, 0
    %v2723 = vsel %vm2099, %v2714, 0
    %v2725 = vsel %vm2099, %v2716, 0
    %v2727 = vsel %vm2099, %v2715, 0
    %2729 = vmatprep.subr.mxu0 0.0
    %2730 = vmatpush1.msra.mxu0 %v2702
    %2731 = vmatprep.subr.mxu0 0.0
    %2732 = vmatpush1.msra.mxu0 %v2703
    %2733 = vmatprep.subr.mxu0 0.0
    %2734 = vmatpush1.msra.mxu0 %v2704
    %2735 = vmatprep.subr.mxu0 0.0
    %2736 = vmatpush1.msra.mxu0 %v2705
    %2737 = vmatprep.subr.mxu0 0.0
    %2738 = vmatpush1.msra.mxu0 0.0
    %2739 = vmatprep.subr.mxu0 0.0
    %2740 = vmatpush1.msra.mxu0 0.0
    %2741 = vmatprep.subr.mxu0 0.0
    %2742 = vmatpush1.msra.mxu0 0.0
    %2743 = vmatprep.subr.mxu0 0.0
    %2744 = vmatpush1.msra.mxu0 0.0
    %2745 = vmatprep.subr.mxu0 0.0
    %2746 = vmatpush1.msra.mxu0 0.0
    %2747 = vmatprep.subr.mxu0 0.0
    %2748 = vmatpush1.msra.mxu0 0.0
    %2749 = vmatprep.subr.mxu0 0.0
    %2750 = vmatpush1.msra.mxu0 0.0
    %2751 = vmatprep.subr.mxu0 0.0
    %2752 = vmatpush1.msra.mxu0 0.0
    %2753 = vmatprep.subr.mxu0 0.0
    %2754 = vmatpush1.msra.mxu0 0.0
    %2755 = vmatprep.subr.mxu0 0.0
    %2756 = vmatpush1.msra.mxu0 0.0
    %2757 = vmatprep.subr.mxu0 0.0
    %2758 = vmatpush1.msra.mxu0 0.0
    %2759 = vmatprep.subr.mxu0 0.0
    %2760 = vmatpush1.msra.mxu0 0.0
    %2761 = vmatprep.subr.mxu0 0.0
    %2762 = vmatpush1.msra.mxu0 0.0
    %2763 = vmatprep.subr.mxu0 0.0
    %2764 = vmatpush1.msra.mxu0 0.0
    %2765 = vmatprep.subr.mxu0 0.0
    %2766 = vmatpush1.msra.mxu0 0.0
    %2767 = vmatprep.subr.mxu0 0.0
    %2768 = vmatpush1.msra.mxu0 0.0
    %2769 = vmatprep.subr.mxu0 0.0
    %2770 = vmatpush1.msra.mxu0 0.0
    %2771 = vmatprep.subr.mxu0 0.0
    %2772 = vmatpush1.msra.mxu0 0.0
    %2773 = vmatprep.subr.mxu0 0.0
    %2774 = vmatpush1.msra.mxu0 0.0
    %2775 = vmatprep.subr.mxu0 0.0
    %2776 = vmatpush1.msra.mxu0 0.0
    %2777 = vmatprep.subr.mxu0 0.0
    %2778 = vmatpush1.msra.mxu0 0.0
    %2779 = vmatprep.subr.mxu0 0.0
    %2780 = vmatpush1.msra.mxu0 0.0
    %2781 = vmatprep.subr.mxu0 0.0
    %2782 = vmatpush1.msra.mxu0 0.0
    %2783 = vmatprep.subr.mxu0 0.0
    %2784 = vmatpush1.msra.mxu0 0.0
    %2785 = vmatprep.subr.mxu0 0.0
    %2786 = vmatpush1.msra.mxu0 0.0
    %2787 = vmatprep.subr.mxu0 0.0
    %2788 = vmatpush1.msra.mxu0 0.0
    %2789 = vmatprep.subr.mxu0 0.0
    %2790 = vmatpush1.msra.mxu0 0.0
    %2791 = vmatprep.subr.mxu0 0.0
    %2792 = vmatpush1.msra.mxu0 0.0
    %2793 = vmatprep.mubr.f32.mxu0 0.0
    %2794 = vmatmul.mubr.f32.gmra.mrb[0].mxu0 %v2717
    %v2795 = vpop.f32.mrb[0].mxu0
    %v2796 = vadd.f32 0.0, %v2795
    %v2797 = vpop.f32.mrb[0].mxu0
    %2798 = vmatprep.mubr.f32.mxu0 0.0
    %2799 = vmatmul.mubr.f32.gmra.mrb[0].mxu0 %v2719
    %v2800 = vpop.f32.mrb[0].mxu0
    %v2801 = vadd.f32 0.0, %v2800
    %v2802 = vpop.f32.mrb[0].mxu0
    %2803 = vmatprep.mubr.f32.mxu0 0.0
    %2804 = vmatmul.mubr.f32.gmra.mrb[0].mxu0 %v2721
    %v2805 = vpop.f32.mrb[0].mxu0
    %v2806 = vadd.f32 0.0, %v2805
    %v2807 = vpop.f32.mrb[0].mxu0
    %2808 = vmatprep.mubr.f32.mxu0 0.0
    %2809 = vmatmul.mubr.f32.gmra.mrb[0].mxu0 %v2723
    %v2810 = vpop.f32.mrb[0].mxu0
    %v2811 = vadd.f32 0.0, %v2810
    %v2812 = vpop.f32.mrb[0].mxu0
    %2813 = vmatprep.mubr.f32.mxu0 0.0
    %2814 = vmatmul.mubr.f32.gmra.mrb[0].mxu0 %v2725
    %v2815 = vpop.f32.mrb[0].mxu0
    %v2816 = vadd.f32 0.0, %v2815
    %v2817 = vpop.f32.mrb[0].mxu0
    %2818 = vmatprep.mubr.f32.mxu0 0.0
    %2819 = vmatmul.mubr.f32.gmra.mrb[0].mxu0 %v2727
    %v2820 = vpop.f32.mrb[0].mxu0
    %v2821 = vadd.f32 0.0, %v2820
    %v2822 = vpop.f32.mrb[0].mxu0
    %2823 = vdwg.mxu0
    %v2824 = vadd.f32 %v2695, %v2796
    %v2825 = vadd.f32 %v2696, %v2801
    %v2826 = vadd.f32 %v2697, %v2806
    %v2827 = vadd.f32 %v2698, %v2811
    %v2828 = vadd.f32 %v2699, %v2816
    %v2829 = vadd.f32 %v2700, %v2821
    %s2830 = scalar_lea.vmem [#allocation2], 192
    %v2831 = vld [vmem:[%s2830] sm:$0xff]
    %v2832 = vld [vmem:[%s2830 + $0x8] sm:$0xff]
    %v2833 = vld [vmem:[%s2830 + $0x10] sm:$0xff]
    %v2834 = vld [vmem:[%s2830 + $0x18] sm:$0xff]
    %v2836 = vrot.slane %v2065, 6
    %v2837 = vrot.slane %v2066, 6
    %v2838 = vsel %vm1048, %v2836, %v2837
    %v2839 = vrot.slane %v2067, 6
    %v2840 = vsel %vm1048, %v2837, %v2839
    %v2841 = vrot.slane %v2068, 6
    %v2842 = vsel %vm1048, %v2839, %v2841
    %v2843 = vrot.slane %v2069, 6
    %v2844 = vsel %vm1048, %v2841, %v2843
    %v2845 = vrot.slane %v2070, 6
    %v2846 = vsel %vm1048, %v2843, %v2845
    %v2847 = vrot.slane %v2071, 6
    %v2848 = vsel %vm1048, %v2845, %v2847
    %v2849 = vsel %vm2099, %v2838, 0
    %v2851 = vsel %vm2099, %v2840, 0
    %v2853 = vsel %vm2099, %v2842, 0
    %v2855 = vsel %vm2099, %v2844, 0
    %v2857 = vsel %vm2099, %v2846, 0
    %v2859 = vsel %vm2099, %v2848, 0
    %2861 = vmatprep.subr.mxu0 0.0
    %2862 = vmatpush1.msra.mxu0 %v2831
    %2863 = vmatprep.subr.mxu0 0.0
    %2864 = vmatpush1.msra.mxu0 %v2832
    %2865 = vmatprep.subr.mxu0 0.0
    %2866 = vmatpush1.msra.mxu0 %v2833
    %2867 = vmatprep.subr.mxu0 0.0
    %2868 = vmatpush1.msra.mxu0 %v2834
    %2869 = vmatprep.subr.mxu0 0.0
    %2870 = vmatpush1.msra.mxu0 0.0
    %2871 = vmatprep.subr.mxu0 0.0
    %2872 = vmatpush1.msra.mxu0 0.0
    %2873 = vmatprep.subr.mxu0 0.0
    %2874 = vmatpush1.msra.mxu0 0.0
    %2875 = vmatprep.subr.mxu0 0.0
    %2876 = vmatpush1.msra.mxu0 0.0
    %2877 = vmatprep.subr.mxu0 0.0
    %2878 = vmatpush1.msra.mxu0 0.0
    %2879 = vmatprep.subr.mxu0 0.0
    %2880 = vmatpush1.msra.mxu0 0.0
    %2881 = vmatprep.subr.mxu0 0.0
    %2882 = vmatpush1.msra.mxu0 0.0
    %2883 = vmatprep.subr.mxu0 0.0
    %2884 = vmatpush1.msra.mxu0 0.0
    %2885 = vmatprep.subr.mxu0 0.0
    %2886 = vmatpush1.msra.mxu0 0.0
    %2887 = vmatprep.subr.mxu0 0.0
    %2888 = vmatpush1.msra.mxu0 0.0
    %2889 = vmatprep.subr.mxu0 0.0
    %2890 = vmatpush1.msra.mxu0 0.0
    %2891 = vmatprep.subr.mxu0 0.0
    %2892 = vmatpush1.msra.mxu0 0.0
    %2893 = vmatprep.subr.mxu0 0.0
    %2894 = vmatpush1.msra.mxu0 0.0
    %2895 = vmatprep.subr.mxu0 0.0
    %2896 = vmatpush1.msra.mxu0 0.0
    %2897 = vmatprep.subr.mxu0 0.0
    %2898 = vmatpush1.msra.mxu0 0.0
    %2899 = vmatprep.subr.mxu0 0.0
    %2900 = vmatpush1.msra.mxu0 0.0
    %2901 = vmatprep.subr.mxu0 0.0
    %2902 = vmatpush1.msra.mxu0 0.0
    %2903 = vmatprep.subr.mxu0 0.0
    %2904 = vmatpush1.msra.mxu0 0.0
    %2905 = vmatprep.subr.mxu0 0.0
    %2906 = vmatpush1.msra.mxu0 0.0
    %2907 = vmatprep.subr.mxu0 0.0
    %2908 = vmatpush1.msra.mxu0 0.0
    %2909 = vmatprep.subr.mxu0 0.0
    %2910 = vmatpush1.msra.mxu0 0.0
    %2911 = vmatprep.subr.mxu0 0.0
    %2912 = vmatpush1.msra.mxu0 0.0
    %2913 = vmatprep.subr.mxu0 0.0
    %2914 = vmatpush1.msra.mxu0 0.0
    %2915 = vmatprep.subr.mxu0 0.0
    %2916 = vmatpush1.msra.mxu0 0.0
    %2917 = vmatprep.subr.mxu0 0.0
    %2918 = vmatpush1.msra.mxu0 0.0
    %2919 = vmatprep.subr.mxu0 0.0
    %2920 = vmatpush1.msra.mxu0 0.0
    %2921 = vmatprep.subr.mxu0 0.0
    %2922 = vmatpush1.msra.mxu0 0.0
    %2923 = vmatprep.subr.mxu0 0.0
    %2924 = vmatpush1.msra.mxu0 0.0
    %2925 = vmatprep.mubr.f32.mxu0 0.0
    %2926 = vmatmul.mubr.f32.gmra.mrb[0].mxu0 %v2849
    %v2927 = vpop.f32.mrb[0].mxu0
    %v2928 = vadd.f32 0.0, %v2927
    %v2929 = vpop.f32.mrb[0].mxu0
    %2930 = vmatprep.mubr.f32.mxu0 0.0
    %2931 = vmatmul.mubr.f32.gmra.mrb[0].mxu0 %v2851
    %v2932 = vpop.f32.mrb[0].mxu0
    %v2933 = vadd.f32 0.0, %v2932
    %v2934 = vpop.f32.mrb[0].mxu0
    %2935 = vmatprep.mubr.f32.mxu0 0.0
    %2936 = vmatmul.mubr.f32.gmra.mrb[0].mxu0 %v2853
    %v2937 = vpop.f32.mrb[0].mxu0
    %v2938 = vadd.f32 0.0, %v2937
    %v2939 = vpop.f32.mrb[0].mxu0
    %2940 = vmatprep.mubr.f32.mxu0 0.0
    %2941 = vmatmul.mubr.f32.gmra.mrb[0].mxu0 %v2855
    %v2942 = vpop.f32.mrb[0].mxu0
    %v2943 = vadd.f32 0.0, %v2942
    %v2944 = vpop.f32.mrb[0].mxu0
    %2945 = vmatprep.mubr.f32.mxu0 0.0
    %2946 = vmatmul.mubr.f32.gmra.mrb[0].mxu0 %v2857
    %v2947 = vpop.f32.mrb[0].mxu0
    %v2948 = vadd.f32 0.0, %v2947
    %v2949 = vpop.f32.mrb[0].mxu0
    %2950 = vmatprep.mubr.f32.mxu0 0.0
    %2951 = vmatmul.mubr.f32.gmra.mrb[0].mxu0 %v2859
    %v2952 = vpop.f32.mrb[0].mxu0
    %v2953 = vadd.f32 0.0, %v2952
    %v2954 = vpop.f32.mrb[0].mxu0
    %2955 = vdwg.mxu0
    %v2956 = vadd.f32 %v2824, %v2928
    %v2957 = vadd.f32 %v2825, %v2933
    %v2958 = vadd.f32 %v2826, %v2938
    %v2959 = vadd.f32 %v2827, %v2943
    %v2960 = vadd.f32 %v2828, %v2948
    %v2961 = vadd.f32 %v2829, %v2953
    %s2962 = scalar_lea.vmem [#allocation2], 224
    %v2963 = vld [vmem:[%s2962] sm:$0xff]
    %v2964 = vld [vmem:[%s2962 + $0x8] sm:$0xff]
    %v2965 = vld [vmem:[%s2962 + $0x10] sm:$0xff]
    %v2966 = vld [vmem:[%s2962 + $0x18] sm:$0xff]
    %v2967 = vrot.slane %v2065, 7
    %v2968 = vrot.slane %v2066, 7
    %v2969 = vsel %vm1215, %v2967, %v2968
    %v2970 = vrot.slane %v2067, 7
    %v2971 = vsel %vm1215, %v2968, %v2970
    %v2972 = vrot.slane %v2068, 7
    %v2973 = vsel %vm1215, %v2970, %v2972
    %v2974 = vrot.slane %v2069, 7
    %v2975 = vsel %vm1215, %v2972, %v2974
    %v2976 = vrot.slane %v2070, 7
    %v2977 = vsel %vm1215, %v2974, %v2976
    %v2978 = vrot.slane %v2071, 7
    %v2979 = vsel %vm1215, %v2976, %v2978
    %v2980 = vsel %vm2099, %v2969, 0
    %v2982 = vsel %vm2099, %v2971, 0
    %v2984 = vsel %vm2099, %v2973, 0
    %v2986 = vsel %vm2099, %v2975, 0
    %v2988 = vsel %vm2099, %v2977, 0
    %v2990 = vsel %vm2099, %v2979, 0
    %2992 = vmatprep.subr.mxu0 0.0
    %2993 = vmatpush1.msra.mxu0 %v2963
    %2994 = vmatprep.subr.mxu0 0.0
    %2995 = vmatpush1.msra.mxu0 %v2964
    %2996 = vmatprep.subr.mxu0 0.0
    %2997 = vmatpush1.msra.mxu0 %v2965
    %2998 = vmatprep.subr.mxu0 0.0
    %2999 = vmatpush1.msra.mxu0 %v2966
    %3000 = vmatprep.subr.mxu0 0.0
    %3001 = vmatpush1.msra.mxu0 0.0
    %3002 = vmatprep.subr.mxu0 0.0
    %3003 = vmatpush1.msra.mxu0 0.0
    %3004 = vmatprep.subr.mxu0 0.0
    %3005 = vmatpush1.msra.mxu0 0.0
    %3006 = vmatprep.subr.mxu0 0.0
    %3007 = vmatpush1.msra.mxu0 0.0
    %3008 = vmatprep.subr.mxu0 0.0
    %3009 = vmatpush1.msra.mxu0 0.0
    %3010 = vmatprep.subr.mxu0 0.0
    %3011 = vmatpush1.msra.mxu0 0.0
    %3012 = vmatprep.subr.mxu0 0.0
    %3013 = vmatpush1.msra.mxu0 0.0
    %3014 = vmatprep.subr.mxu0 0.0
    %3015 = vmatpush1.msra.mxu0 0.0
    %3016 = vmatprep.subr.mxu0 0.0
    %3017 = vmatpush1.msra.mxu0 0.0
    %3018 = vmatprep.subr.mxu0 0.0
    %3019 = vmatpush1.msra.mxu0 0.0
    %3020 = vmatprep.subr.mxu0 0.0
    %3021 = vmatpush1.msra.mxu0 0.0
    %3022 = vmatprep.subr.mxu0 0.0
    %3023 = vmatpush1.msra.mxu0 0.0
    %3024 = vmatprep.subr.mxu0 0.0
    %3025 = vmatpush1.msra.mxu0 0.0
    %3026 = vmatprep.subr.mxu0 0.0
    %3027 = vmatpush1.msra.mxu0 0.0
    %3028 = vmatprep.subr.mxu0 0.0
    %3029 = vmatpush1.msra.mxu0 0.0
    %3030 = vmatprep.subr.mxu0 0.0
    %3031 = vmatpush1.msra.mxu0 0.0
    %3032 = vmatprep.subr.mxu0 0.0
    %3033 = vmatpush1.msra.mxu0 0.0
    %3034 = vmatprep.subr.mxu0 0.0
    %3035 = vmatpush1.msra.mxu0 0.0
    %3036 = vmatprep.subr.mxu0 0.0
    %3037 = vmatpush1.msra.mxu0 0.0
    %3038 = vmatprep.subr.mxu0 0.0
    %3039 = vmatpush1.msra.mxu0 0.0
    %3040 = vmatprep.subr.mxu0 0.0
    %3041 = vmatpush1.msra.mxu0 0.0
    %3042 = vmatprep.subr.mxu0 0.0
    %3043 = vmatpush1.msra.mxu0 0.0
    %3044 = vmatprep.subr.mxu0 0.0
    %3045 = vmatpush1.msra.mxu0 0.0
    %3046 = vmatprep.subr.mxu0 0.0
    %3047 = vmatpush1.msra.mxu0 0.0
    %3048 = vmatprep.subr.mxu0 0.0
    %3049 = vmatpush1.msra.mxu0 0.0
    %3050 = vmatprep.subr.mxu0 0.0
    %3051 = vmatpush1.msra.mxu0 0.0
    %3052 = vmatprep.subr.mxu0 0.0
    %3053 = vmatpush1.msra.mxu0 0.0
    %3054 = vmatprep.subr.mxu0 0.0
    %3055 = vmatpush1.msra.mxu0 0.0
    %3056 = vmatprep.mubr.f32.mxu0 0.0
    %3057 = vmatmul.mubr.f32.gmra.mrb[0].mxu0 %v2980
    %v3058 = vpop.f32.mrb[0].mxu0
    %v3059 = vadd.f32 0.0, %v3058
    %v3060 = vpop.f32.mrb[0].mxu0
    %3061 = vmatprep.mubr.f32.mxu0 0.0
    %3062 = vmatmul.mubr.f32.gmra.mrb[0].mxu0 %v2982
    %v3063 = vpop.f32.mrb[0].mxu0
    %v3064 = vadd.f32 0.0, %v3063
    %v3065 = vpop.f32.mrb[0].mxu0
    %3066 = vmatprep.mubr.f32.mxu0 0.0
    %3067 = vmatmul.mubr.f32.gmra.mrb[0].mxu0 %v2984
    %v3068 = vpop.f32.mrb[0].mxu0
    %v3069 = vadd.f32 0.0, %v3068
    %v3070 = vpop.f32.mrb[0].mxu0
    %3071 = vmatprep.mubr.f32.mxu0 0.0
    %3072 = vmatmul.mubr.f32.gmra.mrb[0].mxu0 %v2986
    %v3073 = vpop.f32.mrb[0].mxu0
    %v3074 = vadd.f32 0.0, %v3073
    %v3075 = vpop.f32.mrb[0].mxu0
    %3076 = vmatprep.mubr.f32.mxu0 0.0
    %3077 = vmatmul.mubr.f32.gmra.mrb[0].mxu0 %v2988
    %v3078 = vpop.f32.mrb[0].mxu0
    %v3079 = vadd.f32 0.0, %v3078
    %v3080 = vpop.f32.mrb[0].mxu0
    %3081 = vmatprep.mubr.f32.mxu0 0.0
    %3082 = vmatmul.mubr.f32.gmra.mrb[0].mxu0 %v2990
    %v3083 = vpop.f32.mrb[0].mxu0
    %v3084 = vadd.f32 0.0, %v3083
    %v3085 = vpop.f32.mrb[0].mxu0
    %3086 = vdwg.mxu0
    %v3087 = vadd.f32 %v2956, %v3059
    %v3088 = vadd.f32 %v2957, %v3064
    %v3089 = vadd.f32 %v2958, %v3069
    %v3090 = vadd.f32 %v2959, %v3074
    %v3091 = vadd.f32 %v2960, %v3079
    %v3092 = vadd.f32 %v2961, %v3084
    %v3094 = vlaneseq
    %v3095 = vshrl.u32 %v3094, 7
    %v3096 = vsub.s32 0, %v3095
    %v3097 = vrot.slane %v2072, %v3096
    %v3099 = vadd.f32 %v3087, %v3097
    %v3100 = vadd.f32 %v3088, %v3097
    %v3101 = vadd.f32 %v3089, %v3097
    %v3102 = vadd.f32 %v3090, %v3097
    %v3103 = vadd.f32 %v3091, %v3097
    %v3104 = vadd.f32 %v3092, %v3097
    %v3105 = vmax.f32 %v3099, 0.0
    %v3106 = vmax.f32 %v3100, 0.0
    %v3107 = vmax.f32 %v3101, 0.0
    %v3108 = vmax.f32 %v3102, 0.0
    %v3109 = vmax.f32 %v3103, 0.0
    %v3110 = vmax.f32 %v3104, 0.0
    %vm3111 = vcmp.ge.s32.totalorder %v1407, 40
    %vm3112 = vcmp.ge.s32.totalorder %v1408, 40
    %vm3113 = vcmp.ge.s32.totalorder %v1409, 40
    %vm3114 = vcmp.ge.s32.totalorder %v1410, 40
    %vm3115 = vcmp.ge.s32.totalorder %v1411, 40
    %vm3116 = vcmp.ge.s32.totalorder %v1412, 40
    %vm3117 = vcmp.ge.s32.totalorder %v1413, 40
    %vm3118 = vcmp.ge.s32.totalorder %v1414, 40
    %vm3119 = vcmp.ge.s32.totalorder %v1415, 40
    %vm3120 = vcmp.ge.s32.totalorder %v1416, 40
    %v3121 = vsub.s32 %v1407, 40
    %v3122 = vsub.s32 %v1408, 40
    %v3123 = vsub.s32 %v1409, 40
    %v3124 = vsub.s32 %v1410, 40
    %v3125 = vsub.s32 %v1411, 40
    %v3126 = vsub.s32 %v1413, 40
    %v3127 = vsub.s32 %v1414, 40
    %v3128 = vsub.s32 %v1415, 40
    %v3129 = vsub.s32 %v1416, 40
    %v3130 = vsel %vm3111, %v3121, %v1407
    %v3131 = vsel %vm3112, %v3122, %v1408
    %v3132 = vsel %vm3113, %v3123, %v1409
    %v3133 = vsel %vm3114, %v3124, %v1410
    %v3134 = vsel %vm3115, %v3125, %v1411
    %v3135 = vsel %vm3116, %v1407, %v1412
    %v3136 = vsel %vm3117, %v3126, %v1413
    %v3137 = vsel %vm3118, %v3127, %v1414
    %v3138 = vsel %vm3119, %v3128, %v1415
    %v3139 = vsel %vm3120, %v3129, %v1416
    %v3140 = vsub.s32 %v3130, 4
    %v3141 = vsub.s32 %v3131, 4
    %v3142 = vsub.s32 %v3132, 4
    %v3143 = vsub.s32 %v3133, 4
    %v3144 = vsub.s32 %v3134, 4
    %v3145 = vsub.s32 %v3135, 4
    %v3146 = vsub.s32 %v3136, 4
    %v3147 = vsub.s32 %v3137, 4
    %v3148 = vsub.s32 %v3138, 4
    %v3149 = vsub.s32 %v3139, 4
    %v3150 = vmul.u32 %v3140, 2
    %v3151 = vmul.u32 %v3141, 2
    %v3152 = vmul.u32 %v3142, 2
    %v3153 = vmul.u32 %v3143, 2
    %v3154 = vmul.u32 %v3144, 2
    %v3155 = vmul.u32 %v3145, 2
    %v3156 = vmul.u32 %v3146, 2
    %v3157 = vmul.u32 %v3147, 2
    %v3158 = vmul.u32 %v3148, 2
    %v3159 = vmul.u32 %v3149, 2
    %v3160 = vsub.s32 %v3150, 1
    %v3161 = vsub.s32 %v3151, 1
    %v3162 = vsub.s32 %v3152, 1
    %v3163 = vsub.s32 %v3153, 1
    %v3164 = vsub.s32 %v3154, 1
    %v3165 = vsub.s32 %v3155, 1
    %v3166 = vsub.s32 %v3156, 1
    %v3167 = vsub.s32 %v3157, 1
    %v3168 = vsub.s32 %v3158, 1
    %v3169 = vsub.s32 %v3159, 1
    %v3170 = vsel %vm3111, %v3150, %v3160
    %v3171 = vsel %vm3112, %v3151, %v3161
    %v3172 = vsel %vm3113, %v3152, %v3162
    %v3173 = vsel %vm3114, %v3153, %v3163
    %v3174 = vsel %vm3115, %v3154, %v3164
    %v3175 = vsel %vm3116, %v3155, %v3165
    %v3176 = vsel %vm3117, %v3156, %v3166
    %v3177 = vsel %vm3118, %v3157, %v3167
    %v3178 = vsel %vm3119, %v3158, %v3168
    %v3179 = vsel %vm3120, %v3159, %v3169
    %vm3180 = vcmp.ge.s32.totalorder %v3140, 0
    %vm3181 = vcmp.ge.s32.totalorder %v3141, 0
    %vm3182 = vcmp.ge.s32.totalorder %v3142, 0
    %vm3183 = vcmp.ge.s32.totalorder %v3143, 0
    %vm3184 = vcmp.ge.s32.totalorder %v3144, 0
    %vm3185 = vcmp.ge.s32.totalorder %v3145, 0
    %vm3186 = vcmp.ge.s32.totalorder %v3146, 0
    %vm3187 = vcmp.ge.s32.totalorder %v3147, 0
    %vm3188 = vcmp.ge.s32.totalorder %v3148, 0
    %vm3189 = vcmp.ge.s32.totalorder %v3149, 0
    %vm3190 = vcmp.lt.s32.totalorder %v3140, 10
    %vm3191 = vcmp.lt.s32.totalorder %v3141, 10
    %vm3192 = vcmp.lt.s32.totalorder %v3142, 10
    %vm3193 = vcmp.lt.s32.totalorder %v3143, 10
    %vm3194 = vcmp.lt.s32.totalorder %v3144, 10
    %vm3195 = vcmp.lt.s32.totalorder %v3145, 10
    %vm3196 = vcmp.lt.s32.totalorder %v3146, 10
    %vm3197 = vcmp.lt.s32.totalorder %v3147, 10
    %vm3198 = vcmp.lt.s32.totalorder %v3148, 10
    %vm3199 = vcmp.lt.s32.totalorder %v3149, 10
    %vm3200 = vmand %vm3180, %vm3190
    %vm3201 = vmand %vm3181, %vm3191
    %vm3202 = vmand %vm3182, %vm3192
    %vm3203 = vmand %vm3183, %vm3193
    %vm3204 = vmand %vm3184, %vm3194
    %vm3205 = vmand %vm3185, %vm3195
    %vm3206 = vmand %vm3186, %vm3196
    %vm3207 = vmand %vm3187, %vm3197
    %vm3208 = vmand %vm3188, %vm3198
    %vm3209 = vmand %vm3189, %vm3199
    %vm3210 = vcmp.ge.s32.totalorder %v3170, 0
    %vm3211 = vcmp.ge.s32.totalorder %v3171, 0
    %vm3212 = vcmp.ge.s32.totalorder %v3172, 0
    %vm3213 = vcmp.ge.s32.totalorder %v3173, 0
    %vm3214 = vcmp.ge.s32.totalorder %v3174, 0
    %vm3215 = vcmp.ge.s32.totalorder %v3175, 0
    %vm3216 = vcmp.ge.s32.totalorder %v3176, 0
    %vm3217 = vcmp.ge.s32.totalorder %v3177, 0
    %vm3218 = vcmp.ge.s32.totalorder %v3178, 0
    %vm3219 = vcmp.ge.s32.totalorder %v3179, 0
    %vm3220 = vmand %vm3200, %vm3210
    %vm3221 = vmand %vm3201, %vm3211
    %vm3222 = vmand %vm3202, %vm3212
    %vm3223 = vmand %vm3203, %vm3213
    %vm3224 = vmand %vm3204, %vm3214
    %vm3225 = vmand %vm3205, %vm3215
    %vm3226 = vmand %vm3206, %vm3216
    %vm3227 = vmand %vm3207, %vm3217
    %vm3228 = vmand %vm3208, %vm3218
    %vm3229 = vmand %vm3209, %vm3219
    %vm3230 = vcmp.lt.s32.totalorder %v3170, 18
    %vm3231 = vcmp.lt.s32.totalorder %v3171, 18
    %vm3232 = vcmp.lt.s32.totalorder %v3172, 18
    %vm3233 = vcmp.lt.s32.totalorder %v3173, 18
    %vm3234 = vcmp.lt.s32.totalorder %v3174, 18
    %vm3235 = vcmp.lt.s32.totalorder %v3175, 18
    %vm3236 = vcmp.lt.s32.totalorder %v3176, 18
    %vm3237 = vcmp.lt.s32.totalorder %v3177, 18
    %vm3238 = vcmp.lt.s32.totalorder %v3178, 18
    %vm3239 = vcmp.lt.s32.totalorder %v3179, 18
    %vm3240 = vmand %vm3220, %vm3230
    %vm3241 = vmand %vm3221, %vm3231
    %vm3242 = vmand %vm3222, %vm3232
    %vm3243 = vmand %vm3223, %vm3233
    %vm3244 = vmand %vm3224, %vm3234
    %vm3245 = vmand %vm3225, %vm3235
    %vm3246 = vmand %vm3226, %vm3236
    %vm3247 = vmand %vm3227, %vm3237
    %vm3248 = vmand %vm3228, %vm3238
    %vm3249 = vmand %vm3229, %vm3239
    %vm3250 = vcmp.eq.s32.totalorder %v1422, %v3170
    %vm3251 = vcmp.eq.s32.totalorder %v1422, %v3171
    %vm3252 = vcmp.eq.s32.totalorder %v1422, %v3172
    %vm3253 = vcmp.eq.s32.totalorder %v1422, %v3173
    %vm3254 = vcmp.eq.s32.totalorder %v1422, %v3174
    %vm3255 = vcmp.eq.s32.totalorder %v1422, %v3175
    %vm3256 = vcmp.eq.s32.totalorder %v1422, %v3176
    %vm3257 = vcmp.eq.s32.totalorder %v1422, %v3177
    %vm3258 = vcmp.eq.s32.totalorder %v1422, %v3178
    %vm3259 = vcmp.eq.s32.totalorder %v1422, %v3179
    %vm3260 = vmand %vm3240, %vm3250
    %vm3261 = vmand %vm3241, %vm3251
    %vm3262 = vmand %vm3242, %vm3252
    %vm3263 = vmand %vm3243, %vm3253
    %vm3264 = vmand %vm3244, %vm3254
    %vm3265 = vmand %vm3245, %vm3255
    %vm3266 = vmand %vm3246, %vm3256
    %vm3267 = vmand %vm3247, %vm3257
    %vm3268 = vmand %vm3248, %vm3258
    %vm3269 = vmand %vm3249, %vm3259
    %v3270 = vsub.s32 %v3130, 22
    %v3271 = vsub.s32 %v3131, 22
    %v3272 = vsub.s32 %v3132, 22
    %v3273 = vsub.s32 %v3133, 22
    %v3274 = vsub.s32 %v3134, 22
    %v3275 = vsub.s32 %v3135, 22
    %v3276 = vsub.s32 %v3136, 22
    %v3277 = vsub.s32 %v3137, 22
    %v3278 = vsub.s32 %v3138, 22
    %v3279 = vsub.s32 %v3139, 22
    %v3280 = vmul.u32 %v3270, 2
    %v3281 = vmul.u32 %v3271, 2
    %v3282 = vmul.u32 %v3272, 2
    %v3283 = vmul.u32 %v3273, 2
    %v3284 = vmul.u32 %v3274, 2
    %v3285 = vmul.u32 %v3275, 2
    %v3286 = vmul.u32 %v3276, 2
    %v3287 = vmul.u32 %v3277, 2
    %v3288 = vmul.u32 %v3278, 2
    %v3289 = vmul.u32 %v3279, 2
    %v3290 = vsub.s32 %v3280, 1
    %v3291 = vsub.s32 %v3281, 1
    %v3292 = vsub.s32 %v3282, 1
    %v3293 = vsub.s32 %v3283, 1
    %v3294 = vsub.s32 %v3284, 1
    %v3295 = vsub.s32 %v3285, 1
    %v3296 = vsub.s32 %v3286, 1
    %v3297 = vsub.s32 %v3287, 1
    %v3298 = vsub.s32 %v3288, 1
    %v3299 = vsub.s32 %v3289, 1
    %v3300 = vsel %vm3111, %v3280, %v3290
    %v3301 = vsel %vm3112, %v3281, %v3291
    %v3302 = vsel %vm3113, %v3282, %v3292
    %v3303 = vsel %vm3114, %v3283, %v3293
    %v3304 = vsel %vm3115, %v3284, %v3294
    %v3305 = vsel %vm3116, %v3285, %v3295
    %v3306 = vsel %vm3117, %v3286, %v3296
    %v3307 = vsel %vm3118, %v3287, %v3297
    %v3308 = vsel %vm3119, %v3288, %v3298
    %v3309 = vsel %vm3120, %v3289, %v3299
    %vm3310 = vcmp.ge.s32.totalorder %v3270, 0
    %vm3311 = vcmp.ge.s32.totalorder %v3271, 0
    %vm3312 = vcmp.ge.s32.totalorder %v3272, 0
    %vm3313 = vcmp.ge.s32.totalorder %v3273, 0
    %vm3314 = vcmp.ge.s32.totalorder %v3274, 0
    %vm3315 = vcmp.ge.s32.totalorder %v3275, 0
    %vm3316 = vcmp.ge.s32.totalorder %v3276, 0
    %vm3317 = vcmp.ge.s32.totalorder %v3277, 0
    %vm3318 = vcmp.ge.s32.totalorder %v3278, 0
    %vm3319 = vcmp.ge.s32.totalorder %v3279, 0
    %vm3320 = vcmp.lt.s32.totalorder %v3270, 10
    %vm3321 = vcmp.lt.s32.totalorder %v3271, 10
    %vm3322 = vcmp.lt.s32.totalorder %v3272, 10
    %vm3323 = vcmp.lt.s32.totalorder %v3273, 10
    %vm3324 = vcmp.lt.s32.totalorder %v3274, 10
    %vm3325 = vcmp.lt.s32.totalorder %v3275, 10
    %vm3326 = vcmp.lt.s32.totalorder %v3276, 10
    %vm3327 = vcmp.lt.s32.totalorder %v3277, 10
    %vm3328 = vcmp.lt.s32.totalorder %v3278, 10
    %vm3329 = vcmp.lt.s32.totalorder %v3279, 10
    %vm3330 = vmand %vm3310, %vm3320
    %vm3331 = vmand %vm3311, %vm3321
    %vm3332 = vmand %vm3312, %vm3322
    %vm3333 = vmand %vm3313, %vm3323
    %vm3334 = vmand %vm3314, %vm3324
    %vm3335 = vmand %vm3315, %vm3325
    %vm3336 = vmand %vm3316, %vm3326
    %vm3337 = vmand %vm3317, %vm3327
    %vm3338 = vmand %vm3318, %vm3328
    %vm3339 = vmand %vm3319, %vm3329
    %vm3340 = vcmp.ge.s32.totalorder %v3300, 0
    %vm3341 = vcmp.ge.s32.totalorder %v3301, 0
    %vm3342 = vcmp.ge.s32.totalorder %v3302, 0
    %vm3343 = vcmp.ge.s32.totalorder %v3303, 0
    %vm3344 = vcmp.ge.s32.totalorder %v3304, 0
    %vm3345 = vcmp.ge.s32.totalorder %v3305, 0
    %vm3346 = vcmp.ge.s32.totalorder %v3306, 0
    %vm3347 = vcmp.ge.s32.totalorder %v3307, 0
    %vm3348 = vcmp.ge.s32.totalorder %v3308, 0
    %vm3349 = vcmp.ge.s32.totalorder %v3309, 0
    %vm3350 = vmand %vm3330, %vm3340
    %vm3351 = vmand %vm3331, %vm3341
    %vm3352 = vmand %vm3332, %vm3342
    %vm3353 = vmand %vm3333, %vm3343
    %vm3354 = vmand %vm3334, %vm3344
    %vm3355 = vmand %vm3335, %vm3345
    %vm3356 = vmand %vm3336, %vm3346
    %vm3357 = vmand %vm3337, %vm3347
    %vm3358 = vmand %vm3338, %vm3348
    %vm3359 = vmand %vm3339, %vm3349
    %vm3360 = vcmp.lt.s32.totalorder %v3300, 18
    %vm3361 = vcmp.lt.s32.totalorder %v3301, 18
    %vm3362 = vcmp.lt.s32.totalorder %v3302, 18
    %vm3363 = vcmp.lt.s32.totalorder %v3303, 18
    %vm3364 = vcmp.lt.s32.totalorder %v3304, 18
    %vm3365 = vcmp.lt.s32.totalorder %v3305, 18
    %vm3366 = vcmp.lt.s32.totalorder %v3306, 18
    %vm3367 = vcmp.lt.s32.totalorder %v3307, 18
    %vm3368 = vcmp.lt.s32.totalorder %v3308, 18
    %vm3369 = vcmp.lt.s32.totalorder %v3309, 18
    %vm3370 = vmand %vm3350, %vm3360
    %vm3371 = vmand %vm3351, %vm3361
    %vm3372 = vmand %vm3352, %vm3362
    %vm3373 = vmand %vm3353, %vm3363
    %vm3374 = vmand %vm3354, %vm3364
    %vm3375 = vmand %vm3355, %vm3365
    %vm3376 = vmand %vm3356, %vm3366
    %vm3377 = vmand %vm3357, %vm3367
    %vm3378 = vmand %vm3358, %vm3368
    %vm3379 = vmand %vm3359, %vm3369
    %v3380 = vadd.s32 %v3300, 25
    %v3381 = vadd.s32 %v3301, 25
    %v3382 = vadd.s32 %v3302, 25
    %v3383 = vadd.s32 %v3303, 25
    %v3384 = vadd.s32 %v3304, 25
    %v3385 = vadd.s32 %v3305, 25
    %v3386 = vadd.s32 %v3306, 25
    %v3387 = vadd.s32 %v3307, 25
    %v3388 = vadd.s32 %v3308, 25
    %v3389 = vadd.s32 %v3309, 25
    %vm3390 = vcmp.eq.s32.totalorder %v1422, %v3380
    %vm3391 = vcmp.eq.s32.totalorder %v1422, %v3381
    %vm3392 = vcmp.eq.s32.totalorder %v1422, %v3382
    %vm3393 = vcmp.eq.s32.totalorder %v1422, %v3383
    %vm3394 = vcmp.eq.s32.totalorder %v1422, %v3384
    %vm3395 = vcmp.eq.s32.totalorder %v1422, %v3385
    %vm3396 = vcmp.eq.s32.totalorder %v1422, %v3386
    %vm3397 = vcmp.eq.s32.totalorder %v1422, %v3387
    %vm3398 = vcmp.eq.s32.totalorder %v1422, %v3388
    %vm3399 = vcmp.eq.s32.totalorder %v1422, %v3389
    %vm3400 = vmand %vm3370, %vm3390
    %vm3401 = vmand %vm3371, %vm3391
    %vm3402 = vmand %vm3372, %vm3392
    %vm3403 = vmand %vm3373, %vm3393
    %vm3404 = vmand %vm3374, %vm3394
    %vm3405 = vmand %vm3375, %vm3395
    %vm3406 = vmand %vm3376, %vm3396
    %vm3407 = vmand %vm3377, %vm3397
    %vm3408 = vmand %vm3378, %vm3398
    %vm3409 = vmand %vm3379, %vm3399
    %vm3410 = vmor %vm3260, %vm3400
    %vm3411 = vmor %vm3261, %vm3401
    %vm3412 = vmor %vm3262, %vm3402
    %vm3413 = vmor %vm3263, %vm3403
    %vm3414 = vmor %vm3264, %vm3404
    %vm3415 = vmor %vm3265, %vm3405
    %vm3416 = vmor %vm3266, %vm3406
    %vm3417 = vmor %vm3267, %vm3407
    %vm3418 = vmor %vm3268, %vm3408
    %vm3419 = vmor %vm3269, %vm3409
    %v3420 = vsel %vm3410, 1, 0
    %v3421 = vsel %vm3411, 1, 0
    %v3422 = vsel %vm3412, 1, 0
    %v3423 = vsel %vm3413, 1, 0
    %v3424 = vsel %vm3414, 1, 0
    %v3425 = vsel %vm3415, 1, 0
    %v3426 = vsel %vm3416, 1, 0
    %v3427 = vsel %vm3417, 1, 0
    %v3428 = vsel %vm3418, 1, 0
    %v3429 = vsel %vm3419, 1, 0
    %v3430 = vcvt.s32.f32 %v3420
    %v3431 = vcvt.s32.f32 %v3421
    %v3432 = vcvt.s32.f32 %v3422
    %v3433 = vcvt.s32.f32 %v3423
    %v3434 = vcvt.s32.f32 %v3424
    %v3435 = vcvt.s32.f32 %v3425
    %v3436 = vcvt.s32.f32 %v3426
    %v3437 = vcvt.s32.f32 %v3427
    %v3438 = vcvt.s32.f32 %v3428
    %v3439 = vcvt.s32.f32 %v3429
    %vm3440 = vcmask 351232
    %v3442 = vsel %vm3440, %v3430, 0
    %v3445 = vsel %vm3440, %v3431, 0
    %v3448 = vsel %vm3440, %v3432, 0
    %v3451 = vsel %vm3440, %v3433, 0
    %v3454 = vsel %vm3440, %v3434, 0
    %v3457 = vsel %vm3440, %v3435, 0
    %v3460 = vsel %vm3440, %v3436, 0
    %v3463 = vsel %vm3440, %v3437, 0
    %v3466 = vsel %vm3440, %v3438, 0
    %v3469 = vsel %vm3440, %v3439, 0
    %v3472 = vsel %vm881, %v3110, 0
    %3474 = vmatprep.subr.mxu0 0.0
    %3475 = vmatpush1.msra.mxu0 %v3105
    %3476 = vmatprep.subr.mxu0 0.0
    %3477 = vmatpush1.msra.mxu0 %v3106
    %3478 = vmatprep.subr.mxu0 0.0
    %3479 = vmatpush1.msra.mxu0 %v3107
    %3480 = vmatprep.subr.mxu0 0.0
    %3481 = vmatpush1.msra.mxu0 %v3108
    %3482 = vmatprep.subr.mxu0 0.0
    %3483 = vmatpush1.msra.mxu0 %v3109
    %3484 = vmatprep.subr.mxu0 0.0
    %3485 = vmatpush1.msra.mxu0 %v3472
    %3486 = vmatprep.subr.mxu0 0.0
    %3487 = vmatpush1.msra.mxu0 0.0
    %3488 = vmatprep.subr.mxu0 0.0
    %3489 = vmatpush1.msra.mxu0 0.0
    %3490 = vmatprep.subr.mxu0 0.0
    %3491 = vmatpush1.msra.mxu0 0.0
    %3492 = vmatprep.subr.mxu0 0.0
    %3493 = vmatpush1.msra.mxu0 0.0
    %3494 = vmatprep.subr.mxu0 0.0
    %3495 = vmatpush1.msra.mxu0 0.0
    %3496 = vmatprep.subr.mxu0 0.0
    %3497 = vmatpush1.msra.mxu0 0.0
    %3498 = vmatprep.subr.mxu0 0.0
    %3499 = vmatpush1.msra.mxu0 0.0
    %3500 = vmatprep.subr.mxu0 0.0
    %3501 = vmatpush1.msra.mxu0 0.0
    %3502 = vmatprep.subr.mxu0 0.0
    %3503 = vmatpush1.msra.mxu0 0.0
    %3504 = vmatprep.subr.mxu0 0.0
    %3505 = vmatpush1.msra.mxu0 0.0
    %3506 = vmatprep.subr.mxu0 0.0
    %3507 = vmatpush1.msra.mxu0 0.0
    %3508 = vmatprep.subr.mxu0 0.0
    %3509 = vmatpush1.msra.mxu0 0.0
    %3510 = vmatprep.subr.mxu0 0.0
    %3511 = vmatpush1.msra.mxu0 0.0
    %3512 = vmatprep.subr.mxu0 0.0
    %3513 = vmatpush1.msra.mxu0 0.0
    %3514 = vmatprep.subr.mxu0 0.0
    %3515 = vmatpush1.msra.mxu0 0.0
    %3516 = vmatprep.subr.mxu0 0.0
    %3517 = vmatpush1.msra.mxu0 0.0
    %3518 = vmatprep.subr.mxu0 0.0
    %3519 = vmatpush1.msra.mxu0 0.0
    %3520 = vmatprep.subr.mxu0 0.0
    %3521 = vmatpush1.msra.mxu0 0.0
    %3522 = vmatprep.subr.mxu0 0.0
    %3523 = vmatpush1.msra.mxu0 0.0
    %3524 = vmatprep.subr.mxu0 0.0
    %3525 = vmatpush1.msra.mxu0 0.0
    %3526 = vmatprep.subr.mxu0 0.0
    %3527 = vmatpush1.msra.mxu0 0.0
    %3528 = vmatprep.subr.mxu0 0.0
    %3529 = vmatpush1.msra.mxu0 0.0
    %3530 = vmatprep.subr.mxu0 0.0
    %3531 = vmatpush1.msra.mxu0 0.0
    %3532 = vmatprep.subr.mxu0 0.0
    %3533 = vmatpush1.msra.mxu0 0.0
    %3534 = vmatprep.subr.mxu0 0.0
    %3535 = vmatpush1.msra.mxu0 0.0
    %3536 = vmatprep.subr.mxu0 0.0
    %3537 = vmatpush1.msra.mxu0 0.0
    %3538 = vmatprep.mubr.f32.mxu0 0.0
    %3539 = vmatmul.mubr.f32.gmra.mrb[0].mxu0 %v3442
    %v3540 = vpop.f32.mrb[0].mxu0
    %v3541 = vadd.f32 0.0, %v3540
    %v3542 = vpop.f32.mrb[0].mxu0
    %3543 = vmatprep.mubr.f32.mxu0 0.0
    %3544 = vmatmul.mubr.f32.gmra.mrb[0].mxu0 %v3445
    %v3545 = vpop.f32.mrb[0].mxu0
    %v3546 = vadd.f32 0.0, %v3545
    %v3547 = vpop.f32.mrb[0].mxu0
    %3548 = vmatprep.mubr.f32.mxu0 0.0
    %3549 = vmatmul.mubr.f32.gmra.mrb[0].mxu0 %v3448
    %v3550 = vpop.f32.mrb[0].mxu0
    %v3551 = vadd.f32 0.0, %v3550
    %v3552 = vpop.f32.mrb[0].mxu0
    %3553 = vmatprep.mubr.f32.mxu0 0.0
    %3554 = vmatmul.mubr.f32.gmra.mrb[0].mxu0 %v3451
    %v3555 = vpop.f32.mrb[0].mxu0
    %v3556 = vadd.f32 0.0, %v3555
    %v3557 = vpop.f32.mrb[0].mxu0
    %3558 = vmatprep.mubr.f32.mxu0 0.0
    %3559 = vmatmul.mubr.f32.gmra.mrb[0].mxu0 %v3454
    %v3560 = vpop.f32.mrb[0].mxu0
    %v3561 = vadd.f32 0.0, %v3560
    %v3562 = vpop.f32.mrb[0].mxu0
    %3563 = vmatprep.mubr.f32.mxu0 0.0
    %3564 = vmatmul.mubr.f32.gmra.mrb[0].mxu0 %v3457
    %v3565 = vpop.f32.mrb[0].mxu0
    %v3566 = vadd.f32 0.0, %v3565
    %v3567 = vpop.f32.mrb[0].mxu0
    %3568 = vmatprep.mubr.f32.mxu0 0.0
    %3569 = vmatmul.mubr.f32.gmra.mrb[0].mxu0 %v3460
    %v3570 = vpop.f32.mrb[0].mxu0
    %v3571 = vadd.f32 0.0, %v3570
    %v3572 = vpop.f32.mrb[0].mxu0
    %3573 = vmatprep.mubr.f32.mxu0 0.0
    %3574 = vmatmul.mubr.f32.gmra.mrb[0].mxu0 %v3463
    %v3575 = vpop.f32.mrb[0].mxu0
    %v3576 = vadd.f32 0.0, %v3575
    %v3577 = vpop.f32.mrb[0].mxu0
    %3578 = vmatprep.mubr.f32.mxu0 0.0
    %3579 = vmatmul.mubr.f32.gmra.mrb[0].mxu0 %v3466
    %v3580 = vpop.f32.mrb[0].mxu0
    %v3581 = vadd.f32 0.0, %v3580
    %v3582 = vpop.f32.mrb[0].mxu0
    %3583 = vmatprep.mubr.f32.mxu0 0.0
    %3584 = vmatmul.mubr.f32.gmra.mrb[0].mxu0 %v3469
    %v3585 = vpop.f32.mrb[0].mxu0
    %v3586 = vadd.f32 0.0, %v3585
    %v3587 = vpop.f32.mrb[0].mxu0
    %3588 = vdwg.mxu0
    %v3589 = vmax.f32 %v3541, %v3566
    %v3590 = vmax.f32 %v3546, %v3571
    %v3591 = vmax.f32 %v3551, %v3576
    %v3592 = vmax.f32 %v3556, %v3581
    %v3593 = vmax.f32 %v3561, %v3586
    %v3594 = vld [vmem:[%s6] sm:$0x1]
    %v3595 = vld [vmem:[#allocation5] sm:$0xff]
    %v3596 = vld [vmem:[#allocation5 + $0x8] sm:$0xff]
    %v3597 = vld [vmem:[#allocation5 + $0x10] sm:$0xff]
    %v3598 = vld [vmem:[#allocation5 + $0x18] sm:$0xff]
    %v3599 = vld [vmem:[#allocation5 + $0x20] sm:$0xff]
    %v3600 = vld [vmem:[#allocation5 + $0x28] sm:$0xff]
    %v3601 = vld [vmem:[#allocation5 + $0x30] sm:$0xff]
    %v3602 = vld [vmem:[#allocation5 + $0x38] sm:$0xff]
    %s3603 = scalar_lea.vmem [#allocation5], 64
    %v3604 = vld [vmem:[%s3603] sm:$0xff]
    %v3605 = vld [vmem:[%s3603 + $0x8] sm:$0xff]
    %v3606 = vld [vmem:[%s3603 + $0x10] sm:$0xff]
    %v3607 = vld [vmem:[%s3603 + $0x18] sm:$0xff]
    %v3608 = vld [vmem:[%s3603 + $0x20] sm:$0xff]
    %v3609 = vld [vmem:[%s3603 + $0x28] sm:$0xff]
    %v3610 = vld [vmem:[%s3603 + $0x30] sm:$0xff]
    %v3611 = vld [vmem:[%s3603 + $0x38] sm:$0xff]
    %v3616 = vrot.slane %v3589, 1
    %v3617 = vrot.slane %v3590, 1
    %v3618 = vsel %vm87, %v3616, %v3617
    %v3619 = vrot.slane %v3591, 1
    %v3620 = vsel %vm87, %v3617, %v3619
    %v3621 = vrot.slane %v3592, 1
    %v3622 = vsel %vm87, %v3619, %v3621
    %vm3623 = vcmask 523264
    %v3624 = vsel %vm3623, %v3618, 0
    %v3626 = vsel %vm3623, %v3620, 0
    %v3628 = vsel %vm3623, %v3622, 0
    %v3630 = vsel %vm3623, %v3621, 0
    %3632 = vmatprep.subr.mxu0 0.0
    %3633 = vmatpush1.msra.mxu0 %v3604
    %3634 = vmatprep.subr.mxu0 0.0
    %3635 = vmatpush1.msra.mxu0 %v3605
    %3636 = vmatprep.subr.mxu0 0.0
    %3637 = vmatpush1.msra.mxu0 %v3606
    %3638 = vmatprep.subr.mxu0 0.0
    %3639 = vmatpush1.msra.mxu0 %v3607
    %3640 = vmatprep.subr.mxu0 0.0
    %3641 = vmatpush1.msra.mxu0 %v3608
    %3642 = vmatprep.subr.mxu0 0.0
    %3643 = vmatpush1.msra.mxu0 %v3609
    %3644 = vmatprep.subr.mxu0 0.0
    %3645 = vmatpush1.msra.mxu0 %v3610
    %3646 = vmatprep.subr.mxu0 0.0
    %3647 = vmatpush1.msra.mxu0 %v3611
    %3648 = vmatprep.subr.mxu0 0.0
    %3649 = vmatpush1.msra.mxu0 0.0
    %3650 = vmatprep.subr.mxu0 0.0
    %3651 = vmatpush1.msra.mxu0 0.0
    %3652 = vmatprep.subr.mxu0 0.0
    %3653 = vmatpush1.msra.mxu0 0.0
    %3654 = vmatprep.subr.mxu0 0.0
    %3655 = vmatpush1.msra.mxu0 0.0
    %3656 = vmatprep.subr.mxu0 0.0
    %3657 = vmatpush1.msra.mxu0 0.0
    %3658 = vmatprep.subr.mxu0 0.0
    %3659 = vmatpush1.msra.mxu0 0.0
    %3660 = vmatprep.subr.mxu0 0.0
    %3661 = vmatpush1.msra.mxu0 0.0
    %3662 = vmatprep.subr.mxu0 0.0
    %3663 = vmatpush1.msra.mxu0 0.0
    %3664 = vmatprep.subr.mxu0 0.0
    %3665 = vmatpush1.msra.mxu0 0.0
    %3666 = vmatprep.subr.mxu0 0.0
    %3667 = vmatpush1.msra.mxu0 0.0
    %3668 = vmatprep.subr.mxu0 0.0
    %3669 = vmatpush1.msra.mxu0 0.0
    %3670 = vmatprep.subr.mxu0 0.0
    %3671 = vmatpush1.msra.mxu0 0.0
    %3672 = vmatprep.subr.mxu0 0.0
    %3673 = vmatpush1.msra.mxu0 0.0
    %3674 = vmatprep.subr.mxu0 0.0
    %3675 = vmatpush1.msra.mxu0 0.0
    %3676 = vmatprep.subr.mxu0 0.0
    %3677 = vmatpush1.msra.mxu0 0.0
    %3678 = vmatprep.subr.mxu0 0.0
    %3679 = vmatpush1.msra.mxu0 0.0
    %3680 = vmatprep.subr.mxu0 0.0
    %3681 = vmatpush1.msra.mxu0 0.0
    %3682 = vmatprep.subr.mxu0 0.0
    %3683 = vmatpush1.msra.mxu0 0.0
    %3684 = vmatprep.subr.mxu0 0.0
    %3685 = vmatpush1.msra.mxu0 0.0
    %3686 = vmatprep.subr.mxu0 0.0
    %3687 = vmatpush1.msra.mxu0 0.0
    %3688 = vmatprep.subr.mxu0 0.0
    %3689 = vmatpush1.msra.mxu0 0.0
    %3690 = vmatprep.subr.mxu0 0.0
    %3691 = vmatpush1.msra.mxu0 0.0
    %3692 = vmatprep.subr.mxu0 0.0
    %3693 = vmatpush1.msra.mxu0 0.0
    %3694 = vmatprep.subr.mxu0 0.0
    %3695 = vmatpush1.msra.mxu0 0.0
    %3696 = vmatprep.mubr.f32.mxu0 0.0
    %3697 = vmatmul.mubr.f32.gmra.mrb[0].mxu0 %v3624
    %v3698 = vpop.f32.mrb[0].mxu0
    %v3699 = vadd.f32 0.0, %v3698
    %v3700 = vpop.f32.mrb[0].mxu0
    %3701 = vmatprep.mubr.f32.mxu0 0.0
    %3702 = vmatmul.mubr.f32.gmra.mrb[0].mxu0 %v3626
    %v3703 = vpop.f32.mrb[0].mxu0
    %v3704 = vadd.f32 0.0, %v3703
    %v3705 = vpop.f32.mrb[0].mxu0
    %3706 = vmatprep.mubr.f32.mxu0 0.0
    %3707 = vmatmul.mubr.f32.gmra.mrb[0].mxu0 %v3628
    %v3708 = vpop.f32.mrb[0].mxu0
    %v3709 = vadd.f32 0.0, %v3708
    %v3710 = vpop.f32.mrb[0].mxu0
    %3711 = vmatprep.mubr.f32.mxu0 0.0
    %3712 = vmatmul.mubr.f32.gmra.mrb[0].mxu0 %v3630
    %v3713 = vpop.f32.mrb[0].mxu0
    %v3714 = vadd.f32 0.0, %v3713
    %v3715 = vpop.f32.mrb[0].mxu0
    %3716 = vdwg.mxu0
    %v3717 = vsel %vm3623, %v3589, 0
    %v3719 = vsel %vm3623, %v3590, 0
    %v3721 = vsel %vm3623, %v3591, 0
    %v3723 = vsel %vm3623, %v3592, 0
    %3725 = vmatprep.subr.mxu0 0.0
    %3726 = vmatpush1.msra.mxu0 %v3595
    %3727 = vmatprep.subr.mxu0 0.0
    %3728 = vmatpush1.msra.mxu0 %v3596
    %3729 = vmatprep.subr.mxu0 0.0
    %3730 = vmatpush1.msra.mxu0 %v3597
    %3731 = vmatprep.subr.mxu0 0.0
    %3732 = vmatpush1.msra.mxu0 %v3598
    %3733 = vmatprep.subr.mxu0 0.0
    %3734 = vmatpush1.msra.mxu0 %v3599
    %3735 = vmatprep.subr.mxu0 0.0
    %3736 = vmatpush1.msra.mxu0 %v3600
    %3737 = vmatprep.subr.mxu0 0.0
    %3738 = vmatpush1.msra.mxu0 %v3601
    %3739 = vmatprep.subr.mxu0 0.0
    %3740 = vmatpush1.msra.mxu0 %v3602
    %3741 = vmatprep.subr.mxu0 0.0
    %3742 = vmatpush1.msra.mxu0 0.0
    %3743 = vmatprep.subr.mxu0 0.0
    %3744 = vmatpush1.msra.mxu0 0.0
    %3745 = vmatprep.subr.mxu0 0.0
    %3746 = vmatpush1.msra.mxu0 0.0
    %3747 = vmatprep.subr.mxu0 0.0
    %3748 = vmatpush1.msra.mxu0 0.0
    %3749 = vmatprep.subr.mxu0 0.0
    %3750 = vmatpush1.msra.mxu0 0.0
    %3751 = vmatprep.subr.mxu0 0.0
    %3752 = vmatpush1.msra.mxu0 0.0
    %3753 = vmatprep.subr.mxu0 0.0
    %3754 = vmatpush1.msra.mxu0 0.0
    %3755 = vmatprep.subr.mxu0 0.0
    %3756 = vmatpush1.msra.mxu0 0.0
    %3757 = vmatprep.subr.mxu0 0.0
    %3758 = vmatpush1.msra.mxu0 0.0
    %3759 = vmatprep.subr.mxu0 0.0
    %3760 = vmatpush1.msra.mxu0 0.0
    %3761 = vmatprep.subr.mxu0 0.0
    %3762 = vmatpush1.msra.mxu0 0.0
    %3763 = vmatprep.subr.mxu0 0.0
    %3764 = vmatpush1.msra.mxu0 0.0
    %3765 = vmatprep.subr.mxu0 0.0
    %3766 = vmatpush1.msra.mxu0 0.0
    %3767 = vmatprep.subr.mxu0 0.0
    %3768 = vmatpush1.msra.mxu0 0.0
    %3769 = vmatprep.subr.mxu0 0.0
    %3770 = vmatpush1.msra.mxu0 0.0
    %3771 = vmatprep.subr.mxu0 0.0
    %3772 = vmatpush1.msra.mxu0 0.0
    %3773 = vmatprep.subr.mxu0 0.0
    %3774 = vmatpush1.msra.mxu0 0.0
    %3775 = vmatprep.subr.mxu0 0.0
    %3776 = vmatpush1.msra.mxu0 0.0
    %3777 = vmatprep.subr.mxu0 0.0
    %3778 = vmatpush1.msra.mxu0 0.0
    %3779 = vmatprep.subr.mxu0 0.0
    %3780 = vmatpush1.msra.mxu0 0.0
    %3781 = vmatprep.subr.mxu0 0.0
    %3782 = vmatpush1.msra.mxu0 0.0
    %3783 = vmatprep.subr.mxu0 0.0
    %3784 = vmatpush1.msra.mxu0 0.0
    %3785 = vmatprep.subr.mxu0 0.0
    %3786 = vmatpush1.msra.mxu0 0.0
    %3787 = vmatprep.subr.mxu0 0.0
    %3788 = vmatpush1.msra.mxu0 0.0
    %3789 = vmatprep.mubr.f32.mxu0 0.0
    %3790 = vmatmul.mubr.f32.gmra.mrb[0].mxu0 %v3717
    %v3791 = vpop.f32.mrb[0].mxu0
    %v3792 = vadd.f32 %v3699, %v3791
    %v3793 = vpop.f32.mrb[0].mxu0
    %3794 = vmatprep.mubr.f32.mxu0 0.0
    %3795 = vmatmul.mubr.f32.gmra.mrb[0].mxu0 %v3719
    %v3796 = vpop.f32.mrb[0].mxu0
    %v3797 = vadd.f32 %v3704, %v3796
    %v3798 = vpop.f32.mrb[0].mxu0
    %3799 = vmatprep.mubr.f32.mxu0 0.0
    %3800 = vmatmul.mubr.f32.gmra.mrb[0].mxu0 %v3721
    %v3801 = vpop.f32.mrb[0].mxu0
    %v3802 = vadd.f32 %v3709, %v3801
    %v3803 = vpop.f32.mrb[0].mxu0
    %3804 = vmatprep.mubr.f32.mxu0 0.0
    %3805 = vmatmul.mubr.f32.gmra.mrb[0].mxu0 %v3723
    %v3806 = vpop.f32.mrb[0].mxu0
    %v3807 = vadd.f32 %v3714, %v3806
    %v3808 = vpop.f32.mrb[0].mxu0
    %3809 = vdwg.mxu0
    %s3810 = scalar_lea.vmem [#allocation5], 128
    %v3811 = vld [vmem:[%s3810] sm:$0xff]
    %v3812 = vld [vmem:[%s3810 + $0x8] sm:$0xff]
    %v3813 = vld [vmem:[%s3810 + $0x10] sm:$0xff]
    %v3814 = vld [vmem:[%s3810 + $0x18] sm:$0xff]
    %v3815 = vld [vmem:[%s3810 + $0x20] sm:$0xff]
    %v3816 = vld [vmem:[%s3810 + $0x28] sm:$0xff]
    %v3817 = vld [vmem:[%s3810 + $0x30] sm:$0xff]
    %v3818 = vld [vmem:[%s3810 + $0x38] sm:$0xff]
    %v3819 = vrot.slane %v3589, 2
    %v3820 = vrot.slane %v3590, 2
    %v3821 = vsel %vm380, %v3819, %v3820
    %v3822 = vrot.slane %v3591, 2
    %v3823 = vsel %vm380, %v3820, %v3822
    %v3824 = vrot.slane %v3592, 2
    %v3825 = vsel %vm380, %v3822, %v3824
    %v3826 = vsel %vm3623, %v3821, 0
    %v3828 = vsel %vm3623, %v3823, 0
    %v3830 = vsel %vm3623, %v3825, 0
    %v3832 = vsel %vm3623, %v3824, 0
    %3834 = vmatprep.subr.mxu0 0.0
    %3835 = vmatpush1.msra.mxu0 %v3811
    %3836 = vmatprep.subr.mxu0 0.0
    %3837 = vmatpush1.msra.mxu0 %v3812
    %3838 = vmatprep.subr.mxu0 0.0
    %3839 = vmatpush1.msra.mxu0 %v3813
    %3840 = vmatprep.subr.mxu0 0.0
    %3841 = vmatpush1.msra.mxu0 %v3814
    %3842 = vmatprep.subr.mxu0 0.0
    %3843 = vmatpush1.msra.mxu0 %v3815
    %3844 = vmatprep.subr.mxu0 0.0
    %3845 = vmatpush1.msra.mxu0 %v3816
    %3846 = vmatprep.subr.mxu0 0.0
    %3847 = vmatpush1.msra.mxu0 %v3817
    %3848 = vmatprep.subr.mxu0 0.0
    %3849 = vmatpush1.msra.mxu0 %v3818
    %3850 = vmatprep.subr.mxu0 0.0
    %3851 = vmatpush1.msra.mxu0 0.0
    %3852 = vmatprep.subr.mxu0 0.0
    %3853 = vmatpush1.msra.mxu0 0.0
    %3854 = vmatprep.subr.mxu0 0.0
    %3855 = vmatpush1.msra.mxu0 0.0
    %3856 = vmatprep.subr.mxu0 0.0
    %3857 = vmatpush1.msra.mxu0 0.0
    %3858 = vmatprep.subr.mxu0 0.0
    %3859 = vmatpush1.msra.mxu0 0.0
    %3860 = vmatprep.subr.mxu0 0.0
    %3861 = vmatpush1.msra.mxu0 0.0
    %3862 = vmatprep.subr.mxu0 0.0
    %3863 = vmatpush1.msra.mxu0 0.0
    %3864 = vmatprep.subr.mxu0 0.0
    %3865 = vmatpush1.msra.mxu0 0.0
    %3866 = vmatprep.subr.mxu0 0.0
    %3867 = vmatpush1.msra.mxu0 0.0
    %3868 = vmatprep.subr.mxu0 0.0
    %3869 = vmatpush1.msra.mxu0 0.0
    %3870 = vmatprep.subr.mxu0 0.0
    %3871 = vmatpush1.msra.mxu0 0.0
    %3872 = vmatprep.subr.mxu0 0.0
    %3873 = vmatpush1.msra.mxu0 0.0
    %3874 = vmatprep.subr.mxu0 0.0
    %3875 = vmatpush1.msra.mxu0 0.0
    %3876 = vmatprep.subr.mxu0 0.0
    %3877 = vmatpush1.msra.mxu0 0.0
    %3878 = vmatprep.subr.mxu0 0.0
    %3879 = vmatpush1.msra.mxu0 0.0
    %3880 = vmatprep.subr.mxu0 0.0
    %3881 = vmatpush1.msra.mxu0 0.0
    %3882 = vmatprep.subr.mxu0 0.0
    %3883 = vmatpush1.msra.mxu0 0.0
    %3884 = vmatprep.subr.mxu0 0.0
    %3885 = vmatpush1.msra.mxu0 0.0
    %3886 = vmatprep.subr.mxu0 0.0
    %3887 = vmatpush1.msra.mxu0 0.0
    %3888 = vmatprep.subr.mxu0 0.0
    %3889 = vmatpush1.msra.mxu0 0.0
    %3890 = vmatprep.subr.mxu0 0.0
    %3891 = vmatpush1.msra.mxu0 0.0
    %3892 = vmatprep.subr.mxu0 0.0
    %3893 = vmatpush1.msra.mxu0 0.0
    %3894 = vmatprep.subr.mxu0 0.0
    %3895 = vmatpush1.msra.mxu0 0.0
    %3896 = vmatprep.subr.mxu0 0.0
    %3897 = vmatpush1.msra.mxu0 0.0
    %3898 = vmatprep.mubr.f32.mxu0 0.0
    %3899 = vmatmul.mubr.f32.gmra.mrb[0].mxu0 %v3826
    %v3900 = vpop.f32.mrb[0].mxu0
    %v3901 = vadd.f32 0.0, %v3900
    %v3902 = vpop.f32.mrb[0].mxu0
    %3903 = vmatprep.mubr.f32.mxu0 0.0
    %3904 = vmatmul.mubr.f32.gmra.mrb[0].mxu0 %v3828
    %v3905 = vpop.f32.mrb[0].mxu0
    %v3906 = vadd.f32 0.0, %v3905
    %v3907 = vpop.f32.mrb[0].mxu0
    %3908 = vmatprep.mubr.f32.mxu0 0.0
    %3909 = vmatmul.mubr.f32.gmra.mrb[0].mxu0 %v3830
    %v3910 = vpop.f32.mrb[0].mxu0
    %v3911 = vadd.f32 0.0, %v3910
    %v3912 = vpop.f32.mrb[0].mxu0
    %3913 = vmatprep.mubr.f32.mxu0 0.0
    %3914 = vmatmul.mubr.f32.gmra.mrb[0].mxu0 %v3832
    %v3915 = vpop.f32.mrb[0].mxu0
    %v3916 = vadd.f32 0.0, %v3915
    %v3917 = vpop.f32.mrb[0].mxu0
    %3918 = vdwg.mxu0
    %v3919 = vadd.f32 %v3792, %v3901
    %v3920 = vadd.f32 %v3797, %v3906
    %v3921 = vadd.f32 %v3802, %v3911
    %v3922 = vadd.f32 %v3807, %v3916
    %s3923 = scalar_lea.vmem [#allocation5], 192
    %v3924 = vld [vmem:[%s3923] sm:$0xff]
    %v3925 = vld [vmem:[%s3923 + $0x8] sm:$0xff]
    %v3926 = vld [vmem:[%s3923 + $0x10] sm:$0xff]
    %v3927 = vld [vmem:[%s3923 + $0x18] sm:$0xff]
    %v3928 = vld [vmem:[%s3923 + $0x20] sm:$0xff]
    %v3929 = vld [vmem:[%s3923 + $0x28] sm:$0xff]
    %v3930 = vld [vmem:[%s3923 + $0x30] sm:$0xff]
    %v3931 = vld [vmem:[%s3923 + $0x38] sm:$0xff]
    %v3932 = vrot.slane %v3589, 3
    %v3933 = vrot.slane %v3590, 3
    %v3934 = vsel %vm547, %v3932, %v3933
    %v3935 = vrot.slane %v3591, 3
    %v3936 = vsel %vm547, %v3933, %v3935
    %v3937 = vrot.slane %v3592, 3
    %v3938 = vsel %vm547, %v3935, %v3937
    %v3939 = vsel %vm3623, %v3934, 0
    %v3941 = vsel %vm3623, %v3936, 0
    %v3943 = vsel %vm3623, %v3938, 0
    %v3945 = vsel %vm3623, %v3937, 0
    %3947 = vmatprep.subr.mxu0 0.0
    %3948 = vmatpush1.msra.mxu0 %v3924
    %3949 = vmatprep.subr.mxu0 0.0
    %3950 = vmatpush1.msra.mxu0 %v3925
    %3951 = vmatprep.subr.mxu0 0.0
    %3952 = vmatpush1.msra.mxu0 %v3926
    %3953 = vmatprep.subr.mxu0 0.0
    %3954 = vmatpush1.msra.mxu0 %v3927
    %3955 = vmatprep.subr.mxu0 0.0
    %3956 = vmatpush1.msra.mxu0 %v3928
    %3957 = vmatprep.subr.mxu0 0.0
    %3958 = vmatpush1.msra.mxu0 %v3929
    %3959 = vmatprep.subr.mxu0 0.0
    %3960 = vmatpush1.msra.mxu0 %v3930
    %3961 = vmatprep.subr.mxu0 0.0
    %3962 = vmatpush1.msra.mxu0 %v3931
    %3963 = vmatprep.subr.mxu0 0.0
    %3964 = vmatpush1.msra.mxu0 0.0
    %3965 = vmatprep.subr.mxu0 0.0
    %3966 = vmatpush1.msra.mxu0 0.0
    %3967 = vmatprep.subr.mxu0 0.0
    %3968 = vmatpush1.msra.mxu0 0.0
    %3969 = vmatprep.subr.mxu0 0.0
    %3970 = vmatpush1.msra.mxu0 0.0
    %3971 = vmatprep.subr.mxu0 0.0
    %3972 = vmatpush1.msra.mxu0 0.0
    %3973 = vmatprep.subr.mxu0 0.0
    %3974 = vmatpush1.msra.mxu0 0.0
    %3975 = vmatprep.subr.mxu0 0.0
    %3976 = vmatpush1.msra.mxu0 0.0
    %3977 = vmatprep.subr.mxu0 0.0
    %3978 = vmatpush1.msra.mxu0 0.0
    %3979 = vmatprep.subr.mxu0 0.0
    %3980 = vmatpush1.msra.mxu0 0.0
    %3981 = vmatprep.subr.mxu0 0.0
    %3982 = vmatpush1.msra.mxu0 0.0
    %3983 = vmatprep.subr.mxu0 0.0
    %3984 = vmatpush1.msra.mxu0 0.0
    %3985 = vmatprep.subr.mxu0 0.0
    %3986 = vmatpush1.msra.mxu0 0.0
    %3987 = vmatprep.subr.mxu0 0.0
    %3988 = vmatpush1.msra.mxu0 0.0
    %3989 = vmatprep.subr.mxu0 0.0
    %3990 = vmatpush1.msra.mxu0 0.0
    %3991 = vmatprep.subr.mxu0 0.0
    %3992 = vmatpush1.msra.mxu0 0.0
    %3993 = vmatprep.subr.mxu0 0.0
    %3994 = vmatpush1.msra.mxu0 0.0
    %3995 = vmatprep.subr.mxu0 0.0
    %3996 = vmatpush1.msra.mxu0 0.0
    %3997 = vmatprep.subr.mxu0 0.0
    %3998 = vmatpush1.msra.mxu0 0.0
    %3999 = vmatprep.subr.mxu0 0.0
    %4000 = vmatpush1.msra.mxu0 0.0
    %4001 = vmatprep.subr.mxu0 0.0
    %4002 = vmatpush1.msra.mxu0 0.0
    %4003 = vmatprep.subr.mxu0 0.0
    %4004 = vmatpush1.msra.mxu0 0.0
    %4005 = vmatprep.subr.mxu0 0.0
    %4006 = vmatpush1.msra.mxu0 0.0
    %4007 = vmatprep.subr.mxu0 0.0
    %4008 = vmatpush1.msra.mxu0 0.0
    %4009 = vmatprep.subr.mxu0 0.0
    %4010 = vmatpush1.msra.mxu0 0.0
    %4011 = vmatprep.mubr.f32.mxu0 0.0
    %4012 = vmatmul.mubr.f32.gmra.mrb[0].mxu0 %v3939
    %v4013 = vpop.f32.mrb[0].mxu0
    %v4014 = vadd.f32 0.0, %v4013
    %v4015 = vpop.f32.mrb[0].mxu0
    %4016 = vmatprep.mubr.f32.mxu0 0.0
    %4017 = vmatmul.mubr.f32.gmra.mrb[0].mxu0 %v3941
    %v4018 = vpop.f32.mrb[0].mxu0
    %v4019 = vadd.f32 0.0, %v4018
    %v4020 = vpop.f32.mrb[0].mxu0
    %4021 = vmatprep.mubr.f32.mxu0 0.0
    %4022 = vmatmul.mubr.f32.gmra.mrb[0].mxu0 %v3943
    %v4023 = vpop.f32.mrb[0].mxu0
    %v4024 = vadd.f32 0.0, %v4023
    %v4025 = vpop.f32.mrb[0].mxu0
    %4026 = vmatprep.mubr.f32.mxu0 0.0
    %4027 = vmatmul.mubr.f32.gmra.mrb[0].mxu0 %v3945
    %v4028 = vpop.f32.mrb[0].mxu0
    %v4029 = vadd.f32 0.0, %v4028
    %v4030 = vpop.f32.mrb[0].mxu0
    %4031 = vdwg.mxu0
    %v4032 = vadd.f32 %v3919, %v4014
    %v4033 = vadd.f32 %v3920, %v4019
    %v4034 = vadd.f32 %v3921, %v4024
    %v4035 = vadd.f32 %v3922, %v4029
    %s4036 = scalar_lea.vmem [#allocation5], 256
    %v4037 = vld [vmem:[%s4036] sm:$0xff]
    %v4038 = vld [vmem:[%s4036 + $0x8] sm:$0xff]
    %v4039 = vld [vmem:[%s4036 + $0x10] sm:$0xff]
    %v4040 = vld [vmem:[%s4036 + $0x18] sm:$0xff]
    %v4041 = vld [vmem:[%s4036 + $0x20] sm:$0xff]
    %v4042 = vld [vmem:[%s4036 + $0x28] sm:$0xff]
    %v4043 = vld [vmem:[%s4036 + $0x30] sm:$0xff]
    %v4044 = vld [vmem:[%s4036 + $0x38] sm:$0xff]
    %v4046 = vrot.slane %v3589, 4
    %v4047 = vrot.slane %v3590, 4
    %v4048 = vsel %vm714, %v4046, %v4047
    %v4049 = vrot.slane %v3591, 4
    %v4050 = vsel %vm714, %v4047, %v4049
    %v4051 = vrot.slane %v3592, 4
    %v4052 = vsel %vm714, %v4049, %v4051
    %v4053 = vrot.slane %v3593, 4
    %v4054 = vsel %vm714, %v4051, %v4053
    %v4055 = vsel %vm3623, %v4048, 0
    %v4057 = vsel %vm3623, %v4050, 0
    %v4059 = vsel %vm3623, %v4052, 0
    %v4061 = vsel %vm3623, %v4054, 0
    %4063 = vmatprep.subr.mxu0 0.0
    %4064 = vmatpush1.msra.mxu0 %v4037
    %4065 = vmatprep.subr.mxu0 0.0
    %4066 = vmatpush1.msra.mxu0 %v4038
    %4067 = vmatprep.subr.mxu0 0.0
    %4068 = vmatpush1.msra.mxu0 %v4039
    %4069 = vmatprep.subr.mxu0 0.0
    %4070 = vmatpush1.msra.mxu0 %v4040
    %4071 = vmatprep.subr.mxu0 0.0
    %4072 = vmatpush1.msra.mxu0 %v4041
    %4073 = vmatprep.subr.mxu0 0.0
    %4074 = vmatpush1.msra.mxu0 %v4042
    %4075 = vmatprep.subr.mxu0 0.0
    %4076 = vmatpush1.msra.mxu0 %v4043
    %4077 = vmatprep.subr.mxu0 0.0
    %4078 = vmatpush1.msra.mxu0 %v4044
    %4079 = vmatprep.subr.mxu0 0.0
    %4080 = vmatpush1.msra.mxu0 0.0
    %4081 = vmatprep.subr.mxu0 0.0
    %4082 = vmatpush1.msra.mxu0 0.0
    %4083 = vmatprep.subr.mxu0 0.0
    %4084 = vmatpush1.msra.mxu0 0.0
    %4085 = vmatprep.subr.mxu0 0.0
    %4086 = vmatpush1.msra.mxu0 0.0
    %4087 = vmatprep.subr.mxu0 0.0
    %4088 = vmatpush1.msra.mxu0 0.0
    %4089 = vmatprep.subr.mxu0 0.0
    %4090 = vmatpush1.msra.mxu0 0.0
    %4091 = vmatprep.subr.mxu0 0.0
    %4092 = vmatpush1.msra.mxu0 0.0
    %4093 = vmatprep.subr.mxu0 0.0
    %4094 = vmatpush1.msra.mxu0 0.0
    %4095 = vmatprep.subr.mxu0 0.0
    %4096 = vmatpush1.msra.mxu0 0.0
    %4097 = vmatprep.subr.mxu0 0.0
    %4098 = vmatpush1.msra.mxu0 0.0
    %4099 = vmatprep.subr.mxu0 0.0
    %4100 = vmatpush1.msra.mxu0 0.0
    %4101 = vmatprep.subr.mxu0 0.0
    %4102 = vmatpush1.msra.mxu0 0.0
    %4103 = vmatprep.subr.mxu0 0.0
    %4104 = vmatpush1.msra.mxu0 0.0
    %4105 = vmatprep.subr.mxu0 0.0
    %4106 = vmatpush1.msra.mxu0 0.0
    %4107 = vmatprep.subr.mxu0 0.0
    %4108 = vmatpush1.msra.mxu0 0.0
    %4109 = vmatprep.subr.mxu0 0.0
    %4110 = vmatpush1.msra.mxu0 0.0
    %4111 = vmatprep.subr.mxu0 0.0
    %4112 = vmatpush1.msra.mxu0 0.0
    %4113 = vmatprep.subr.mxu0 0.0
    %4114 = vmatpush1.msra.mxu0 0.0
    %4115 = vmatprep.subr.mxu0 0.0
    %4116 = vmatpush1.msra.mxu0 0.0
    %4117 = vmatprep.subr.mxu0 0.0
    %4118 = vmatpush1.msra.mxu0 0.0
    %4119 = vmatprep.subr.mxu0 0.0
    %4120 = vmatpush1.msra.mxu0 0.0
    %4121 = vmatprep.subr.mxu0 0.0
    %4122 = vmatpush1.msra.mxu0 0.0
    %4123 = vmatprep.subr.mxu0 0.0
    %4124 = vmatpush1.msra.mxu0 0.0
    %4125 = vmatprep.subr.mxu0 0.0
    %4126 = vmatpush1.msra.mxu0 0.0
    %4127 = vmatprep.mubr.f32.mxu0 0.0
    %4128 = vmatmul.mubr.f32.gmra.mrb[0].mxu0 %v4055
    %v4129 = vpop.f32.mrb[0].mxu0
    %v4130 = vadd.f32 0.0, %v4129
    %v4131 = vpop.f32.mrb[0].mxu0
    %4132 = vmatprep.mubr.f32.mxu0 0.0
    %4133 = vmatmul.mubr.f32.gmra.mrb[0].mxu0 %v4057
    %v4134 = vpop.f32.mrb[0].mxu0
    %v4135 = vadd.f32 0.0, %v4134
    %v4136 = vpop.f32.mrb[0].mxu0
    %4137 = vmatprep.mubr.f32.mxu0 0.0
    %4138 = vmatmul.mubr.f32.gmra.mrb[0].mxu0 %v4059
    %v4139 = vpop.f32.mrb[0].mxu0
    %v4140 = vadd.f32 0.0, %v4139
    %v4141 = vpop.f32.mrb[0].mxu0
    %4142 = vmatprep.mubr.f32.mxu0 0.0
    %4143 = vmatmul.mubr.f32.gmra.mrb[0].mxu0 %v4061
    %v4144 = vpop.f32.mrb[0].mxu0
    %v4145 = vadd.f32 0.0, %v4144
    %v4146 = vpop.f32.mrb[0].mxu0
    %4147 = vdwg.mxu0
    %v4148 = vadd.f32 %v4032, %v4130
    %v4149 = vadd.f32 %v4033, %v4135
    %v4150 = vadd.f32 %v4034, %v4140
    %v4151 = vadd.f32 %v4035, %v4145
    %s4152 = scalar_lea.vmem [#allocation5], 320
    %v4153 = vld [vmem:[%s4152] sm:$0xff]
    %v4154 = vld [vmem:[%s4152 + $0x8] sm:$0xff]
    %v4155 = vld [vmem:[%s4152 + $0x10] sm:$0xff]
    %v4156 = vld [vmem:[%s4152 + $0x18] sm:$0xff]
    %v4157 = vld [vmem:[%s4152 + $0x20] sm:$0xff]
    %v4158 = vld [vmem:[%s4152 + $0x28] sm:$0xff]
    %v4159 = vld [vmem:[%s4152 + $0x30] sm:$0xff]
    %v4160 = vld [vmem:[%s4152 + $0x38] sm:$0xff]
    %v4161 = vrot.slane %v3589, 5
    %v4162 = vrot.slane %v3590, 5
    %v4163 = vsel %vm881, %v4161, %v4162
    %v4164 = vrot.slane %v3591, 5
    %v4165 = vsel %vm881, %v4162, %v4164
    %v4166 = vrot.slane %v3592, 5
    %v4167 = vsel %vm881, %v4164, %v4166
    %v4168 = vrot.slane %v3593, 5
    %v4169 = vsel %vm881, %v4166, %v4168
    %v4170 = vsel %vm3623, %v4163, 0
    %v4172 = vsel %vm3623, %v4165, 0
    %v4174 = vsel %vm3623, %v4167, 0
    %v4176 = vsel %vm3623, %v4169, 0
    %4178 = vmatprep.subr.mxu0 0.0
    %4179 = vmatpush1.msra.mxu0 %v4153
    %4180 = vmatprep.subr.mxu0 0.0
    %4181 = vmatpush1.msra.mxu0 %v4154
    %4182 = vmatprep.subr.mxu0 0.0
    %4183 = vmatpush1.msra.mxu0 %v4155
    %4184 = vmatprep.subr.mxu0 0.0
    %4185 = vmatpush1.msra.mxu0 %v4156
    %4186 = vmatprep.subr.mxu0 0.0
    %4187 = vmatpush1.msra.mxu0 %v4157
    %4188 = vmatprep.subr.mxu0 0.0
    %4189 = vmatpush1.msra.mxu0 %v4158
    %4190 = vmatprep.subr.mxu0 0.0
    %4191 = vmatpush1.msra.mxu0 %v4159
    %4192 = vmatprep.subr.mxu0 0.0
    %4193 = vmatpush1.msra.mxu0 %v4160
    %4194 = vmatprep.subr.mxu0 0.0
    %4195 = vmatpush1.msra.mxu0 0.0
    %4196 = vmatprep.subr.mxu0 0.0
    %4197 = vmatpush1.msra.mxu0 0.0
    %4198 = vmatprep.subr.mxu0 0.0
    %4199 = vmatpush1.msra.mxu0 0.0
    %4200 = vmatprep.subr.mxu0 0.0
    %4201 = vmatpush1.msra.mxu0 0.0
    %4202 = vmatprep.subr.mxu0 0.0
    %4203 = vmatpush1.msra.mxu0 0.0
    %4204 = vmatprep.subr.mxu0 0.0
    %4205 = vmatpush1.msra.mxu0 0.0
    %4206 = vmatprep.subr.mxu0 0.0
    %4207 = vmatpush1.msra.mxu0 0.0
    %4208 = vmatprep.subr.mxu0 0.0
    %4209 = vmatpush1.msra.mxu0 0.0
    %4210 = vmatprep.subr.mxu0 0.0
    %4211 = vmatpush1.msra.mxu0 0.0
    %4212 = vmatprep.subr.mxu0 0.0
    %4213 = vmatpush1.msra.mxu0 0.0
    %4214 = vmatprep.subr.mxu0 0.0
    %4215 = vmatpush1.msra.mxu0 0.0
    %4216 = vmatprep.subr.mxu0 0.0
    %4217 = vmatpush1.msra.mxu0 0.0
    %4218 = vmatprep.subr.mxu0 0.0
    %4219 = vmatpush1.msra.mxu0 0.0
    %4220 = vmatprep.subr.mxu0 0.0
    %4221 = vmatpush1.msra.mxu0 0.0
    %4222 = vmatprep.subr.mxu0 0.0
    %4223 = vmatpush1.msra.mxu0 0.0
    %4224 = vmatprep.subr.mxu0 0.0
    %4225 = vmatpush1.msra.mxu0 0.0
    %4226 = vmatprep.subr.mxu0 0.0
    %4227 = vmatpush1.msra.mxu0 0.0
    %4228 = vmatprep.subr.mxu0 0.0
    %4229 = vmatpush1.msra.mxu0 0.0
    %4230 = vmatprep.subr.mxu0 0.0
    %4231 = vmatpush1.msra.mxu0 0.0
    %4232 = vmatprep.subr.mxu0 0.0
    %4233 = vmatpush1.msra.mxu0 0.0
    %4234 = vmatprep.subr.mxu0 0.0
    %4235 = vmatpush1.msra.mxu0 0.0
    %4236 = vmatprep.subr.mxu0 0.0
    %4237 = vmatpush1.msra.mxu0 0.0
    %4238 = vmatprep.subr.mxu0 0.0
    %4239 = vmatpush1.msra.mxu0 0.0
    %4240 = vmatprep.subr.mxu0 0.0
    %4241 = vmatpush1.msra.mxu0 0.0
    %4242 = vmatprep.mubr.f32.mxu0 0.0
    %4243 = vmatmul.mubr.f32.gmra.mrb[0].mxu0 %v4170
    %v4244 = vpop.f32.mrb[0].mxu0
    %v4245 = vadd.f32 0.0, %v4244
    %v4246 = vpop.f32.mrb[0].mxu0
    %4247 = vmatprep.mubr.f32.mxu0 0.0
    %4248 = vmatmul.mubr.f32.gmra.mrb[0].mxu0 %v4172
    %v4249 = vpop.f32.mrb[0].mxu0
    %v4250 = vadd.f32 0.0, %v4249
    %v4251 = vpop.f32.mrb[0].mxu0
    %4252 = vmatprep.mubr.f32.mxu0 0.0
    %4253 = vmatmul.mubr.f32.gmra.mrb[0].mxu0 %v4174
    %v4254 = vpop.f32.mrb[0].mxu0
    %v4255 = vadd.f32 0.0, %v4254
    %v4256 = vpop.f32.mrb[0].mxu0
    %4257 = vmatprep.mubr.f32.mxu0 0.0
    %4258 = vmatmul.mubr.f32.gmra.mrb[0].mxu0 %v4176
    %v4259 = vpop.f32.mrb[0].mxu0
    %v4260 = vadd.f32 0.0, %v4259
    %v4261 = vpop.f32.mrb[0].mxu0
    %4262 = vdwg.mxu0
    %v4263 = vadd.f32 %v4148, %v4245
    %v4264 = vadd.f32 %v4149, %v4250
    %v4265 = vadd.f32 %v4150, %v4255
    %v4266 = vadd.f32 %v4151, %v4260
    %s4267 = scalar_lea.vmem [#allocation5], 384
    %v4268 = vld [vmem:[%s4267] sm:$0xff]
    %v4269 = vld [vmem:[%s4267 + $0x8] sm:$0xff]
    %v4270 = vld [vmem:[%s4267 + $0x10] sm:$0xff]
    %v4271 = vld [vmem:[%s4267 + $0x18] sm:$0xff]
    %v4272 = vld [vmem:[%s4267 + $0x20] sm:$0xff]
    %v4273 = vld [vmem:[%s4267 + $0x28] sm:$0xff]
    %v4274 = vld [vmem:[%s4267 + $0x30] sm:$0xff]
    %v4275 = vld [vmem:[%s4267 + $0x38] sm:$0xff]
    %v4276 = vrot.slane %v3589, 6
    %v4277 = vrot.slane %v3590, 6
    %v4278 = vsel %vm1048, %v4276, %v4277
    %v4279 = vrot.slane %v3591, 6
    %v4280 = vsel %vm1048, %v4277, %v4279
    %v4281 = vrot.slane %v3592, 6
    %v4282 = vsel %vm1048, %v4279, %v4281
    %v4283 = vrot.slane %v3593, 6
    %v4284 = vsel %vm1048, %v4281, %v4283
    %v4285 = vsel %vm3623, %v4278, 0
    %v4287 = vsel %vm3623, %v4280, 0
    %v4289 = vsel %vm3623, %v4282, 0
    %v4291 = vsel %vm3623, %v4284, 0
    %4293 = vmatprep.subr.mxu0 0.0
    %4294 = vmatpush1.msra.mxu0 %v4268
    %4295 = vmatprep.subr.mxu0 0.0
    %4296 = vmatpush1.msra.mxu0 %v4269
    %4297 = vmatprep.subr.mxu0 0.0
    %4298 = vmatpush1.msra.mxu0 %v4270
    %4299 = vmatprep.subr.mxu0 0.0
    %4300 = vmatpush1.msra.mxu0 %v4271
    %4301 = vmatprep.subr.mxu0 0.0
    %4302 = vmatpush1.msra.mxu0 %v4272
    %4303 = vmatprep.subr.mxu0 0.0
    %4304 = vmatpush1.msra.mxu0 %v4273
    %4305 = vmatprep.subr.mxu0 0.0
    %4306 = vmatpush1.msra.mxu0 %v4274
    %4307 = vmatprep.subr.mxu0 0.0
    %4308 = vmatpush1.msra.mxu0 %v4275
    %4309 = vmatprep.subr.mxu0 0.0
    %4310 = vmatpush1.msra.mxu0 0.0
    %4311 = vmatprep.subr.mxu0 0.0
    %4312 = vmatpush1.msra.mxu0 0.0
    %4313 = vmatprep.subr.mxu0 0.0
    %4314 = vmatpush1.msra.mxu0 0.0
    %4315 = vmatprep.subr.mxu0 0.0
    %4316 = vmatpush1.msra.mxu0 0.0
    %4317 = vmatprep.subr.mxu0 0.0
    %4318 = vmatpush1.msra.mxu0 0.0
    %4319 = vmatprep.subr.mxu0 0.0
    %4320 = vmatpush1.msra.mxu0 0.0
    %4321 = vmatprep.subr.mxu0 0.0
    %4322 = vmatpush1.msra.mxu0 0.0
    %4323 = vmatprep.subr.mxu0 0.0
    %4324 = vmatpush1.msra.mxu0 0.0
    %4325 = vmatprep.subr.mxu0 0.0
    %4326 = vmatpush1.msra.mxu0 0.0
    %4327 = vmatprep.subr.mxu0 0.0
    %4328 = vmatpush1.msra.mxu0 0.0
    %4329 = vmatprep.subr.mxu0 0.0
    %4330 = vmatpush1.msra.mxu0 0.0
    %4331 = vmatprep.subr.mxu0 0.0
    %4332 = vmatpush1.msra.mxu0 0.0
    %4333 = vmatprep.subr.mxu0 0.0
    %4334 = vmatpush1.msra.mxu0 0.0
    %4335 = vmatprep.subr.mxu0 0.0
    %4336 = vmatpush1.msra.mxu0 0.0
    %4337 = vmatprep.subr.mxu0 0.0
    %4338 = vmatpush1.msra.mxu0 0.0
    %4339 = vmatprep.subr.mxu0 0.0
    %4340 = vmatpush1.msra.mxu0 0.0
    %4341 = vmatprep.subr.mxu0 0.0
    %4342 = vmatpush1.msra.mxu0 0.0
    %4343 = vmatprep.subr.mxu0 0.0
    %4344 = vmatpush1.msra.mxu0 0.0
    %4345 = vmatprep.subr.mxu0 0.0
    %4346 = vmatpush1.msra.mxu0 0.0
    %4347 = vmatprep.subr.mxu0 0.0
    %4348 = vmatpush1.msra.mxu0 0.0
    %4349 = vmatprep.subr.mxu0 0.0
    %4350 = vmatpush1.msra.mxu0 0.0
    %4351 = vmatprep.subr.mxu0 0.0
    %4352 = vmatpush1.msra.mxu0 0.0
    %4353 = vmatprep.subr.mxu0 0.0
    %4354 = vmatpush1.msra.mxu0 0.0
    %4355 = vmatprep.subr.mxu0 0.0
    %4356 = vmatpush1.msra.mxu0 0.0
    %4357 = vmatprep.mubr.f32.mxu0 0.0
    %4358 = vmatmul.mubr.f32.gmra.mrb[0].mxu0 %v4285
    %v4359 = vpop.f32.mrb[0].mxu0
    %v4360 = vadd.f32 0.0, %v4359
    %v4361 = vpop.f32.mrb[0].mxu0
    %4362 = vmatprep.mubr.f32.mxu0 0.0
    %4363 = vmatmul.mubr.f32.gmra.mrb[0].mxu0 %v4287
    %v4364 = vpop.f32.mrb[0].mxu0
    %v4365 = vadd.f32 0.0, %v4364
    %v4366 = vpop.f32.mrb[0].mxu0
    %4367 = vmatprep.mubr.f32.mxu0 0.0
    %4368 = vmatmul.mubr.f32.gmra.mrb[0].mxu0 %v4289
    %v4369 = vpop.f32.mrb[0].mxu0
    %v4370 = vadd.f32 0.0, %v4369
    %v4371 = vpop.f32.mrb[0].mxu0
    %4372 = vmatprep.mubr.f32.mxu0 0.0
    %4373 = vmatmul.mubr.f32.gmra.mrb[0].mxu0 %v4291
    %v4374 = vpop.f32.mrb[0].mxu0
    %v4375 = vadd.f32 0.0, %v4374
    %v4376 = vpop.f32.mrb[0].mxu0
    %4377 = vdwg.mxu0
    %v4378 = vadd.f32 %v4263, %v4360
    %v4379 = vadd.f32 %v4264, %v4365
    %v4380 = vadd.f32 %v4265, %v4370
    %v4381 = vadd.f32 %v4266, %v4375
    %s4382 = scalar_lea.vmem [#allocation5], 448
    %v4383 = vld [vmem:[%s4382] sm:$0xff]
    %v4384 = vld [vmem:[%s4382 + $0x8] sm:$0xff]
    %v4385 = vld [vmem:[%s4382 + $0x10] sm:$0xff]
    %v4386 = vld [vmem:[%s4382 + $0x18] sm:$0xff]
    %v4387 = vld [vmem:[%s4382 + $0x20] sm:$0xff]
    %v4388 = vld [vmem:[%s4382 + $0x28] sm:$0xff]
    %v4389 = vld [vmem:[%s4382 + $0x30] sm:$0xff]
    %v4390 = vld [vmem:[%s4382 + $0x38] sm:$0xff]
    %v4391 = vrot.slane %v3589, 7
    %v4392 = vrot.slane %v3590, 7
    %v4393 = vsel %vm1215, %v4391, %v4392
    %v4394 = vrot.slane %v3591, 7
    %v4395 = vsel %vm1215, %v4392, %v4394
    %v4396 = vrot.slane %v3592, 7
    %v4397 = vsel %vm1215, %v4394, %v4396
    %v4398 = vrot.slane %v3593, 7
    %v4399 = vsel %vm1215, %v4396, %v4398
    %v4400 = vsel %vm3623, %v4393, 0
    %v4402 = vsel %vm3623, %v4395, 0
    %v4404 = vsel %vm3623, %v4397, 0
    %v4406 = vsel %vm3623, %v4399, 0
    %4408 = vmatprep.subr.mxu0 0.0
    %4409 = vmatpush1.msra.mxu0 %v4383
    %4410 = vmatprep.subr.mxu0 0.0
    %4411 = vmatpush1.msra.mxu0 %v4384
    %4412 = vmatprep.subr.mxu0 0.0
    %4413 = vmatpush1.msra.mxu0 %v4385
    %4414 = vmatprep.subr.mxu0 0.0
    %4415 = vmatpush1.msra.mxu0 %v4386
    %4416 = vmatprep.subr.mxu0 0.0
    %4417 = vmatpush1.msra.mxu0 %v4387
    %4418 = vmatprep.subr.mxu0 0.0
    %4419 = vmatpush1.msra.mxu0 %v4388
    %4420 = vmatprep.subr.mxu0 0.0
    %4421 = vmatpush1.msra.mxu0 %v4389
    %4422 = vmatprep.subr.mxu0 0.0
    %4423 = vmatpush1.msra.mxu0 %v4390
    %4424 = vmatprep.subr.mxu0 0.0
    %4425 = vmatpush1.msra.mxu0 0.0
    %4426 = vmatprep.subr.mxu0 0.0
    %4427 = vmatpush1.msra.mxu0 0.0
    %4428 = vmatprep.subr.mxu0 0.0
    %4429 = vmatpush1.msra.mxu0 0.0
    %4430 = vmatprep.subr.mxu0 0.0
    %4431 = vmatpush1.msra.mxu0 0.0
    %4432 = vmatprep.subr.mxu0 0.0
    %4433 = vmatpush1.msra.mxu0 0.0
    %4434 = vmatprep.subr.mxu0 0.0
    %4435 = vmatpush1.msra.mxu0 0.0
    %4436 = vmatprep.subr.mxu0 0.0
    %4437 = vmatpush1.msra.mxu0 0.0
    %4438 = vmatprep.subr.mxu0 0.0
    %4439 = vmatpush1.msra.mxu0 0.0
    %4440 = vmatprep.subr.mxu0 0.0
    %4441 = vmatpush1.msra.mxu0 0.0
    %4442 = vmatprep.subr.mxu0 0.0
    %4443 = vmatpush1.msra.mxu0 0.0
    %4444 = vmatprep.subr.mxu0 0.0
    %4445 = vmatpush1.msra.mxu0 0.0
    %4446 = vmatprep.subr.mxu0 0.0
    %4447 = vmatpush1.msra.mxu0 0.0
    %4448 = vmatprep.subr.mxu0 0.0
    %4449 = vmatpush1.msra.mxu0 0.0
    %4450 = vmatprep.subr.mxu0 0.0
    %4451 = vmatpush1.msra.mxu0 0.0
    %4452 = vmatprep.subr.mxu0 0.0
    %4453 = vmatpush1.msra.mxu0 0.0
    %4454 = vmatprep.subr.mxu0 0.0
    %4455 = vmatpush1.msra.mxu0 0.0
    %4456 = vmatprep.subr.mxu0 0.0
    %4457 = vmatpush1.msra.mxu0 0.0
    %4458 = vmatprep.subr.mxu0 0.0
    %4459 = vmatpush1.msra.mxu0 0.0
    %4460 = vmatprep.subr.mxu0 0.0
    %4461 = vmatpush1.msra.mxu0 0.0
    %4462 = vmatprep.subr.mxu0 0.0
    %4463 = vmatpush1.msra.mxu0 0.0
    %4464 = vmatprep.subr.mxu0 0.0
    %4465 = vmatpush1.msra.mxu0 0.0
    %4466 = vmatprep.subr.mxu0 0.0
    %4467 = vmatpush1.msra.mxu0 0.0
    %4468 = vmatprep.subr.mxu0 0.0
    %4469 = vmatpush1.msra.mxu0 0.0
    %4470 = vmatprep.subr.mxu0 0.0
    %4471 = vmatpush1.msra.mxu0 0.0
    %4472 = vmatprep.mubr.f32.mxu0 0.0
    %4473 = vmatmul.mubr.f32.gmra.mrb[0].mxu0 %v4400
    %v4474 = vpop.f32.mrb[0].mxu0
    %v4475 = vadd.f32 0.0, %v4474
    %v4476 = vpop.f32.mrb[0].mxu0
    %4477 = vmatprep.mubr.f32.mxu0 0.0
    %4478 = vmatmul.mubr.f32.gmra.mrb[0].mxu0 %v4402
    %v4479 = vpop.f32.mrb[0].mxu0
    %v4480 = vadd.f32 0.0, %v4479
    %v4481 = vpop.f32.mrb[0].mxu0
    %4482 = vmatprep.mubr.f32.mxu0 0.0
    %4483 = vmatmul.mubr.f32.gmra.mrb[0].mxu0 %v4404
    %v4484 = vpop.f32.mrb[0].mxu0
    %v4485 = vadd.f32 0.0, %v4484
    %v4486 = vpop.f32.mrb[0].mxu0
    %4487 = vmatprep.mubr.f32.mxu0 0.0
    %4488 = vmatmul.mubr.f32.gmra.mrb[0].mxu0 %v4406
    %v4489 = vpop.f32.mrb[0].mxu0
    %v4490 = vadd.f32 0.0, %v4489
    %v4491 = vpop.f32.mrb[0].mxu0
    %4492 = vdwg.mxu0
    %v4493 = vadd.f32 %v4378, %v4475
    %v4494 = vadd.f32 %v4379, %v4480
    %v4495 = vadd.f32 %v4380, %v4485
    %v4496 = vadd.f32 %v4381, %v4490
    %v4498 = vlaneseq
    %v4499 = vshrl.u32 %v4498, 7
    %v4500 = vsub.s32 0, %v4499
    %v4501 = vrot.slane %v3594, %v4500
    %v4503 = vadd.f32 %v4493, %v4501
    %v4504 = vadd.f32 %v4494, %v4501
    %v4505 = vadd.f32 %v4495, %v4501
    %v4506 = vadd.f32 %v4496, %v4501
    %v4507 = vmax.f32 %v4503, 0.0
    %v4508 = vmax.f32 %v4504, 0.0
    %v4509 = vmax.f32 %v4505, 0.0
    %v4510 = vmax.f32 %v4506, 0.0
    %vm4511 = vcmp.ge.s32.totalorder %v1407, 16
    %vm4512 = vcmp.ge.s32.totalorder %v1408, 16
    %vm4513 = vcmp.ge.s32.totalorder %v1409, 16
    %vm4514 = vcmp.ge.s32.totalorder %v1410, 16
    %v4515 = vsub.s32 %v1407, 16
    %v4516 = vsub.s32 %v1408, 16
    %v4517 = vsub.s32 %v1410, 16
    %v4518 = vsel %vm4511, %v4515, %v1407
    %v4519 = vsel %vm4512, %v4516, %v1408
    %v4520 = vsel %vm4513, %v1407, %v1409
    %v4521 = vsel %vm4514, %v4517, %v1410
    %v4522 = vmul.u32 %v4518, 2
    %v4523 = vmul.u32 %v4519, 2
    %v4524 = vmul.u32 %v4520, 2
    %v4525 = vmul.u32 %v4521, 2
    %v4526 = vsub.s32 %v4522, 1
    %v4527 = vsub.s32 %v4523, 1
    %v4528 = vsub.s32 %v4524, 1
    %v4529 = vsub.s32 %v4525, 1
    %v4530 = vsel %vm4511, %v4522, %v4526
    %v4531 = vsel %vm4512, %v4523, %v4527
    %v4532 = vsel %vm4513, %v4524, %v4528
    %v4533 = vsel %vm4514, %v4525, %v4529
    %vm4534 = vcmp.ge.s32.totalorder %v4518, 0
    %vm4535 = vcmp.ge.s32.totalorder %v4519, 0
    %vm4536 = vcmp.ge.s32.totalorder %v4520, 0
    %vm4537 = vcmp.ge.s32.totalorder %v4521, 0
    %vm4538 = vcmp.lt.s32.totalorder %v4518, 6
    %vm4539 = vcmp.lt.s32.totalorder %v4519, 6
    %vm4540 = vcmp.lt.s32.totalorder %v4520, 6
    %vm4541 = vcmp.lt.s32.totalorder %v4521, 6
    %vm4542 = vmand %vm4534, %vm4538
    %vm4543 = vmand %vm4535, %vm4539
    %vm4544 = vmand %vm4536, %vm4540
    %vm4545 = vmand %vm4537, %vm4541
    %vm4546 = vcmp.ge.s32.totalorder %v4530, 0
    %vm4547 = vcmp.ge.s32.totalorder %v4531, 0
    %vm4548 = vcmp.ge.s32.totalorder %v4532, 0
    %vm4549 = vcmp.ge.s32.totalorder %v4533, 0
    %vm4550 = vmand %vm4542, %vm4546
    %vm4551 = vmand %vm4543, %vm4547
    %vm4552 = vmand %vm4544, %vm4548
    %vm4553 = vmand %vm4545, %vm4549
    %vm4554 = vcmp.lt.s32.totalorder %v4530, 11
    %vm4555 = vcmp.lt.s32.totalorder %v4531, 11
    %vm4556 = vcmp.lt.s32.totalorder %v4532, 11
    %vm4557 = vcmp.lt.s32.totalorder %v4533, 11
    %vm4558 = vmand %vm4550, %vm4554
    %vm4559 = vmand %vm4551, %vm4555
    %vm4560 = vmand %vm4552, %vm4556
    %vm4561 = vmand %vm4553, %vm4557
    %vm4562 = vcmp.eq.s32.totalorder %v1422, %v4530
    %vm4563 = vcmp.eq.s32.totalorder %v1422, %v4531
    %vm4564 = vcmp.eq.s32.totalorder %v1422, %v4532
    %vm4565 = vcmp.eq.s32.totalorder %v1422, %v4533
    %vm4566 = vmand %vm4558, %vm4562
    %vm4567 = vmand %vm4559, %vm4563
    %vm4568 = vmand %vm4560, %vm4564
    %vm4569 = vmand %vm4561, %vm4565
    %v4570 = vsub.s32 %v4518, 8
    %v4571 = vsub.s32 %v4519, 8
    %v4572 = vsub.s32 %v4520, 8
    %v4573 = vsub.s32 %v4521, 8
    %v4574 = vmul.u32 %v4570, 2
    %v4575 = vmul.u32 %v4571, 2
    %v4576 = vmul.u32 %v4572, 2
    %v4577 = vmul.u32 %v4573, 2
    %v4578 = vsub.s32 %v4574, 1
    %v4579 = vsub.s32 %v4575, 1
    %v4580 = vsub.s32 %v4576, 1
    %v4581 = vsub.s32 %v4577, 1
    %v4582 = vsel %vm4511, %v4574, %v4578
    %v4583 = vsel %vm4512, %v4575, %v4579
    %v4584 = vsel %vm4513, %v4576, %v4580
    %v4585 = vsel %vm4514, %v4577, %v4581
    %vm4586 = vcmp.ge.s32.totalorder %v4570, 0
    %vm4587 = vcmp.ge.s32.totalorder %v4571, 0
    %vm4588 = vcmp.ge.s32.totalorder %v4572, 0
    %vm4589 = vcmp.ge.s32.totalorder %v4573, 0
    %vm4590 = vcmp.lt.s32.totalorder %v4570, 6
    %vm4591 = vcmp.lt.s32.totalorder %v4571, 6
    %vm4592 = vcmp.lt.s32.totalorder %v4572, 6
    %vm4593 = vcmp.lt.s32.totalorder %v4573, 6
    %vm4594 = vmand %vm4586, %vm4590
    %vm4595 = vmand %vm4587, %vm4591
    %vm4596 = vmand %vm4588, %vm4592
    %vm4597 = vmand %vm4589, %vm4593
    %vm4598 = vcmp.ge.s32.totalorder %v4582, 0
    %vm4599 = vcmp.ge.s32.totalorder %v4583, 0
    %vm4600 = vcmp.ge.s32.totalorder %v4584, 0
    %vm4601 = vcmp.ge.s32.totalorder %v4585, 0
    %vm4602 = vmand %vm4594, %vm4598
    %vm4603 = vmand %vm4595, %vm4599
    %vm4604 = vmand %vm4596, %vm4600
    %vm4605 = vmand %vm4597, %vm4601
    %vm4606 = vcmp.lt.s32.totalorder %v4582, 11
    %vm4607 = vcmp.lt.s32.totalorder %v4583, 11
    %vm4608 = vcmp.lt.s32.totalorder %v4584, 11
    %vm4609 = vcmp.lt.s32.totalorder %v4585, 11
    %vm4610 = vmand %vm4602, %vm4606
    %vm4611 = vmand %vm4603, %vm4607
    %vm4612 = vmand %vm4604, %vm4608
    %vm4613 = vmand %vm4605, %vm4609
    %v4614 = vadd.s32 %v4582, 18
    %v4615 = vadd.s32 %v4583, 18
    %v4616 = vadd.s32 %v4584, 18
    %v4617 = vadd.s32 %v4585, 18
    %vm4618 = vcmp.eq.s32.totalorder %v1422, %v4614
    %vm4619 = vcmp.eq.s32.totalorder %v1422, %v4615
    %vm4620 = vcmp.eq.s32.totalorder %v1422, %v4616
    %vm4621 = vcmp.eq.s32.totalorder %v1422, %v4617
    %vm4622 = vmand %vm4610, %vm4618
    %vm4623 = vmand %vm4611, %vm4619
    %vm4624 = vmand %vm4612, %vm4620
    %vm4625 = vmand %vm4613, %vm4621
    %vm4626 = vmor %vm4566, %vm4622
    %vm4627 = vmor %vm4567, %vm4623
    %vm4628 = vmor %vm4568, %vm4624
    %vm4629 = vmor %vm4569, %vm4625
    %v4630 = vsel %vm4626, 1, 0
    %v4631 = vsel %vm4627, 1, 0
    %v4632 = vsel %vm4628, 1, 0
    %v4633 = vsel %vm4629, 1, 0
    %v4634 = vcvt.s32.f32 %v4630
    %v4635 = vcvt.s32.f32 %v4631
    %v4636 = vcvt.s32.f32 %v4632
    %v4637 = vcvt.s32.f32 %v4633
    %vm4638 = vcmask 236544
    %v4640 = vsel %vm4638, %v4634, 0
    %v4643 = vsel %vm4638, %v4635, 0
    %v4646 = vsel %vm4638, %v4636, 0
    %v4649 = vsel %vm4638, %v4637, 0
    %v4652 = vsel %vm547, %v4510, 0
    %4654 = vmatprep.subr.mxu0 0.0
    %4655 = vmatpush1.msra.mxu0 %v4507
    %4656 = vmatprep.subr.mxu0 0.0
    %4657 = vmatpush1.msra.mxu0 %v4508
    %4658 = vmatprep.subr.mxu0 0.0
    %4659 = vmatpush1.msra.mxu0 %v4509
    %4660 = vmatprep.subr.mxu0 0.0
    %4661 = vmatpush1.msra.mxu0 %v4652
    %4662 = vmatprep.subr.mxu0 0.0
    %4663 = vmatpush1.msra.mxu0 0.0
    %4664 = vmatprep.subr.mxu0 0.0
    %4665 = vmatpush1.msra.mxu0 0.0
    %4666 = vmatprep.subr.mxu0 0.0
    %4667 = vmatpush1.msra.mxu0 0.0
    %4668 = vmatprep.subr.mxu0 0.0
    %4669 = vmatpush1.msra.mxu0 0.0
    %4670 = vmatprep.subr.mxu0 0.0
    %4671 = vmatpush1.msra.mxu0 0.0
    %4672 = vmatprep.subr.mxu0 0.0
    %4673 = vmatpush1.msra.mxu0 0.0
    %4674 = vmatprep.subr.mxu0 0.0
    %4675 = vmatpush1.msra.mxu0 0.0
    %4676 = vmatprep.subr.mxu0 0.0
    %4677 = vmatpush1.msra.mxu0 0.0
    %4678 = vmatprep.subr.mxu0 0.0
    %4679 = vmatpush1.msra.mxu0 0.0
    %4680 = vmatprep.subr.mxu0 0.0
    %4681 = vmatpush1.msra.mxu0 0.0
    %4682 = vmatprep.subr.mxu0 0.0
    %4683 = vmatpush1.msra.mxu0 0.0
    %4684 = vmatprep.subr.mxu0 0.0
    %4685 = vmatpush1.msra.mxu0 0.0
    %4686 = vmatprep.subr.mxu0 0.0
    %4687 = vmatpush1.msra.mxu0 0.0
    %4688 = vmatprep.subr.mxu0 0.0
    %4689 = vmatpush1.msra.mxu0 0.0
    %4690 = vmatprep.subr.mxu0 0.0
    %4691 = vmatpush1.msra.mxu0 0.0
    %4692 = vmatprep.subr.mxu0 0.0
    %4693 = vmatpush1.msra.mxu0 0.0
    %4694 = vmatprep.subr.mxu0 0.0
    %4695 = vmatpush1.msra.mxu0 0.0
    %4696 = vmatprep.subr.mxu0 0.0
    %4697 = vmatpush1.msra.mxu0 0.0
    %4698 = vmatprep.subr.mxu0 0.0
    %4699 = vmatpush1.msra.mxu0 0.0
    %4700 = vmatprep.subr.mxu0 0.0
    %4701 = vmatpush1.msra.mxu0 0.0
    %4702 = vmatprep.subr.mxu0 0.0
    %4703 = vmatpush1.msra.mxu0 0.0
    %4704 = vmatprep.subr.mxu0 0.0
    %4705 = vmatpush1.msra.mxu0 0.0
    %4706 = vmatprep.subr.mxu0 0.0
    %4707 = vmatpush1.msra.mxu0 0.0
    %4708 = vmatprep.subr.mxu0 0.0
    %4709 = vmatpush1.msra.mxu0 0.0
    %4710 = vmatprep.subr.mxu0 0.0
    %4711 = vmatpush1.msra.mxu0 0.0
    %4712 = vmatprep.subr.mxu0 0.0
    %4713 = vmatpush1.msra.mxu0 0.0
    %4714 = vmatprep.subr.mxu0 0.0
    %4715 = vmatpush1.msra.mxu0 0.0
    %4716 = vmatprep.subr.mxu0 0.0
    %4717 = vmatpush1.msra.mxu0 0.0
    %4718 = vmatprep.mubr.f32.mxu0 0.0
    %4719 = vmatmul.mubr.f32.gmra.mrb[0].mxu0 %v4640
    %v4720 = vpop.f32.mrb[0].mxu0
    %v4721 = vadd.f32 0.0, %v4720
    %v4722 = vpop.f32.mrb[0].mxu0
    %4723 = vmatprep.mubr.f32.mxu0 0.0
    %4724 = vmatmul.mubr.f32.gmra.mrb[0].mxu0 %v4643
    %v4725 = vpop.f32.mrb[0].mxu0
    %v4726 = vadd.f32 0.0, %v4725
    %v4727 = vpop.f32.mrb[0].mxu0
    %4728 = vmatprep.mubr.f32.mxu0 0.0
    %4729 = vmatmul.mubr.f32.gmra.mrb[0].mxu0 %v4646
    %v4730 = vpop.f32.mrb[0].mxu0
    %v4731 = vadd.f32 0.0, %v4730
    %v4732 = vpop.f32.mrb[0].mxu0
    %4733 = vmatprep.mubr.f32.mxu0 0.0
    %4734 = vmatmul.mubr.f32.gmra.mrb[0].mxu0 %v4649
    %v4735 = vpop.f32.mrb[0].mxu0
    %v4736 = vadd.f32 0.0, %v4735
    %v4737 = vpop.f32.mrb[0].mxu0
    %4738 = vdwg.mxu0
    %v4739 = vmax.f32 %v4721, %v4731
    %v4740 = vmax.f32 %v4726, %v4736
    %4741 = vst [vmem:[%s10] sm:$0xff] %v4739
    %4742 = vst [vmem:[%s10 + $0x8] sm:$0xff] %v4740
    %v4743 = vld [vmem:[%s7] sm:$0xff]
    %v4744 = vld [vmem:[%s7 + $0x8] sm:$0xff]
    %s4745 = scalar_lea.vmem %s7, 16
    %v4746 = vld [vmem:[%s4745] sm:$0xff]
    %v4747 = vld [vmem:[%s4745 + $0x8] sm:$0xff]
    %v4750 = vrot.slane %v4739, 1
    %vm4751 = vcmask 1041409
    %v4752 = vsel %vm4751, %v4740, %v4750
    %vm4753 = vcmask 130048
    %v4754 = vsel %vm4753, %v4752, 0
    %4756 = vmatprep.subr.mxu0 0.0
    %4757 = vmatpush1.msra.mxu0 %v4746
    %4758 = vmatprep.subr.mxu0 0.0
    %4759 = vmatpush1.msra.mxu0 %v4747
    %4760 = vmatprep.subr.mxu0 0.0
    %4761 = vmatpush1.msra.mxu0 0.0
    %4762 = vmatprep.subr.mxu0 0.0
    %4763 = vmatpush1.msra.mxu0 0.0
    %4764 = vmatprep.subr.mxu0 0.0
    %4765 = vmatpush1.msra.mxu0 0.0
    %4766 = vmatprep.subr.mxu0 0.0
    %4767 = vmatpush1.msra.mxu0 0.0
    %4768 = vmatprep.subr.mxu0 0.0
    %4769 = vmatpush1.msra.mxu0 0.0
    %4770 = vmatprep.subr.mxu0 0.0
    %4771 = vmatpush1.msra.mxu0 0.0
    %4772 = vmatprep.subr.mxu0 0.0
    %4773 = vmatpush1.msra.mxu0 0.0
    %4774 = vmatprep.subr.mxu0 0.0
    %4775 = vmatpush1.msra.mxu0 0.0
    %4776 = vmatprep.subr.mxu0 0.0
    %4777 = vmatpush1.msra.mxu0 0.0
    %4778 = vmatprep.subr.mxu0 0.0
    %4779 = vmatpush1.msra.mxu0 0.0
    %4780 = vmatprep.subr.mxu0 0.0
    %4781 = vmatpush1.msra.mxu0 0.0
    %4782 = vmatprep.subr.mxu0 0.0
    %4783 = vmatpush1.msra.mxu0 0.0
    %4784 = vmatprep.subr.mxu0 0.0
    %4785 = vmatpush1.msra.mxu0 0.0
    %4786 = vmatprep.subr.mxu0 0.0
    %4787 = vmatpush1.msra.mxu0 0.0
    %4788 = vmatprep.subr.mxu0 0.0
    %4789 = vmatpush1.msra.mxu0 0.0
    %4790 = vmatprep.subr.mxu0 0.0
    %4791 = vmatpush1.msra.mxu0 0.0
    %4792 = vmatprep.subr.mxu0 0.0
    %4793 = vmatpush1.msra.mxu0 0.0
    %4794 = vmatprep.subr.mxu0 0.0
    %4795 = vmatpush1.msra.mxu0 0.0
    %4796 = vmatprep.subr.mxu0 0.0
    %4797 = vmatpush1.msra.mxu0 0.0
    %4798 = vmatprep.subr.mxu0 0.0
    %4799 = vmatpush1.msra.mxu0 0.0
    %4800 = vmatprep.subr.mxu0 0.0
    %4801 = vmatpush1.msra.mxu0 0.0
    %4802 = vmatprep.subr.mxu0 0.0
    %4803 = vmatpush1.msra.mxu0 0.0
    %4804 = vmatprep.subr.mxu0 0.0
    %4805 = vmatpush1.msra.mxu0 0.0
    %4806 = vmatprep.subr.mxu0 0.0
    %4807 = vmatpush1.msra.mxu0 0.0
    %4808 = vmatprep.subr.mxu0 0.0
    %4809 = vmatpush1.msra.mxu0 0.0
    %4810 = vmatprep.subr.mxu0 0.0
    %4811 = vmatpush1.msra.mxu0 0.0
    %4812 = vmatprep.subr.mxu0 0.0
    %4813 = vmatpush1.msra.mxu0 0.0
    %4814 = vmatprep.subr.mxu0 0.0
    %4815 = vmatpush1.msra.mxu0 0.0
    %4816 = vmatprep.subr.mxu0 0.0
    %4817 = vmatpush1.msra.mxu0 0.0
    %4818 = vmatprep.subr.mxu0 0.0
    %4819 = vmatpush1.msra.mxu0 0.0
    %4820 = vmatprep.mubr.f32.mxu0 0.0
    %4821 = vmatmul.mubr.f32.gmra.mrb[0].mxu0 %v4754
    %v4822 = vpop.f32.mrb[0].mxu0
    %v4823 = vadd.f32 0.0, %v4822
    %v4824 = vpop.f32.mrb[0].mxu0
    %4825 = vdwg.mxu0
    %v4826 = vrot.slane %v4740, 7
    %v4827 = vsel %vm4751, %v4826, %v4739
    %v4828 = vsel %vm4753, %v4827, 0
    %4830 = vmatprep.subr.mxu0 0.0
    %4831 = vmatpush1.msra.mxu0 %v4743
    %4832 = vmatprep.subr.mxu0 0.0
    %4833 = vmatpush1.msra.mxu0 %v4744
    %4834 = vmatprep.subr.mxu0 0.0
    %4835 = vmatpush1.msra.mxu0 0.0
    %4836 = vmatprep.subr.mxu0 0.0
    %4837 = vmatpush1.msra.mxu0 0.0
    %4838 = vmatprep.subr.mxu0 0.0
    %4839 = vmatpush1.msra.mxu0 0.0
    %4840 = vmatprep.subr.mxu0 0.0
    %4841 = vmatpush1.msra.mxu0 0.0
    %4842 = vmatprep.subr.mxu0 0.0
    %4843 = vmatpush1.msra.mxu0 0.0
    %4844 = vmatprep.subr.mxu0 0.0
    %4845 = vmatpush1.msra.mxu0 0.0
    %4846 = vmatprep.subr.mxu0 0.0
    %4847 = vmatpush1.msra.mxu0 0.0
    %4848 = vmatprep.subr.mxu0 0.0
    %4849 = vmatpush1.msra.mxu0 0.0
    %4850 = vmatprep.subr.mxu0 0.0
    %4851 = vmatpush1.msra.mxu0 0.0
    %4852 = vmatprep.subr.mxu0 0.0
    %4853 = vmatpush1.msra.mxu0 0.0
    %4854 = vmatprep.subr.mxu0 0.0
    %4855 = vmatpush1.msra.mxu0 0.0
    %4856 = vmatprep.subr.mxu0 0.0
    %4857 = vmatpush1.msra.mxu0 0.0
    %4858 = vmatprep.subr.mxu0 0.0
    %4859 = vmatpush1.msra.mxu0 0.0
    %4860 = vmatprep.subr.mxu0 0.0
    %4861 = vmatpush1.msra.mxu0 0.0
    %4862 = vmatprep.subr.mxu0 0.0
    %4863 = vmatpush1.msra.mxu0 0.0
    %4864 = vmatprep.subr.mxu0 0.0
    %4865 = vmatpush1.msra.mxu0 0.0
    %4866 = vmatprep.subr.mxu0 0.0
    %4867 = vmatpush1.msra.mxu0 0.0
    %4868 = vmatprep.subr.mxu0 0.0
    %4869 = vmatpush1.msra.mxu0 0.0
    %4870 = vmatprep.subr.mxu0 0.0
    %4871 = vmatpush1.msra.mxu0 0.0
    %4872 = vmatprep.subr.mxu0 0.0
    %4873 = vmatpush1.msra.mxu0 0.0
    %4874 = vmatprep.subr.mxu0 0.0
    %4875 = vmatpush1.msra.mxu0 0.0
    %4876 = vmatprep.subr.mxu0 0.0
    %4877 = vmatpush1.msra.mxu0 0.0
    %4878 = vmatprep.subr.mxu0 0.0
    %4879 = vmatpush1.msra.mxu0 0.0
    %4880 = vmatprep.subr.mxu0 0.0
    %4881 = vmatpush1.msra.mxu0 0.0
    %4882 = vmatprep.subr.mxu0 0.0
    %4883 = vmatpush1.msra.mxu0 0.0
    %4884 = vmatprep.subr.mxu0 0.0
    %4885 = vmatpush1.msra.mxu0 0.0
    %4886 = vmatprep.subr.mxu0 0.0
    %4887 = vmatpush1.msra.mxu0 0.0
    %4888 = vmatprep.subr.mxu0 0.0
    %4889 = vmatpush1.msra.mxu0 0.0
    %4890 = vmatprep.subr.mxu0 0.0
    %4891 = vmatpush1.msra.mxu0 0.0
    %4892 = vmatprep.subr.mxu0 0.0
    %4893 = vmatpush1.msra.mxu0 0.0
    %4894 = vmatprep.mubr.f32.mxu0 0.0
    %4895 = vmatmul.mubr.f32.gmra.mrb[0].mxu0 %v4828
    %v4896 = vpop.f32.mrb[0].mxu0
    %v4897 = vadd.f32 %v4823, %v4896
    %v4898 = vpop.f32.mrb[0].mxu0
    %4899 = vdwg.mxu0
    %s4900 = scalar_lea.vmem %s7, 32
    %v4901 = vld [vmem:[%s4900] sm:$0xff]
    %v4902 = vld [vmem:[%s4900 + $0x8] sm:$0xff]
    %v4903 = vrot.slane %v4739, 2
    %v4904 = vrot.slane %v4740, 1
    %v4905 = vsel %vm4751, %v4904, %v4903
    %v4906 = vsel %vm4753, %v4905, 0
    %4908 = vmatprep.subr.mxu0 0.0
    %4909 = vmatpush1.msra.mxu0 %v4901
    %4910 = vmatprep.subr.mxu0 0.0
    %4911 = vmatpush1.msra.mxu0 %v4902
    %4912 = vmatprep.subr.mxu0 0.0
    %4913 = vmatpush1.msra.mxu0 0.0
    %4914 = vmatprep.subr.mxu0 0.0
    %4915 = vmatpush1.msra.mxu0 0.0
    %4916 = vmatprep.subr.mxu0 0.0
    %4917 = vmatpush1.msra.mxu0 0.0
    %4918 = vmatprep.subr.mxu0 0.0
    %4919 = vmatpush1.msra.mxu0 0.0
    %4920 = vmatprep.subr.mxu0 0.0
    %4921 = vmatpush1.msra.mxu0 0.0
    %4922 = vmatprep.subr.mxu0 0.0
    %4923 = vmatpush1.msra.mxu0 0.0
    %4924 = vmatprep.subr.mxu0 0.0
    %4925 = vmatpush1.msra.mxu0 0.0
    %4926 = vmatprep.subr.mxu0 0.0
    %4927 = vmatpush1.msra.mxu0 0.0
    %4928 = vmatprep.subr.mxu0 0.0
    %4929 = vmatpush1.msra.mxu0 0.0
    %4930 = vmatprep.subr.mxu0 0.0
    %4931 = vmatpush1.msra.mxu0 0.0
    %4932 = vmatprep.subr.mxu0 0.0
    %4933 = vmatpush1.msra.mxu0 0.0
    %4934 = vmatprep.subr.mxu0 0.0
    %4935 = vmatpush1.msra.mxu0 0.0
    %4936 = vmatprep.subr.mxu0 0.0
    %4937 = vmatpush1.msra.mxu0 0.0
    %4938 = vmatprep.subr.mxu0 0.0
    %4939 = vmatpush1.msra.mxu0 0.0
    %4940 = vmatprep.subr.mxu0 0.0
    %4941 = vmatpush1.msra.mxu0 0.0
    %4942 = vmatprep.subr.mxu0 0.0
    %4943 = vmatpush1.msra.mxu0 0.0
    %4944 = vmatprep.subr.mxu0 0.0
    %4945 = vmatpush1.msra.mxu0 0.0
    %4946 = vmatprep.subr.mxu0 0.0
    %4947 = vmatpush1.msra.mxu0 0.0
    %4948 = vmatprep.subr.mxu0 0.0
    %4949 = vmatpush1.msra.mxu0 0.0
    %4950 = vmatprep.subr.mxu0 0.0
    %4951 = vmatpush1.msra.mxu0 0.0
    %4952 = vmatprep.subr.mxu0 0.0
    %4953 = vmatpush1.msra.mxu0 0.0
    %4954 = vmatprep.subr.mxu0 0.0
    %4955 = vmatpush1.msra.mxu0 0.0
    %4956 = vmatprep.subr.mxu0 0.0
    %4957 = vmatpush1.msra.mxu0 0.0
    %4958 = vmatprep.subr.mxu0 0.0
    %4959 = vmatpush1.msra.mxu0 0.0
    %4960 = vmatprep.subr.mxu0 0.0
    %4961 = vmatpush1.msra.mxu0 0.0
    %4962 = vmatprep.subr.mxu0 0.0
    %4963 = vmatpush1.msra.mxu0 0.0
    %4964 = vmatprep.subr.mxu0 0.0
    %4965 = vmatpush1.msra.mxu0 0.0
    %4966 = vmatprep.subr.mxu0 0.0
    %4967 = vmatpush1.msra.mxu0 0.0
    %4968 = vmatprep.subr.mxu0 0.0
    %4969 = vmatpush1.msra.mxu0 0.0
    %4970 = vmatprep.subr.mxu0 0.0
    %4971 = vmatpush1.msra.mxu0 0.0
    %4972 = vmatprep.mubr.f32.mxu0 0.0
    %4973 = vmatmul.mubr.f32.gmra.mrb[0].mxu0 %v4906
    %v4974 = vpop.f32.mrb[0].mxu0
    %v4975 = vadd.f32 0.0, %v4974
    %v4976 = vpop.f32.mrb[0].mxu0
    %4977 = vdwg.mxu0
    %v4978 = vadd.f32 %v4897, %v4975
    %s4979 = scalar_lea.vmem %s7, 48
    %v4980 = vld [vmem:[%s4979] sm:$0xff]
    %v4981 = vld [vmem:[%s4979 + $0x8] sm:$0xff]
    %v4982 = vrot.slane %v4739, 3
    %v4983 = vrot.slane %v4740, 2
    %v4984 = vsel %vm4751, %v4983, %v4982
    %v4985 = vsel %vm4753, %v4984, 0
    %4987 = vmatprep.subr.mxu0 0.0
    %4988 = vmatpush1.msra.mxu0 %v4980
    %4989 = vmatprep.subr.mxu0 0.0
    %4990 = vmatpush1.msra.mxu0 %v4981
    %4991 = vmatprep.subr.mxu0 0.0
    %4992 = vmatpush1.msra.mxu0 0.0
    %4993 = vmatprep.subr.mxu0 0.0
    %4994 = vmatpush1.msra.mxu0 0.0
    %4995 = vmatprep.subr.mxu0 0.0
    %4996 = vmatpush1.msra.mxu0 0.0
    %4997 = vmatprep.subr.mxu0 0.0
    %4998 = vmatpush1.msra.mxu0 0.0
    %4999 = vmatprep.subr.mxu0 0.0
    %5000 = vmatpush1.msra.mxu0 0.0
    %5001 = vmatprep.subr.mxu0 0.0
    %5002 = vmatpush1.msra.mxu0 0.0
    %5003 = vmatprep.subr.mxu0 0.0
    %5004 = vmatpush1.msra.mxu0 0.0
    %5005 = vmatprep.subr.mxu0 0.0
    %5006 = vmatpush1.msra.mxu0 0.0
    %5007 = vmatprep.subr.mxu0 0.0
    %5008 = vmatpush1.msra.mxu0 0.0
    %5009 = vmatprep.subr.mxu0 0.0
    %5010 = vmatpush1.msra.mxu0 0.0
    %5011 = vmatprep.subr.mxu0 0.0
    %5012 = vmatpush1.msra.mxu0 0.0
    %5013 = vmatprep.subr.mxu0 0.0
    %5014 = vmatpush1.msra.mxu0 0.0
    %5015 = vmatprep.subr.mxu0 0.0
    %5016 = vmatpush1.msra.mxu0 0.0
    %5017 = vmatprep.subr.mxu0 0.0
    %5018 = vmatpush1.msra.mxu0 0.0
    %5019 = vmatprep.subr.mxu0 0.0
    %5020 = vmatpush1.msra.mxu0 0.0
    %5021 = vmatprep.subr.mxu0 0.0
    %5022 = vmatpush1.msra.mxu0 0.0
    %5023 = vmatprep.subr.mxu0 0.0
    %5024 = vmatpush1.msra.mxu0 0.0
    %5025 = vmatprep.subr.mxu0 0.0
    %5026 = vmatpush1.msra.mxu0 0.0
    %5027 = vmatprep.subr.mxu0 0.0
    %5028 = vmatpush1.msra.mxu0 0.0
    %5029 = vmatprep.subr.mxu0 0.0
    %5030 = vmatpush1.msra.mxu0 0.0
    %5031 = vmatprep.subr.mxu0 0.0
    %5032 = vmatpush1.msra.mxu0 0.0
    %5033 = vmatprep.subr.mxu0 0.0
    %5034 = vmatpush1.msra.mxu0 0.0
    %5035 = vmatprep.subr.mxu0 0.0
    %5036 = vmatpush1.msra.mxu0 0.0
    %5037 = vmatprep.subr.mxu0 0.0
    %5038 = vmatpush1.msra.mxu0 0.0
    %5039 = vmatprep.subr.mxu0 0.0
    %5040 = vmatpush1.msra.mxu0 0.0
    %5041 = vmatprep.subr.mxu0 0.0
    %5042 = vmatpush1.msra.mxu0 0.0
    %5043 = vmatprep.subr.mxu0 0.0
    %5044 = vmatpush1.msra.mxu0 0.0
    %5045 = vmatprep.subr.mxu0 0.0
    %5046 = vmatpush1.msra.mxu0 0.0
    %5047 = vmatprep.subr.mxu0 0.0
    %5048 = vmatpush1.msra.mxu0 0.0
    %5049 = vmatprep.subr.mxu0 0.0
    %5050 = vmatpush1.msra.mxu0 0.0
    %5051 = vmatprep.mubr.f32.mxu0 0.0
    %5052 = vmatmul.mubr.f32.gmra.mrb[0].mxu0 %v4985
    %v5053 = vpop.f32.mrb[0].mxu0
    %v5054 = vadd.f32 0.0, %v5053
    %v5055 = vpop.f32.mrb[0].mxu0
    %5056 = vdwg.mxu0
    %v5057 = vadd.f32 %v4978, %v5054
    %s5058 = scalar_lea.vmem %s7, 64
    %v5059 = vld [vmem:[%s5058] sm:$0xff]
    %v5060 = vld [vmem:[%s5058 + $0x8] sm:$0xff]
    %v5061 = vrot.slane %v4739, 4
    %v5062 = vrot.slane %v4740, 3
    %v5063 = vsel %vm4751, %v5062, %v5061
    %v5064 = vsel %vm4753, %v5063, 0
    %5066 = vmatprep.subr.mxu0 0.0
    %5067 = vmatpush1.msra.mxu0 %v5059
    %5068 = vmatprep.subr.mxu0 0.0
    %5069 = vmatpush1.msra.mxu0 %v5060
    %5070 = vmatprep.subr.mxu0 0.0
    %5071 = vmatpush1.msra.mxu0 0.0
    %5072 = vmatprep.subr.mxu0 0.0
    %5073 = vmatpush1.msra.mxu0 0.0
    %5074 = vmatprep.subr.mxu0 0.0
    %5075 = vmatpush1.msra.mxu0 0.0
    %5076 = vmatprep.subr.mxu0 0.0
    %5077 = vmatpush1.msra.mxu0 0.0
    %5078 = vmatprep.subr.mxu0 0.0
    %5079 = vmatpush1.msra.mxu0 0.0
    %5080 = vmatprep.subr.mxu0 0.0
    %5081 = vmatpush1.msra.mxu0 0.0
    %5082 = vmatprep.subr.mxu0 0.0
    %5083 = vmatpush1.msra.mxu0 0.0
    %5084 = vmatprep.subr.mxu0 0.0
    %5085 = vmatpush1.msra.mxu0 0.0
    %5086 = vmatprep.subr.mxu0 0.0
    %5087 = vmatpush1.msra.mxu0 0.0
    %5088 = vmatprep.subr.mxu0 0.0
    %5089 = vmatpush1.msra.mxu0 0.0
    %5090 = vmatprep.subr.mxu0 0.0
    %5091 = vmatpush1.msra.mxu0 0.0
    %5092 = vmatprep.subr.mxu0 0.0
    %5093 = vmatpush1.msra.mxu0 0.0
    %5094 = vmatprep.subr.mxu0 0.0
    %5095 = vmatpush1.msra.mxu0 0.0
    %5096 = vmatprep.subr.mxu0 0.0
    %5097 = vmatpush1.msra.mxu0 0.0
    %5098 = vmatprep.subr.mxu0 0.0
    %5099 = vmatpush1.msra.mxu0 0.0
    %5100 = vmatprep.subr.mxu0 0.0
    %5101 = vmatpush1.msra.mxu0 0.0
    %5102 = vmatprep.subr.mxu0 0.0
    %5103 = vmatpush1.msra.mxu0 0.0
    %5104 = vmatprep.subr.mxu0 0.0
    %5105 = vmatpush1.msra.mxu0 0.0
    %5106 = vmatprep.subr.mxu0 0.0
    %5107 = vmatpush1.msra.mxu0 0.0
    %5108 = vmatprep.subr.mxu0 0.0
    %5109 = vmatpush1.msra.mxu0 0.0
    %5110 = vmatprep.subr.mxu0 0.0
    %5111 = vmatpush1.msra.mxu0 0.0
    %5112 = vmatprep.subr.mxu0 0.0
    %5113 = vmatpush1.msra.mxu0 0.0
    %5114 = vmatprep.subr.mxu0 0.0
    %5115 = vmatpush1.msra.mxu0 0.0
    %5116 = vmatprep.subr.mxu0 0.0
    %5117 = vmatpush1.msra.mxu0 0.0
    %5118 = vmatprep.subr.mxu0 0.0
    %5119 = vmatpush1.msra.mxu0 0.0
    %5120 = vmatprep.subr.mxu0 0.0
    %5121 = vmatpush1.msra.mxu0 0.0
    %5122 = vmatprep.subr.mxu0 0.0
    %5123 = vmatpush1.msra.mxu0 0.0
    %5124 = vmatprep.subr.mxu0 0.0
    %5125 = vmatpush1.msra.mxu0 0.0
    %5126 = vmatprep.subr.mxu0 0.0
    %5127 = vmatpush1.msra.mxu0 0.0
    %5128 = vmatprep.subr.mxu0 0.0
    %5129 = vmatpush1.msra.mxu0 0.0
    %5130 = vmatprep.mubr.f32.mxu0 0.0
    %5131 = vmatmul.mubr.f32.gmra.mrb[0].mxu0 %v5064
    %v5132 = vpop.f32.mrb[0].mxu0
    %v5133 = vadd.f32 0.0, %v5132
    %v5134 = vpop.f32.mrb[0].mxu0
    %5135 = vdwg.mxu0
    %v5136 = vadd.f32 %v5057, %v5133
    %s5137 = scalar_lea.vmem %s7, 80
    %v5138 = vld [vmem:[%s5137] sm:$0xff]
    %v5139 = vld [vmem:[%s5137 + $0x8] sm:$0xff]
    %v5140 = vrot.slane %v4739, 5
    %v5141 = vrot.slane %v4740, 4
    %v5142 = vsel %vm4751, %v5141, %v5140
    %v5143 = vsel %vm4753, %v5142, 0
    %5145 = vmatprep.subr.mxu0 0.0
    %5146 = vmatpush1.msra.mxu0 %v5138
    %5147 = vmatprep.subr.mxu0 0.0
    %5148 = vmatpush1.msra.mxu0 %v5139
    %5149 = vmatprep.subr.mxu0 0.0
    %5150 = vmatpush1.msra.mxu0 0.0
    %5151 = vmatprep.subr.mxu0 0.0
    %5152 = vmatpush1.msra.mxu0 0.0
    %5153 = vmatprep.subr.mxu0 0.0
    %5154 = vmatpush1.msra.mxu0 0.0
    %5155 = vmatprep.subr.mxu0 0.0
    %5156 = vmatpush1.msra.mxu0 0.0
    %5157 = vmatprep.subr.mxu0 0.0
    %5158 = vmatpush1.msra.mxu0 0.0
    %5159 = vmatprep.subr.mxu0 0.0
    %5160 = vmatpush1.msra.mxu0 0.0
    %5161 = vmatprep.subr.mxu0 0.0
    %5162 = vmatpush1.msra.mxu0 0.0
    %5163 = vmatprep.subr.mxu0 0.0
    %5164 = vmatpush1.msra.mxu0 0.0
    %5165 = vmatprep.subr.mxu0 0.0
    %5166 = vmatpush1.msra.mxu0 0.0
    %5167 = vmatprep.subr.mxu0 0.0
    %5168 = vmatpush1.msra.mxu0 0.0
    %5169 = vmatprep.subr.mxu0 0.0
    %5170 = vmatpush1.msra.mxu0 0.0
    %5171 = vmatprep.subr.mxu0 0.0
    %5172 = vmatpush1.msra.mxu0 0.0
    %5173 = vmatprep.subr.mxu0 0.0
    %5174 = vmatpush1.msra.mxu0 0.0
    %5175 = vmatprep.subr.mxu0 0.0
    %5176 = vmatpush1.msra.mxu0 0.0
    %5177 = vmatprep.subr.mxu0 0.0
    %5178 = vmatpush1.msra.mxu0 0.0
    %5179 = vmatprep.subr.mxu0 0.0
    %5180 = vmatpush1.msra.mxu0 0.0
    %5181 = vmatprep.subr.mxu0 0.0
    %5182 = vmatpush1.msra.mxu0 0.0
    %5183 = vmatprep.subr.mxu0 0.0
    %5184 = vmatpush1.msra.mxu0 0.0
    %5185 = vmatprep.subr.mxu0 0.0
    %5186 = vmatpush1.msra.mxu0 0.0
    %5187 = vmatprep.subr.mxu0 0.0
    %5188 = vmatpush1.msra.mxu0 0.0
    %5189 = vmatprep.subr.mxu0 0.0
    %5190 = vmatpush1.msra.mxu0 0.0
    %5191 = vmatprep.subr.mxu0 0.0
    %5192 = vmatpush1.msra.mxu0 0.0
    %5193 = vmatprep.subr.mxu0 0.0
    %5194 = vmatpush1.msra.mxu0 0.0
    %5195 = vmatprep.subr.mxu0 0.0
    %5196 = vmatpush1.msra.mxu0 0.0
    %5197 = vmatprep.subr.mxu0 0.0
    %5198 = vmatpush1.msra.mxu0 0.0
    %5199 = vmatprep.subr.mxu0 0.0
    %5200 = vmatpush1.msra.mxu0 0.0
    %5201 = vmatprep.subr.mxu0 0.0
    %5202 = vmatpush1.msra.mxu0 0.0
    %5203 = vmatprep.subr.mxu0 0.0
    %5204 = vmatpush1.msra.mxu0 0.0
    %5205 = vmatprep.subr.mxu0 0.0
    %5206 = vmatpush1.msra.mxu0 0.0
    %5207 = vmatprep.subr.mxu0 0.0
    %5208 = vmatpush1.msra.mxu0 0.0
    %5209 = vmatprep.mubr.f32.mxu0 0.0
    %5210 = vmatmul.mubr.f32.gmra.mrb[0].mxu0 %v5143
    %v5211 = vpop.f32.mrb[0].mxu0
    %v5212 = vadd.f32 0.0, %v5211
    %v5213 = vpop.f32.mrb[0].mxu0
    %5214 = vdwg.mxu0
    %v5215 = vadd.f32 %v5136, %v5212
    %v5216 = vld [vmem:[%s8] sm:$0x1]
    %v5218 = vlaneseq
    %v5219 = vshrl.u32 %v5218, 7
    %v5220 = vsub.s32 0, %v5219
    %v5221 = vrot.slane %v5216, %v5220
    %v5223 = vadd.f32 %v5215, %v5221
    %5224 = vst [vmem:[#allocation7] sm:$0x3] %v5223
    // Predicated region
    $region46: #{base_model_forward.1} parent=1 // pred_check
      _
    $region47: #{base_model_forward.1} parent=1 // pred_check_branch
      %5226 = sbr.rel (0) target = $region49
    $region48: #{base_model_forward.1} parent=1 // pred_region
      %s5228 = ssub.s32 32, 32
      %5229 = vsyncadd [#allocation4], %s5228
      %s5231 = sshll.u32 [#allocation7], 4
      %s5232 = int_to_ptr.vmem [resolvable:$true] %s5231
      %5234 = dma.vmem_to_hbm [thread:$0]  %s5232, 32, %s9, [#allocation4]
    $region49: #{base_model_forward.1} parent=1 // pred_fallthru
      _
    // Predicated region
    $region50: #{base_model_forward.1} parent=1 // pred_check
      _
    $region51: #{base_model_forward.1} parent=1 // pred_check_branch
      %5236 = sbr.rel (0) target = $region53
    $region52: #{base_model_forward.1} parent=1 // pred_region
      _
    $region53: #{base_model_forward.1} parent=1 // pred_fallthru
      _
    // Predicated region
    $region54: #{base_model_forward.1} parent=1 // pred_check
      _
    $region55: #{base_model_forward.1} parent=1 // pred_check_branch
      %5238 = sbr.rel (0) target = $region57
    $region56: #{base_model_forward.1} parent=1 // pred_region
      %5239 = dma.done [#allocation4], 32
    $region57: #{base_model_forward.1} parent=1 // pred_fallthru
      _
    // Predicated region
    $region58: #{base_model_forward.1} parent=1 // pred_check
      _
    $region59: #{base_model_forward.1} parent=1 // pred_check_branch
      %5241 = sbr.rel (0) target = $region61
    $region60: #{base_model_forward.1} parent=1 // pred_region
      _
    $region61: #{base_model_forward.1} parent=1 // pred_fallthru
      _
    %5242 = vsyncpa [#allocation3], 1
    %5243 = vsyncpa [#allocation6], 1
    %5244 = vsyncpa [#allocation4], 1

</llo_original>
